<compile_context>
chip_gen: v7x
topology: tpu7x:2x2x1
jax: 0.10.0
libtpu: 0.0.40
codegen_flags: <defaults>
</compile_context>

<pallas_src>
import functools

import jax
import jax.numpy as jnp
import numpy as np
from jax import lax
from jax.experimental import pallas as pl
from jax.experimental.pallas import tpu as pltpu


def _sigmoid(z):
    # logistic via tanh: keeps the transcendental on the EUP slot, no VALU divide.
    return 0.5 * (jnp.tanh(0.5 * z) + 1.0)


def ts_encoder_lstm_kernel(
    x_ref,        # (T*Bt, Din)     f32  time-major flattened batch tile
    w_in_ref,     # (Din, H)        f32  input_fc weight (transposed vs torch)
    b_in_ref,     # (1, H)          f32  input_fc bias
    wih_ref,      # (L, H, 4H)      f32  packed input->gate weights [i|f|g|o]
    whh_ref,      # (L, H, 4H)      f32  packed hidden->gate weights [i|f|g|o]
    bg_ref,       # (L, 1, 4H)      f32  packed combined gate bias b_ih + b_hh
    w_fc_ref,     # (H, Dout)       f32  output fc weight (transposed vs torch)
    b_fc_ref,     # (1, Dout)       f32  output fc bias
    out_ref,      # (T*Bt, Dout)    f32
    seq_ref,      # scratch VMEM (T*Bt, H)   f32  hidden sequence (in-place per layer)
    zx_ref,       # scratch VMEM (T*Bt, 4H)  f32  hoisted input->gate pre-activations
    *, seq_len, batch_tile,
):
    T, Bt = seq_len, batch_tile
    H = w_in_ref.shape[1]
    L = wih_ref.shape[0]

    x = x_ref[...]                                                     # (T*Bt, Din)
    valid = jnp.logical_not(jnp.any(jnp.isnan(x), axis=-1, keepdims=True))  # (T*Bt, 1)
    x = jnp.where(valid, x, 0.0)

    # ---- input_fc as one flattened matmul, masked (mask == all_true & nan_mask) ----
    h0 = jnp.dot(x, w_in_ref[...], preferred_element_type=jnp.float32) + b_in_ref[...]
    seq_ref[...] = jnp.where(valid, h0, 0.0)

    # Per-lane pre-scale so ONE full-width tanh covers all gates:
    #   sigmoid gates [i|f|o] use tanh(0.5*z); the g gate uses tanh(z).
    # Hoisted out of both the layer and timestep loops (JAX does not CSE broadcasts).
    lane = lax.broadcasted_iota(jnp.int32, (1, 4 * H), 1)
    gate_scale = jnp.where((lane >= 2 * H) & (lane < 3 * H), 1.0, 0.5).astype(jnp.float32)

    # ---- stacked LSTM (PyTorch gate order i, f, g, o); eval: no dropout ----
    for l in range(L):                                  # static depth
        w_hh = whh_ref[l]                               # (H, 4H)  hoisted load

        # Hoist the input->hidden projection for the whole layer: one big matmul.
        zx_ref[...] = (
            jnp.dot(seq_ref[...], wih_ref[l], preferred_element_type=jnp.float32)
            + bg_ref[l]
        )

        def step(t, carry, w_hh=w_hh):
            h_prev, c_prev = carry
            r0 = pl.multiple_of(t * Bt, Bt)             # Bt is a multiple of 8 -> aligned
            z = zx_ref[pl.ds(r0, Bt), :] + jnp.dot(
                h_prev, w_hh, preferred_element_type=jnp.float32)   # (Bt, 4H)
            th = jnp.tanh(z * gate_scale)               # single full-width EUP push
            sg = 0.5 * (th + 1.0)                       # sigmoid for i/f/o lanes
            i_g = sg[:, 0:H]
            f_g = sg[:, H:2 * H]
            g_g = th[:, 2 * H:3 * H]
            o_g = sg[:, 3 * H:4 * H]
            c = f_g * c_prev + i_g * g_g
            h = o_g * jnp.tanh(c)
            seq_ref[pl.ds(r0, Bt), :] = h               # layer output replaces input in-place
            return (h, c)

        init = (jnp.zeros((Bt, H), jnp.float32), jnp.zeros((Bt, H), jnp.float32))
        lax.fori_loop(0, T, step, init, unroll=(True if T <= 16 else 8))

    # ---- output fc as one flattened matmul; NaN re-injection; single slab store ----
    y = jnp.dot(seq_ref[...], w_fc_ref[...], preferred_element_type=jnp.float32) + b_fc_ref[...]
    out_ref[...] = jnp.where(valid, y, jnp.nan)


def ts_encoder_lstm(x, params, *, batch_tile=None):
    """x: (B, T, Din) f32 (may contain NaN). Returns (B, T, Dout) f32."""
    w_in, b_in, wih, whh, bg, w_fc, b_fc = params
    B, T, Din = x.shape
    H = w_in.shape[1]
    Dout = w_fc.shape[1]

    if batch_tile is None:
        batch_tile = min(64, 8 * pl.cdiv(B, 8))         # sublane-aligned batch tile
    Bt = batch_tile
    nb = pl.cdiv(B, Bt)
    Bp = nb * Bt

    # Time-major, batch padded to the tile size, pre-split into per-tile
    # (T*Bt, Din) slabs so the kernel is purely 2-D (no in-kernel transposes).
    x_tm = jnp.transpose(x, (1, 0, 2))                                  # (T, B, Din)
    x_tm = jnp.pad(x_tm, ((0, 0), (0, Bp - B), (0, 0)))                 # (T, Bp, Din)
    x_tiles = (x_tm.reshape(T, nb, Bt, Din)
                   .transpose(1, 0, 2, 3)
                   .reshape(nb, T * Bt, Din))                           # (nb, T*Bt, Din)

    kernel = functools.partial(ts_encoder_lstm_kernel, seq_len=T, batch_tile=Bt)

    def full(a):
        return pl.BlockSpec(a.shape, lambda b, n=a.ndim: (0,) * n)      # resident weights

    out_tiles = pl.pallas_call(
        kernel,
        out_shape=jax.ShapeDtypeStruct((nb, T * Bt, Dout), jnp.float32),
        grid=(nb,),
        in_specs=[
            pl.BlockSpec((pl.Squeezed(), T * Bt, Din), lambda b: (b, 0, 0)),
            full(w_in), full(b_in), full(wih), full(whh), full(bg), full(w_fc), full(b_fc),
        ],
        out_specs=pl.BlockSpec((pl.Squeezed(), T * Bt, Dout), lambda b: (b, 0, 0)),
        scratch_shapes=[
            pltpu.VMEM((T * Bt, H), jnp.float32),        # hidden sequence
            pltpu.VMEM((T * Bt, 4 * H), jnp.float32),    # hoisted gate pre-activations
        ],
        compiler_params=pltpu.CompilerParams(
            dimension_semantics=("parallel",),           # batch tiles are independent
            # Leaves headroom under v7x's 64 MiB physical VMEM while still allowing
            # large resident tiles on v5e/v6e (128 MiB physical).
            vmem_limit_bytes=48 * 1024 * 1024,
        ),
    )(x_tiles, w_in, b_in, wih, whh, bg, w_fc, b_fc)

    # Undo the tiling: (nb, T*Bt, Dout) -> (B, T, Dout).
    out_tm = (out_tiles.reshape(nb, T, Bt, Dout)
                       .transpose(1, 0, 2, 3)
                       .reshape(T, Bp, Dout))
    return jnp.transpose(out_tm[:, :B, :], (1, 0, 2))


def init_params(key, input_dims, hidden_dims, output_dims, depth):
    """Deterministic synthetic parameters (uniform(-1/sqrt(fan), 1/sqrt(fan))).

    LSTM gate weights are pre-packed: wih/whh are (L, H, 4H) with the last axis
    ordered [i | f | g | o]; bg is the combined bias b_ih + b_hh, shape (L, 1, 4H).
    """
    ks = jax.random.split(key, 7)
    k_in = 1.0 / np.sqrt(input_dims)
    k_h = 1.0 / np.sqrt(hidden_dims)

    w_in = jax.random.uniform(ks[0], (input_dims, hidden_dims), jnp.float32, -k_in, k_in)
    b_in = jax.random.uniform(ks[1], (1, hidden_dims), jnp.float32, -k_in, k_in)
    wih = jax.random.uniform(ks[2], (depth, hidden_dims, 4 * hidden_dims), jnp.float32, -k_h, k_h)
    whh = jax.random.uniform(ks[3], (depth, hidden_dims, 4 * hidden_dims), jnp.float32, -k_h, k_h)
    bg = jax.random.uniform(ks[4], (depth, 1, 4 * hidden_dims), jnp.float32, -2 * k_h, 2 * k_h)
    w_fc = jax.random.uniform(ks[5], (hidden_dims, output_dims), jnp.float32, -k_h, k_h)
    b_fc = jax.random.uniform(ks[6], (1, output_dims), jnp.float32, -k_h, k_h)
    return (w_in, b_in, wih, whh, bg, w_fc, b_fc)


def reference(x, params):
    """Pure-JAX reference of the eval-mode forward pass (packed-gate layout)."""
    w_in, b_in, wih, whh, bg, w_fc, b_fc = params
    B, T, _ = x.shape
    H = w_in.shape[1]
    L = wih.shape[0]

    nan_mask = ~jnp.any(jnp.isnan(x), axis=-1)                    # (B, T)
    xc = jnp.where(nan_mask[..., None], x, 0.0)
    h = xc @ w_in + b_in
    h = jnp.where(nan_mask[..., None], h, 0.0)

    seq = jnp.transpose(h, (1, 0, 2))                              # (T, B, H)
    for l in range(L):
        zx = jnp.einsum('tbh,hg->tbg', seq, wih[l]) + bg[l]        # (T, B, 4H)

        def step(carry, zx_t, l=l):
            h_prev, c_prev = carry
            z = zx_t + h_prev @ whh[l]
            i_g = _sigmoid(z[:, 0:H])
            f_g = _sigmoid(z[:, H:2 * H])
            g_g = jnp.tanh(z[:, 2 * H:3 * H])
            o_g = _sigmoid(z[:, 3 * H:4 * H])
            c = f_g * c_prev + i_g * g_g
            hh = o_g * jnp.tanh(c)
            return (hh, c), hh

        init = (jnp.zeros((B, H), jnp.float32), jnp.zeros((B, H), jnp.float32))
        _, seq = lax.scan(step, init, zx)
    out = jnp.transpose(seq, (1, 0, 2))                            # (B, T, H)
    y = out @ w_fc + b_fc
    return jnp.where(nan_mask[..., None], y, jnp.nan)


if __name__ == "__main__":
    B, T = 2, 8
    input_dims, hidden_dims, output_dims, depth = 4, 32, 16, 3

    key = jax.random.PRNGKey(0)
    k_x, k_p = jax.random.split(key)
    x = jax.random.normal(k_x, (B, T, input_dims), jnp.float32)
    # inject NaNs to exercise the nan_mask path
    x = x.at[0, 3, 1].set(jnp.nan)
    x = x.at[1, 7, :].set(jnp.nan)

    params = init_params(k_p, input_dims, hidden_dims, output_dims, depth)

    out = ts_encoder_lstm(x, params)
    out = jax.block_until_ready(out)

    ref = jax.block_until_ready(reference(x, params))
    np.testing.assert_allclose(np.asarray(out), np.asarray(ref),
                               rtol=1e-5, atol=1e-5, equal_nan=True)
    assert bool(jnp.all(jnp.isnan(out[0, 3]))) and bool(jnp.all(jnp.isnan(out[1, 7])))

    print("KERNEL_OK")
</pallas_src>

<mosaic_0001>
module attributes {stable_mosaic.version = 11 : i64} {
  func.func @ts_encoder_lstm_kernel(%arg0: i32, %arg1: memref<1x64x4xf32, #tpu.memory_space<vmem>>, %arg2: memref<4x32xf32, #tpu.memory_space<vmem>>, %arg3: memref<1x32xf32, #tpu.memory_space<vmem>>, %arg4: memref<3x32x128xf32, #tpu.memory_space<vmem>>, %arg5: memref<3x32x128xf32, #tpu.memory_space<vmem>>, %arg6: memref<3x1x128xf32, #tpu.memory_space<vmem>>, %arg7: memref<32x16xf32, #tpu.memory_space<vmem>>, %arg8: memref<1x16xf32, #tpu.memory_space<vmem>>, %arg9: memref<1x64x16xf32, #tpu.memory_space<vmem>>, %arg10: memref<64x32xf32, #tpu.memory_space<vmem>>, %arg11: memref<64x128xf32, #tpu.memory_space<vmem>>) attributes {dimension_semantics = [#tpu.dimension_semantics<parallel>], iteration_bounds = array<i64: 1>, scalar_prefetch = 0 : i64, scratch_operands = 2 : i64, tpu.core_type = #tpu.core_type<tc>, window_params = [{transform_indices = @transform_0, window_bounds = array<i64: 1, 64, 4>}, {pipeline_mode = #tpu.pipeline_mode<synchronous>, transform_indices = @transform_1, window_bounds = array<i64: 4, 32>}, {pipeline_mode = #tpu.pipeline_mode<synchronous>, transform_indices = @transform_2, window_bounds = array<i64: 1, 32>}, {pipeline_mode = #tpu.pipeline_mode<synchronous>, transform_indices = @transform_3, window_bounds = array<i64: 3, 32, 128>}, {pipeline_mode = #tpu.pipeline_mode<synchronous>, transform_indices = @transform_4, window_bounds = array<i64: 3, 32, 128>}, {pipeline_mode = #tpu.pipeline_mode<synchronous>, transform_indices = @transform_5, window_bounds = array<i64: 3, 1, 128>}, {pipeline_mode = #tpu.pipeline_mode<synchronous>, transform_indices = @transform_6, window_bounds = array<i64: 32, 16>}, {pipeline_mode = #tpu.pipeline_mode<synchronous>, transform_indices = @transform_7, window_bounds = array<i64: 1, 16>}, {transform_indices = @transform_8, window_bounds = array<i64: 1, 64, 16>}]} {
    %c0 = arith.constant 0 : index
    %c0_0 = arith.constant 0 : index
    %c0_1 = arith.constant 0 : index
    %0 = vector.load %arg1[%c0, %c0_0, %c0_1] : memref<1x64x4xf32, #tpu.memory_space<vmem>>, vector<1x64x4xf32>
    %1 = vector.shape_cast %0 : vector<1x64x4xf32> to vector<64x4xf32>
    %2 = arith.cmpf one, %1, %1 : vector<64x4xf32>
    %cst = arith.constant 1.000000e+00 : f32
    %cst_2 = arith.constant 0.000000e+00 : f32
    %3 = vector.broadcast %cst : f32 to vector<64x4xf32>
    %4 = vector.broadcast %cst_2 : f32 to vector<64x4xf32>
    %5 = arith.select %2, %3, %4 : vector<64x4xi1>, vector<64x4xf32>
    %cst_3 = arith.constant dense<0xFF800000> : vector<64xf32>
    %6 = vector.multi_reduction <maximumf>, %5, %cst_3 [1] : vector<64x4xf32> to vector<64xf32>
    %cst_4 = arith.constant 0.000000e+00 : f32
    %7 = vector.broadcast %cst_4 : f32 to vector<64xf32>
    %8 = arith.cmpf ogt, %6, %7 : vector<64xf32>
    %9 = vector.shape_cast %8 : vector<64xi1> to vector<64x1xi1>
    %cst_5 = arith.constant dense<true> : vector<64x1xi1>
    %10 = arith.xori %9, %cst_5 : vector<64x1xi1>
    %cst_6 = arith.constant 0.000000e+00 : f32
    %11 = vector.shape_cast %10 : vector<64x1xi1> to vector<64x1xi1>
    %12 = vector.broadcast %11 : vector<64x1xi1> to vector<64x4xi1>
    %13 = vector.broadcast %cst_6 : f32 to vector<64x4xf32>
    %14 = arith.select %12, %1, %13 : vector<64x4xi1>, vector<64x4xf32>
    %c0_7 = arith.constant 0 : index
    %c0_8 = arith.constant 0 : index
    %15 = vector.load %arg2[%c0_7, %c0_8] : memref<4x32xf32, #tpu.memory_space<vmem>>, vector<4x32xf32>
    %cst_9 = arith.constant dense<0.000000e+00> : vector<64x32xf32>
    %16 = tpu.matmul %14, %15, %cst_9 {dimension_numbers = #tpu.dot_dimension_numbers<[1], [0], [0], [1], [0, 0, 1, 1], [], []>} : vector<64x4xf32>, vector<4x32xf32>, vector<64x32xf32> -> vector<64x32xf32>
    %c0_10 = arith.constant 0 : index
    %c0_11 = arith.constant 0 : index
    %17 = vector.load %arg3[%c0_10, %c0_11] : memref<1x32xf32, #tpu.memory_space<vmem>>, vector<1x32xf32>
    %18 = vector.broadcast %17 : vector<1x32xf32> to vector<64x32xf32>
    %19 = arith.addf %16, %18 : vector<64x32xf32>
    %cst_12 = arith.constant 0.000000e+00 : f32
    %20 = vector.shape_cast %10 : vector<64x1xi1> to vector<64x1xi1>
    %21 = vector.broadcast %20 : vector<64x1xi1> to vector<64x32xi1>
    %22 = vector.broadcast %cst_12 : f32 to vector<64x32xf32>
    %23 = arith.select %21, %19, %22 : vector<64x32xi1>, vector<64x32xf32>
    %c0_13 = arith.constant 0 : index
    %c0_14 = arith.constant 0 : index
    %24 = vector.load %arg10[%c0_13, %c0_14] : memref<64x32xf32, #tpu.memory_space<vmem>>, vector<64x32xf32>
    tpu.vector_store %arg10[%c0_13, %c0_14], %23 {strides = array<i32>} : memref<64x32xf32, #tpu.memory_space<vmem>>, vector<64x32xf32>,
    %25 = tpu.iota {dimensions = array<i32: 1>} : vector<1x128xi32>
    %c64_i32 = arith.constant 64 : i32
    %26 = vector.broadcast %c64_i32 : i32 to vector<1x128xi32>
    %27 = arith.cmpi sge, %25, %26 : vector<1x128xi32>
    %c96_i32 = arith.constant 96 : i32
    %28 = vector.broadcast %c96_i32 : i32 to vector<1x128xi32>
    %29 = arith.cmpi slt, %25, %28 : vector<1x128xi32>
    %30 = arith.andi %27, %29 : vector<1x128xi1>
    %cst_15 = arith.constant 1.000000e+00 : f32
    %cst_16 = arith.constant 5.000000e-01 : f32
    %31 = vector.broadcast %cst_15 : f32 to vector<1x128xf32>
    %32 = vector.broadcast %cst_16 : f32 to vector<1x128xf32>
    %33 = arith.select %30, %31, %32 : vector<1x128xi1>, vector<1x128xf32>
    %c0_17 = arith.constant 0 : index
    %c0_18 = arith.constant 0 : index
    %c0_19 = arith.constant 0 : index
    %34 = vector.load %arg5[%c0_17, %c0_18, %c0_19] : memref<3x32x128xf32, #tpu.memory_space<vmem>>, vector<1x32x128xf32>
    %35 = vector.shape_cast %34 : vector<1x32x128xf32> to vector<32x128xf32>
    %c0_20 = arith.constant 0 : index
    %c0_21 = arith.constant 0 : index
    %36 = vector.load %arg10[%c0_20, %c0_21] : memref<64x32xf32, #tpu.memory_space<vmem>>, vector<64x32xf32>
    %c0_22 = arith.constant 0 : index
    %c0_23 = arith.constant 0 : index
    %c0_24 = arith.constant 0 : index
    %37 = vector.load %arg4[%c0_22, %c0_23, %c0_24] : memref<3x32x128xf32, #tpu.memory_space<vmem>>, vector<1x32x128xf32>
    %38 = vector.shape_cast %37 : vector<1x32x128xf32> to vector<32x128xf32>
    %cst_25 = arith.constant dense<0.000000e+00> : vector<64x128xf32>
    %39 = tpu.matmul %36, %38, %cst_25 {dimension_numbers = #tpu.dot_dimension_numbers<[1], [0], [0], [1], [0, 0, 1, 1], [], []>} : vector<64x32xf32>, vector<32x128xf32>, vector<64x128xf32> -> vector<64x128xf32>
    %c0_26 = arith.constant 0 : index
    %c0_27 = arith.constant 0 : index
    %c0_28 = arith.constant 0 : index
    %40 = vector.load %arg6[%c0_26, %c0_27, %c0_28] : memref<3x1x128xf32, #tpu.memory_space<vmem>>, vector<1x1x128xf32>
    %41 = vector.shape_cast %40 : vector<1x1x128xf32> to vector<1x128xf32>
    %42 = vector.broadcast %41 : vector<1x128xf32> to vector<64x128xf32>
    %43 = arith.addf %39, %42 : vector<64x128xf32>
    %c0_29 = arith.constant 0 : index
    %c0_30 = arith.constant 0 : index
    %44 = vector.load %arg11[%c0_29, %c0_30] : memref<64x128xf32, #tpu.memory_space<vmem>>, vector<64x128xf32>
    tpu.vector_store %arg11[%c0_29, %c0_30], %43 {strides = array<i32>} : memref<64x128xf32, #tpu.memory_space<vmem>>, vector<64x128xf32>,
    %cst_31 = arith.constant 0.000000e+00 : f32
    %45 = vector.broadcast %cst_31 : f32 to vector<8x32xf32>
    %cst_32 = arith.constant 0.000000e+00 : f32
    %46 = vector.broadcast %cst_32 : f32 to vector<8x32xf32>
    %c0_i32 = arith.constant 0 : i32
    %c8_i32 = arith.constant 8 : i32
    %47 = arith.muli %c0_i32, %c8_i32 : i32
    %48 = tpu.assume_multiple %47, 8 : i32
    %49 = arith.index_cast %48 : i32 to index
    %c0_33 = arith.constant 0 : index
    %50 = vector.load %arg11[%49, %c0_33] : memref<64x128xf32, #tpu.memory_space<vmem>>, vector<8x128xf32>
    %cst_34 = arith.constant dense<0.000000e+00> : vector<8x128xf32>
    %51 = tpu.matmul %45, %35, %cst_34 {dimension_numbers = #tpu.dot_dimension_numbers<[1], [0], [0], [1], [0, 0, 1, 1], [], []>} : vector<8x32xf32>, vector<32x128xf32>, vector<8x128xf32> -> vector<8x128xf32>
    %52 = arith.addf %50, %51 : vector<8x128xf32>
    %53 = vector.broadcast %33 : vector<1x128xf32> to vector<8x128xf32>
    %54 = arith.mulf %52, %53 : vector<8x128xf32>
    %55 = math.tanh %54 : vector<8x128xf32>
    %cst_35 = arith.constant 1.000000e+00 : f32
    %56 = vector.broadcast %cst_35 : f32 to vector<8x128xf32>
    %57 = arith.addf %55, %56 : vector<8x128xf32>
    %cst_36 = arith.constant 5.000000e-01 : f32
    %58 = vector.broadcast %cst_36 : f32 to vector<8x128xf32>
    %59 = arith.mulf %58, %57 : vector<8x128xf32>
    %60 = vector.extract_strided_slice %59 {offsets = [0, 0], sizes = [8, 32], strides = [1, 1]} : vector<8x128xf32> to vector<8x32xf32>
    %61 = vector.extract_strided_slice %59 {offsets = [0, 32], sizes = [8, 32], strides = [1, 1]} : vector<8x128xf32> to vector<8x32xf32>
    %62 = vector.extract_strided_slice %55 {offsets = [0, 64], sizes = [8, 32], strides = [1, 1]} : vector<8x128xf32> to vector<8x32xf32>
    %63 = vector.extract_strided_slice %59 {offsets = [0, 96], sizes = [8, 32], strides = [1, 1]} : vector<8x128xf32> to vector<8x32xf32>
    %64 = arith.mulf %61, %46 : vector<8x32xf32>
    %65 = arith.mulf %60, %62 : vector<8x32xf32>
    %66 = arith.addf %64, %65 : vector<8x32xf32>
    %67 = math.tanh %66 : vector<8x32xf32>
    %68 = arith.mulf %63, %67 : vector<8x32xf32>
    %69 = arith.index_cast %48 : i32 to index
    %c0_37 = arith.constant 0 : index
    %70 = vector.load %arg10[%69, %c0_37] : memref<64x32xf32, #tpu.memory_space<vmem>>, vector<8x32xf32>
    tpu.vector_store %arg10[%69, %c0_37], %68 {strides = array<i32>} : memref<64x32xf32, #tpu.memory_space<vmem>>, vector<8x32xf32>,
    %c1_i32 = arith.constant 1 : i32
    %c8_i32_38 = arith.constant 8 : i32
    %71 = arith.muli %c1_i32, %c8_i32_38 : i32
    %72 = tpu.assume_multiple %71, 8 : i32
    %73 = arith.index_cast %72 : i32 to index
    %c0_39 = arith.constant 0 : index
    %74 = vector.load %arg11[%73, %c0_39] : memref<64x128xf32, #tpu.memory_space<vmem>>, vector<8x128xf32>
    %cst_40 = arith.constant dense<0.000000e+00> : vector<8x128xf32>
    %75 = tpu.matmul %68, %35, %cst_40 {dimension_numbers = #tpu.dot_dimension_numbers<[1], [0], [0], [1], [0, 0, 1, 1], [], []>} : vector<8x32xf32>, vector<32x128xf32>, vector<8x128xf32> -> vector<8x128xf32>
    %76 = arith.addf %74, %75 : vector<8x128xf32>
    %77 = vector.broadcast %33 : vector<1x128xf32> to vector<8x128xf32>
    %78 = arith.mulf %76, %77 : vector<8x128xf32>
    %79 = math.tanh %78 : vector<8x128xf32>
    %cst_41 = arith.constant 1.000000e+00 : f32
    %80 = vector.broadcast %cst_41 : f32 to vector<8x128xf32>
    %81 = arith.addf %79, %80 : vector<8x128xf32>
    %cst_42 = arith.constant 5.000000e-01 : f32
    %82 = vector.broadcast %cst_42 : f32 to vector<8x128xf32>
    %83 = arith.mulf %82, %81 : vector<8x128xf32>
    %84 = vector.extract_strided_slice %83 {offsets = [0, 0], sizes = [8, 32], strides = [1, 1]} : vector<8x128xf32> to vector<8x32xf32>
    %85 = vector.extract_strided_slice %83 {offsets = [0, 32], sizes = [8, 32], strides = [1, 1]} : vector<8x128xf32> to vector<8x32xf32>
    %86 = vector.extract_strided_slice %79 {offsets = [0, 64], sizes = [8, 32], strides = [1, 1]} : vector<8x128xf32> to vector<8x32xf32>
    %87 = vector.extract_strided_slice %83 {offsets = [0, 96], sizes = [8, 32], strides = [1, 1]} : vector<8x128xf32> to vector<8x32xf32>
    %88 = arith.mulf %85, %66 : vector<8x32xf32>
    %89 = arith.mulf %84, %86 : vector<8x32xf32>
    %90 = arith.addf %88, %89 : vector<8x32xf32>
    %91 = math.tanh %90 : vector<8x32xf32>
    %92 = arith.mulf %87, %91 : vector<8x32xf32>
    %93 = arith.index_cast %72 : i32 to index
    %c0_43 = arith.constant 0 : index
    %94 = vector.load %arg10[%93, %c0_43] : memref<64x32xf32, #tpu.memory_space<vmem>>, vector<8x32xf32>
    tpu.vector_store %arg10[%93, %c0_43], %92 {strides = array<i32>} : memref<64x32xf32, #tpu.memory_space<vmem>>, vector<8x32xf32>,
    %c2_i32 = arith.constant 2 : i32
    %c8_i32_44 = arith.constant 8 : i32
    %95 = arith.muli %c2_i32, %c8_i32_44 : i32
    %96 = tpu.assume_multiple %95, 8 : i32
    %97 = arith.index_cast %96 : i32 to index
    %c0_45 = arith.constant 0 : index
    %98 = vector.load %arg11[%97, %c0_45] : memref<64x128xf32, #tpu.memory_space<vmem>>, vector<8x128xf32>
    %cst_46 = arith.constant dense<0.000000e+00> : vector<8x128xf32>
    %99 = tpu.matmul %92, %35, %cst_46 {dimension_numbers = #tpu.dot_dimension_numbers<[1], [0], [0], [1], [0, 0, 1, 1], [], []>} : vector<8x32xf32>, vector<32x128xf32>, vector<8x128xf32> -> vector<8x128xf32>
    %100 = arith.addf %98, %99 : vector<8x128xf32>
    %101 = vector.broadcast %33 : vector<1x128xf32> to vector<8x128xf32>
    %102 = arith.mulf %100, %101 : vector<8x128xf32>
    %103 = math.tanh %102 : vector<8x128xf32>
    %cst_47 = arith.constant 1.000000e+00 : f32
    %104 = vector.broadcast %cst_47 : f32 to vector<8x128xf32>
    %105 = arith.addf %103, %104 : vector<8x128xf32>
    %cst_48 = arith.constant 5.000000e-01 : f32
    %106 = vector.broadcast %cst_48 : f32 to vector<8x128xf32>
    %107 = arith.mulf %106, %105 : vector<8x128xf32>
    %108 = vector.extract_strided_slice %107 {offsets = [0, 0], sizes = [8, 32], strides = [1, 1]} : vector<8x128xf32> to vector<8x32xf32>
    %109 = vector.extract_strided_slice %107 {offsets = [0, 32], sizes = [8, 32], strides = [1, 1]} : vector<8x128xf32> to vector<8x32xf32>
    %110 = vector.extract_strided_slice %103 {offsets = [0, 64], sizes = [8, 32], strides = [1, 1]} : vector<8x128xf32> to vector<8x32xf32>
    %111 = vector.extract_strided_slice %107 {offsets = [0, 96], sizes = [8, 32], strides = [1, 1]} : vector<8x128xf32> to vector<8x32xf32>
    %112 = arith.mulf %109, %90 : vector<8x32xf32>
    %113 = arith.mulf %108, %110 : vector<8x32xf32>
    %114 = arith.addf %112, %113 : vector<8x32xf32>
    %115 = math.tanh %114 : vector<8x32xf32>
    %116 = arith.mulf %111, %115 : vector<8x32xf32>
    %117 = arith.index_cast %96 : i32 to index
    %c0_49 = arith.constant 0 : index
    %118 = vector.load %arg10[%117, %c0_49] : memref<64x32xf32, #tpu.memory_space<vmem>>, vector<8x32xf32>
    tpu.vector_store %arg10[%117, %c0_49], %116 {strides = array<i32>} : memref<64x32xf32, #tpu.memory_space<vmem>>, vector<8x32xf32>,
    %c3_i32 = arith.constant 3 : i32
    %c8_i32_50 = arith.constant 8 : i32
    %119 = arith.muli %c3_i32, %c8_i32_50 : i32
    %120 = tpu.assume_multiple %119, 8 : i32
    %121 = arith.index_cast %120 : i32 to index
    %c0_51 = arith.constant 0 : index
    %122 = vector.load %arg11[%121, %c0_51] : memref<64x128xf32, #tpu.memory_space<vmem>>, vector<8x128xf32>
    %cst_52 = arith.constant dense<0.000000e+00> : vector<8x128xf32>
    %123 = tpu.matmul %116, %35, %cst_52 {dimension_numbers = #tpu.dot_dimension_numbers<[1], [0], [0], [1], [0, 0, 1, 1], [], []>} : vector<8x32xf32>, vector<32x128xf32>, vector<8x128xf32> -> vector<8x128xf32>
    %124 = arith.addf %122, %123 : vector<8x128xf32>
    %125 = vector.broadcast %33 : vector<1x128xf32> to vector<8x128xf32>
    %126 = arith.mulf %124, %125 : vector<8x128xf32>
    %127 = math.tanh %126 : vector<8x128xf32>
    %cst_53 = arith.constant 1.000000e+00 : f32
    %128 = vector.broadcast %cst_53 : f32 to vector<8x128xf32>
    %129 = arith.addf %127, %128 : vector<8x128xf32>
    %cst_54 = arith.constant 5.000000e-01 : f32
    %130 = vector.broadcast %cst_54 : f32 to vector<8x128xf32>
    %131 = arith.mulf %130, %129 : vector<8x128xf32>
    %132 = vector.extract_strided_slice %131 {offsets = [0, 0], sizes = [8, 32], strides = [1, 1]} : vector<8x128xf32> to vector<8x32xf32>
    %133 = vector.extract_strided_slice %131 {offsets = [0, 32], sizes = [8, 32], strides = [1, 1]} : vector<8x128xf32> to vector<8x32xf32>
    %134 = vector.extract_strided_slice %127 {offsets = [0, 64], sizes = [8, 32], strides = [1, 1]} : vector<8x128xf32> to vector<8x32xf32>
    %135 = vector.extract_strided_slice %131 {offsets = [0, 96], sizes = [8, 32], strides = [1, 1]} : vector<8x128xf32> to vector<8x32xf32>
    %136 = arith.mulf %133, %114 : vector<8x32xf32>
    %137 = arith.mulf %132, %134 : vector<8x32xf32>
    %138 = arith.addf %136, %137 : vector<8x32xf32>
    %139 = math.tanh %138 : vector<8x32xf32>
    %140 = arith.mulf %135, %139 : vector<8x32xf32>
    %141 = arith.index_cast %120 : i32 to index
    %c0_55 = arith.constant 0 : index
    %142 = vector.load %arg10[%141, %c0_55] : memref<64x32xf32, #tpu.memory_space<vmem>>, vector<8x32xf32>
    tpu.vector_store %arg10[%141, %c0_55], %140 {strides = array<i32>} : memref<64x32xf32, #tpu.memory_space<vmem>>, vector<8x32xf32>,
    %c4_i32 = arith.constant 4 : i32
    %c8_i32_56 = arith.constant 8 : i32
    %143 = arith.muli %c4_i32, %c8_i32_56 : i32
    %144 = tpu.assume_multiple %143, 8 : i32
    %145 = arith.index_cast %144 : i32 to index
    %c0_57 = arith.constant 0 : index
    %146 = vector.load %arg11[%145, %c0_57] : memref<64x128xf32, #tpu.memory_space<vmem>>, vector<8x128xf32>
    %cst_58 = arith.constant dense<0.000000e+00> : vector<8x128xf32>
    %147 = tpu.matmul %140, %35, %cst_58 {dimension_numbers = #tpu.dot_dimension_numbers<[1], [0], [0], [1], [0, 0, 1, 1], [], []>} : vector<8x32xf32>, vector<32x128xf32>, vector<8x128xf32> -> vector<8x128xf32>
    %148 = arith.addf %146, %147 : vector<8x128xf32>
    %149 = vector.broadcast %33 : vector<1x128xf32> to vector<8x128xf32>
    %150 = arith.mulf %148, %149 : vector<8x128xf32>
    %151 = math.tanh %150 : vector<8x128xf32>
    %cst_59 = arith.constant 1.000000e+00 : f32
    %152 = vector.broadcast %cst_59 : f32 to vector<8x128xf32>
    %153 = arith.addf %151, %152 : vector<8x128xf32>
    %cst_60 = arith.constant 5.000000e-01 : f32
    %154 = vector.broadcast %cst_60 : f32 to vector<8x128xf32>
    %155 = arith.mulf %154, %153 : vector<8x128xf32>
    %156 = vector.extract_strided_slice %155 {offsets = [0, 0], sizes = [8, 32], strides = [1, 1]} : vector<8x128xf32> to vector<8x32xf32>
    %157 = vector.extract_strided_slice %155 {offsets = [0, 32], sizes = [8, 32], strides = [1, 1]} : vector<8x128xf32> to vector<8x32xf32>
    %158 = vector.extract_strided_slice %151 {offsets = [0, 64], sizes = [8, 32], strides = [1, 1]} : vector<8x128xf32> to vector<8x32xf32>
    %159 = vector.extract_strided_slice %155 {offsets = [0, 96], sizes = [8, 32], strides = [1, 1]} : vector<8x128xf32> to vector<8x32xf32>
    %160 = arith.mulf %157, %138 : vector<8x32xf32>
    %161 = arith.mulf %156, %158 : vector<8x32xf32>
    %162 = arith.addf %160, %161 : vector<8x32xf32>
    %163 = math.tanh %162 : vector<8x32xf32>
    %164 = arith.mulf %159, %163 : vector<8x32xf32>
    %165 = arith.index_cast %144 : i32 to index
    %c0_61 = arith.constant 0 : index
    %166 = vector.load %arg10[%165, %c0_61] : memref<64x32xf32, #tpu.memory_space<vmem>>, vector<8x32xf32>
    tpu.vector_store %arg10[%165, %c0_61], %164 {strides = array<i32>} : memref<64x32xf32, #tpu.memory_space<vmem>>, vector<8x32xf32>,
    %c5_i32 = arith.constant 5 : i32
    %c8_i32_62 = arith.constant 8 : i32
    %167 = arith.muli %c5_i32, %c8_i32_62 : i32
    %168 = tpu.assume_multiple %167, 8 : i32
    %169 = arith.index_cast %168 : i32 to index
    %c0_63 = arith.constant 0 : index
    %170 = vector.load %arg11[%169, %c0_63] : memref<64x128xf32, #tpu.memory_space<vmem>>, vector<8x128xf32>
    %cst_64 = arith.constant dense<0.000000e+00> : vector<8x128xf32>
    %171 = tpu.matmul %164, %35, %cst_64 {dimension_numbers = #tpu.dot_dimension_numbers<[1], [0], [0], [1], [0, 0, 1, 1], [], []>} : vector<8x32xf32>, vector<32x128xf32>, vector<8x128xf32> -> vector<8x128xf32>
    %172 = arith.addf %170, %171 : vector<8x128xf32>
    %173 = vector.broadcast %33 : vector<1x128xf32> to vector<8x128xf32>
    %174 = arith.mulf %172, %173 : vector<8x128xf32>
    %175 = math.tanh %174 : vector<8x128xf32>
    %cst_65 = arith.constant 1.000000e+00 : f32
    %176 = vector.broadcast %cst_65 : f32 to vector<8x128xf32>
    %177 = arith.addf %175, %176 : vector<8x128xf32>
    %cst_66 = arith.constant 5.000000e-01 : f32
    %178 = vector.broadcast %cst_66 : f32 to vector<8x128xf32>
    %179 = arith.mulf %178, %177 : vector<8x128xf32>
    %180 = vector.extract_strided_slice %179 {offsets = [0, 0], sizes = [8, 32], strides = [1, 1]} : vector<8x128xf32> to vector<8x32xf32>
    %181 = vector.extract_strided_slice %179 {offsets = [0, 32], sizes = [8, 32], strides = [1, 1]} : vector<8x128xf32> to vector<8x32xf32>
    %182 = vector.extract_strided_slice %175 {offsets = [0, 64], sizes = [8, 32], strides = [1, 1]} : vector<8x128xf32> to vector<8x32xf32>
    %183 = vector.extract_strided_slice %179 {offsets = [0, 96], sizes = [8, 32], strides = [1, 1]} : vector<8x128xf32> to vector<8x32xf32>
    %184 = arith.mulf %181, %162 : vector<8x32xf32>
    %185 = arith.mulf %180, %182 : vector<8x32xf32>
    %186 = arith.addf %184, %185 : vector<8x32xf32>
    %187 = math.tanh %186 : vector<8x32xf32>
    %188 = arith.mulf %183, %187 : vector<8x32xf32>
    %189 = arith.index_cast %168 : i32 to index
    %c0_67 = arith.constant 0 : index
    %190 = vector.load %arg10[%189, %c0_67] : memref<64x32xf32, #tpu.memory_space<vmem>>, vector<8x32xf32>
    tpu.vector_store %arg10[%189, %c0_67], %188 {strides = array<i32>} : memref<64x32xf32, #tpu.memory_space<vmem>>, vector<8x32xf32>,
    %c6_i32 = arith.constant 6 : i32
    %c8_i32_68 = arith.constant 8 : i32
    %191 = arith.muli %c6_i32, %c8_i32_68 : i32
    %192 = tpu.assume_multiple %191, 8 : i32
    %193 = arith.index_cast %192 : i32 to index
    %c0_69 = arith.constant 0 : index
    %194 = vector.load %arg11[%193, %c0_69] : memref<64x128xf32, #tpu.memory_space<vmem>>, vector<8x128xf32>
    %cst_70 = arith.constant dense<0.000000e+00> : vector<8x128xf32>
    %195 = tpu.matmul %188, %35, %cst_70 {dimension_numbers = #tpu.dot_dimension_numbers<[1], [0], [0], [1], [0, 0, 1, 1], [], []>} : vector<8x32xf32>, vector<32x128xf32>, vector<8x128xf32> -> vector<8x128xf32>
    %196 = arith.addf %194, %195 : vector<8x128xf32>
    %197 = vector.broadcast %33 : vector<1x128xf32> to vector<8x128xf32>
    %198 = arith.mulf %196, %197 : vector<8x128xf32>
    %199 = math.tanh %198 : vector<8x128xf32>
    %cst_71 = arith.constant 1.000000e+00 : f32
    %200 = vector.broadcast %cst_71 : f32 to vector<8x128xf32>
    %201 = arith.addf %199, %200 : vector<8x128xf32>
    %cst_72 = arith.constant 5.000000e-01 : f32
    %202 = vector.broadcast %cst_72 : f32 to vector<8x128xf32>
    %203 = arith.mulf %202, %201 : vector<8x128xf32>
    %204 = vector.extract_strided_slice %203 {offsets = [0, 0], sizes = [8, 32], strides = [1, 1]} : vector<8x128xf32> to vector<8x32xf32>
    %205 = vector.extract_strided_slice %203 {offsets = [0, 32], sizes = [8, 32], strides = [1, 1]} : vector<8x128xf32> to vector<8x32xf32>
    %206 = vector.extract_strided_slice %199 {offsets = [0, 64], sizes = [8, 32], strides = [1, 1]} : vector<8x128xf32> to vector<8x32xf32>
    %207 = vector.extract_strided_slice %203 {offsets = [0, 96], sizes = [8, 32], strides = [1, 1]} : vector<8x128xf32> to vector<8x32xf32>
    %208 = arith.mulf %205, %186 : vector<8x32xf32>
    %209 = arith.mulf %204, %206 : vector<8x32xf32>
    %210 = arith.addf %208, %209 : vector<8x32xf32>
    %211 = math.tanh %210 : vector<8x32xf32>
    %212 = arith.mulf %207, %211 : vector<8x32xf32>
    %213 = arith.index_cast %192 : i32 to index
    %c0_73 = arith.constant 0 : index
    %214 = vector.load %arg10[%213, %c0_73] : memref<64x32xf32, #tpu.memory_space<vmem>>, vector<8x32xf32>
    tpu.vector_store %arg10[%213, %c0_73], %212 {strides = array<i32>} : memref<64x32xf32, #tpu.memory_space<vmem>>, vector<8x32xf32>,
    %c7_i32 = arith.constant 7 : i32
    %c8_i32_74 = arith.constant 8 : i32
    %215 = arith.muli %c7_i32, %c8_i32_74 : i32
    %216 = tpu.assume_multiple %215, 8 : i32
    %217 = arith.index_cast %216 : i32 to index
    %c0_75 = arith.constant 0 : index
    %218 = vector.load %arg11[%217, %c0_75] : memref<64x128xf32, #tpu.memory_space<vmem>>, vector<8x128xf32>
    %cst_76 = arith.constant dense<0.000000e+00> : vector<8x128xf32>
    %219 = tpu.matmul %212, %35, %cst_76 {dimension_numbers = #tpu.dot_dimension_numbers<[1], [0], [0], [1], [0, 0, 1, 1], [], []>} : vector<8x32xf32>, vector<32x128xf32>, vector<8x128xf32> -> vector<8x128xf32>
    %220 = arith.addf %218, %219 : vector<8x128xf32>
    %221 = vector.broadcast %33 : vector<1x128xf32> to vector<8x128xf32>
    %222 = arith.mulf %220, %221 : vector<8x128xf32>
    %223 = math.tanh %222 : vector<8x128xf32>
    %cst_77 = arith.constant 1.000000e+00 : f32
    %224 = vector.broadcast %cst_77 : f32 to vector<8x128xf32>
    %225 = arith.addf %223, %224 : vector<8x128xf32>
    %cst_78 = arith.constant 5.000000e-01 : f32
    %226 = vector.broadcast %cst_78 : f32 to vector<8x128xf32>
    %227 = arith.mulf %226, %225 : vector<8x128xf32>
    %228 = vector.extract_strided_slice %227 {offsets = [0, 0], sizes = [8, 32], strides = [1, 1]} : vector<8x128xf32> to vector<8x32xf32>
    %229 = vector.extract_strided_slice %227 {offsets = [0, 32], sizes = [8, 32], strides = [1, 1]} : vector<8x128xf32> to vector<8x32xf32>
    %230 = vector.extract_strided_slice %223 {offsets = [0, 64], sizes = [8, 32], strides = [1, 1]} : vector<8x128xf32> to vector<8x32xf32>
    %231 = vector.extract_strided_slice %227 {offsets = [0, 96], sizes = [8, 32], strides = [1, 1]} : vector<8x128xf32> to vector<8x32xf32>
    %232 = arith.mulf %229, %210 : vector<8x32xf32>
    %233 = arith.mulf %228, %230 : vector<8x32xf32>
    %234 = arith.addf %232, %233 : vector<8x32xf32>
    %235 = math.tanh %234 : vector<8x32xf32>
    %236 = arith.mulf %231, %235 : vector<8x32xf32>
    %237 = arith.index_cast %216 : i32 to index
    %c0_79 = arith.constant 0 : index
    %238 = vector.load %arg10[%237, %c0_79] : memref<64x32xf32, #tpu.memory_space<vmem>>, vector<8x32xf32>
    tpu.vector_store %arg10[%237, %c0_79], %236 {strides = array<i32>} : memref<64x32xf32, #tpu.memory_space<vmem>>, vector<8x32xf32>,
    %c8_i32_80 = arith.constant 8 : i32
    %c1 = arith.constant 1 : index
    %c0_81 = arith.constant 0 : index
    %c0_82 = arith.constant 0 : index
    %239 = vector.load %arg5[%c1, %c0_81, %c0_82] : memref<3x32x128xf32, #tpu.memory_space<vmem>>, vector<1x32x128xf32>
    %240 = vector.shape_cast %239 : vector<1x32x128xf32> to vector<32x128xf32>
    %c0_83 = arith.constant 0 : index
    %c0_84 = arith.constant 0 : index
    %241 = vector.load %arg10[%c0_83, %c0_84] : memref<64x32xf32, #tpu.memory_space<vmem>>, vector<64x32xf32>
    %c1_85 = arith.constant 1 : index
    %c0_86 = arith.constant 0 : index
    %c0_87 = arith.constant 0 : index
    %242 = vector.load %arg4[%c1_85, %c0_86, %c0_87] : memref<3x32x128xf32, #tpu.memory_space<vmem>>, vector<1x32x128xf32>
    %243 = vector.shape_cast %242 : vector<1x32x128xf32> to vector<32x128xf32>
    %cst_88 = arith.constant dense<0.000000e+00> : vector<64x128xf32>
    %244 = tpu.matmul %241, %243, %cst_88 {dimension_numbers = #tpu.dot_dimension_numbers<[1], [0], [0], [1], [0, 0, 1, 1], [], []>} : vector<64x32xf32>, vector<32x128xf32>, vector<64x128xf32> -> vector<64x128xf32>
    %c1_89 = arith.constant 1 : index
    %c0_90 = arith.constant 0 : index
    %c0_91 = arith.constant 0 : index
    %245 = vector.load %arg6[%c1_89, %c0_90, %c0_91] : memref<3x1x128xf32, #tpu.memory_space<vmem>>, vector<1x1x128xf32>
    %246 = vector.shape_cast %245 : vector<1x1x128xf32> to vector<1x128xf32>
    %247 = vector.broadcast %246 : vector<1x128xf32> to vector<64x128xf32>
    %248 = arith.addf %244, %247 : vector<64x128xf32>
    %c0_92 = arith.constant 0 : index
    %c0_93 = arith.constant 0 : index
    %249 = vector.load %arg11[%c0_92, %c0_93] : memref<64x128xf32, #tpu.memory_space<vmem>>, vector<64x128xf32>
    tpu.vector_store %arg11[%c0_92, %c0_93], %248 {strides = array<i32>} : memref<64x128xf32, #tpu.memory_space<vmem>>, vector<64x128xf32>,
    %cst_94 = arith.constant 0.000000e+00 : f32
    %250 = vector.broadcast %cst_94 : f32 to vector<8x32xf32>
    %cst_95 = arith.constant 0.000000e+00 : f32
    %251 = vector.broadcast %cst_95 : f32 to vector<8x32xf32>
    %c0_i32_96 = arith.constant 0 : i32
    %c8_i32_97 = arith.constant 8 : i32
    %252 = arith.muli %c0_i32_96, %c8_i32_97 : i32
    %253 = tpu.assume_multiple %252, 8 : i32
    %254 = arith.index_cast %253 : i32 to index
    %c0_98 = arith.constant 0 : index
    %255 = vector.load %arg11[%254, %c0_98] : memref<64x128xf32, #tpu.memory_space<vmem>>, vector<8x128xf32>
    %cst_99 = arith.constant dense<0.000000e+00> : vector<8x128xf32>
    %256 = tpu.matmul %250, %240, %cst_99 {dimension_numbers = #tpu.dot_dimension_numbers<[1], [0], [0], [1], [0, 0, 1, 1], [], []>} : vector<8x32xf32>, vector<32x128xf32>, vector<8x128xf32> -> vector<8x128xf32>
    %257 = arith.addf %255, %256 : vector<8x128xf32>
    %258 = vector.broadcast %33 : vector<1x128xf32> to vector<8x128xf32>
    %259 = arith.mulf %257, %258 : vector<8x128xf32>
    %260 = math.tanh %259 : vector<8x128xf32>
    %cst_100 = arith.constant 1.000000e+00 : f32
    %261 = vector.broadcast %cst_100 : f32 to vector<8x128xf32>
    %262 = arith.addf %260, %261 : vector<8x128xf32>
    %cst_101 = arith.constant 5.000000e-01 : f32
    %263 = vector.broadcast %cst_101 : f32 to vector<8x128xf32>
    %264 = arith.mulf %263, %262 : vector<8x128xf32>
    %265 = vector.extract_strided_slice %264 {offsets = [0, 0], sizes = [8, 32], strides = [1, 1]} : vector<8x128xf32> to vector<8x32xf32>
    %266 = vector.extract_strided_slice %264 {offsets = [0, 32], sizes = [8, 32], strides = [1, 1]} : vector<8x128xf32> to vector<8x32xf32>
    %267 = vector.extract_strided_slice %260 {offsets = [0, 64], sizes = [8, 32], strides = [1, 1]} : vector<8x128xf32> to vector<8x32xf32>
    %268 = vector.extract_strided_slice %264 {offsets = [0, 96], sizes = [8, 32], strides = [1, 1]} : vector<8x128xf32> to vector<8x32xf32>
    %269 = arith.mulf %266, %251 : vector<8x32xf32>
    %270 = arith.mulf %265, %267 : vector<8x32xf32>
    %271 = arith.addf %269, %270 : vector<8x32xf32>
    %272 = math.tanh %271 : vector<8x32xf32>
    %273 = arith.mulf %268, %272 : vector<8x32xf32>
    %274 = arith.index_cast %253 : i32 to index
    %c0_102 = arith.constant 0 : index
    %275 = vector.load %arg10[%274, %c0_102] : memref<64x32xf32, #tpu.memory_space<vmem>>, vector<8x32xf32>
    tpu.vector_store %arg10[%274, %c0_102], %273 {strides = array<i32>} : memref<64x32xf32, #tpu.memory_space<vmem>>, vector<8x32xf32>,
    %c1_i32_103 = arith.constant 1 : i32
    %c8_i32_104 = arith.constant 8 : i32
    %276 = arith.muli %c1_i32_103, %c8_i32_104 : i32
    %277 = tpu.assume_multiple %276, 8 : i32
    %278 = arith.index_cast %277 : i32 to index
    %c0_105 = arith.constant 0 : index
    %279 = vector.load %arg11[%278, %c0_105] : memref<64x128xf32, #tpu.memory_space<vmem>>, vector<8x128xf32>
    %cst_106 = arith.constant dense<0.000000e+00> : vector<8x128xf32>
    %280 = tpu.matmul %273, %240, %cst_106 {dimension_numbers = #tpu.dot_dimension_numbers<[1], [0], [0], [1], [0, 0, 1, 1], [], []>} : vector<8x32xf32>, vector<32x128xf32>, vector<8x128xf32> -> vector<8x128xf32>
    %281 = arith.addf %279, %280 : vector<8x128xf32>
    %282 = vector.broadcast %33 : vector<1x128xf32> to vector<8x128xf32>
    %283 = arith.mulf %281, %282 : vector<8x128xf32>
    %284 = math.tanh %283 : vector<8x128xf32>
    %cst_107 = arith.constant 1.000000e+00 : f32
    %285 = vector.broadcast %cst_107 : f32 to vector<8x128xf32>
    %286 = arith.addf %284, %285 : vector<8x128xf32>
    %cst_108 = arith.constant 5.000000e-01 : f32
    %287 = vector.broadcast %cst_108 : f32 to vector<8x128xf32>
    %288 = arith.mulf %287, %286 : vector<8x128xf32>
    %289 = vector.extract_strided_slice %288 {offsets = [0, 0], sizes = [8, 32], strides = [1, 1]} : vector<8x128xf32> to vector<8x32xf32>
    %290 = vector.extract_strided_slice %288 {offsets = [0, 32], sizes = [8, 32], strides = [1, 1]} : vector<8x128xf32> to vector<8x32xf32>
    %291 = vector.extract_strided_slice %284 {offsets = [0, 64], sizes = [8, 32], strides = [1, 1]} : vector<8x128xf32> to vector<8x32xf32>
    %292 = vector.extract_strided_slice %288 {offsets = [0, 96], sizes = [8, 32], strides = [1, 1]} : vector<8x128xf32> to vector<8x32xf32>
    %293 = arith.mulf %290, %271 : vector<8x32xf32>
    %294 = arith.mulf %289, %291 : vector<8x32xf32>
    %295 = arith.addf %293, %294 : vector<8x32xf32>
    %296 = math.tanh %295 : vector<8x32xf32>
    %297 = arith.mulf %292, %296 : vector<8x32xf32>
    %298 = arith.index_cast %277 : i32 to index
    %c0_109 = arith.constant 0 : index
    %299 = vector.load %arg10[%298, %c0_109] : memref<64x32xf32, #tpu.memory_space<vmem>>, vector<8x32xf32>
    tpu.vector_store %arg10[%298, %c0_109], %297 {strides = array<i32>} : memref<64x32xf32, #tpu.memory_space<vmem>>, vector<8x32xf32>,
    %c2_i32_110 = arith.constant 2 : i32
    %c8_i32_111 = arith.constant 8 : i32
    %300 = arith.muli %c2_i32_110, %c8_i32_111 : i32
    %301 = tpu.assume_multiple %300, 8 : i32
    %302 = arith.index_cast %301 : i32 to index
    %c0_112 = arith.constant 0 : index
    %303 = vector.load %arg11[%302, %c0_112] : memref<64x128xf32, #tpu.memory_space<vmem>>, vector<8x128xf32>
    %cst_113 = arith.constant dense<0.000000e+00> : vector<8x128xf32>
    %304 = tpu.matmul %297, %240, %cst_113 {dimension_numbers = #tpu.dot_dimension_numbers<[1], [0], [0], [1], [0, 0, 1, 1], [], []>} : vector<8x32xf32>, vector<32x128xf32>, vector<8x128xf32> -> vector<8x128xf32>
    %305 = arith.addf %303, %304 : vector<8x128xf32>
    %306 = vector.broadcast %33 : vector<1x128xf32> to vector<8x128xf32>
    %307 = arith.mulf %305, %306 : vector<8x128xf32>
    %308 = math.tanh %307 : vector<8x128xf32>
    %cst_114 = arith.constant 1.000000e+00 : f32
    %309 = vector.broadcast %cst_114 : f32 to vector<8x128xf32>
    %310 = arith.addf %308, %309 : vector<8x128xf32>
    %cst_115 = arith.constant 5.000000e-01 : f32
    %311 = vector.broadcast %cst_115 : f32 to vector<8x128xf32>
    %312 = arith.mulf %311, %310 : vector<8x128xf32>
    %313 = vector.extract_strided_slice %312 {offsets = [0, 0], sizes = [8, 32], strides = [1, 1]} : vector<8x128xf32> to vector<8x32xf32>
    %314 = vector.extract_strided_slice %312 {offsets = [0, 32], sizes = [8, 32], strides = [1, 1]} : vector<8x128xf32> to vector<8x32xf32>
    %315 = vector.extract_strided_slice %308 {offsets = [0, 64], sizes = [8, 32], strides = [1, 1]} : vector<8x128xf32> to vector<8x32xf32>
    %316 = vector.extract_strided_slice %312 {offsets = [0, 96], sizes = [8, 32], strides = [1, 1]} : vector<8x128xf32> to vector<8x32xf32>
    %317 = arith.mulf %314, %295 : vector<8x32xf32>
    %318 = arith.mulf %313, %315 : vector<8x32xf32>
    %319 = arith.addf %317, %318 : vector<8x32xf32>
    %320 = math.tanh %319 : vector<8x32xf32>
    %321 = arith.mulf %316, %320 : vector<8x32xf32>
    %322 = arith.index_cast %301 : i32 to index
    %c0_116 = arith.constant 0 : index
    %323 = vector.load %arg10[%322, %c0_116] : memref<64x32xf32, #tpu.memory_space<vmem>>, vector<8x32xf32>
    tpu.vector_store %arg10[%322, %c0_116], %321 {strides = array<i32>} : memref<64x32xf32, #tpu.memory_space<vmem>>, vector<8x32xf32>,
    %c3_i32_117 = arith.constant 3 : i32
    %c8_i32_118 = arith.constant 8 : i32
    %324 = arith.muli %c3_i32_117, %c8_i32_118 : i32
    %325 = tpu.assume_multiple %324, 8 : i32
    %326 = arith.index_cast %325 : i32 to index
    %c0_119 = arith.constant 0 : index
    %327 = vector.load %arg11[%326, %c0_119] : memref<64x128xf32, #tpu.memory_space<vmem>>, vector<8x128xf32>
    %cst_120 = arith.constant dense<0.000000e+00> : vector<8x128xf32>
    %328 = tpu.matmul %321, %240, %cst_120 {dimension_numbers = #tpu.dot_dimension_numbers<[1], [0], [0], [1], [0, 0, 1, 1], [], []>} : vector<8x32xf32>, vector<32x128xf32>, vector<8x128xf32> -> vector<8x128xf32>
    %329 = arith.addf %327, %328 : vector<8x128xf32>
    %330 = vector.broadcast %33 : vector<1x128xf32> to vector<8x128xf32>
    %331 = arith.mulf %329, %330 : vector<8x128xf32>
    %332 = math.tanh %331 : vector<8x128xf32>
    %cst_121 = arith.constant 1.000000e+00 : f32
    %333 = vector.broadcast %cst_121 : f32 to vector<8x128xf32>
    %334 = arith.addf %332, %333 : vector<8x128xf32>
    %cst_122 = arith.constant 5.000000e-01 : f32
    %335 = vector.broadcast %cst_122 : f32 to vector<8x128xf32>
    %336 = arith.mulf %335, %334 : vector<8x128xf32>
    %337 = vector.extract_strided_slice %336 {offsets = [0, 0], sizes = [8, 32], strides = [1, 1]} : vector<8x128xf32> to vector<8x32xf32>
    %338 = vector.extract_strided_slice %336 {offsets = [0, 32], sizes = [8, 32], strides = [1, 1]} : vector<8x128xf32> to vector<8x32xf32>
    %339 = vector.extract_strided_slice %332 {offsets = [0, 64], sizes = [8, 32], strides = [1, 1]} : vector<8x128xf32> to vector<8x32xf32>
    %340 = vector.extract_strided_slice %336 {offsets = [0, 96], sizes = [8, 32], strides = [1, 1]} : vector<8x128xf32> to vector<8x32xf32>
    %341 = arith.mulf %338, %319 : vector<8x32xf32>
    %342 = arith.mulf %337, %339 : vector<8x32xf32>
    %343 = arith.addf %341, %342 : vector<8x32xf32>
    %344 = math.tanh %343 : vector<8x32xf32>
    %345 = arith.mulf %340, %344 : vector<8x32xf32>
    %346 = arith.index_cast %325 : i32 to index
    %c0_123 = arith.constant 0 : index
    %347 = vector.load %arg10[%346, %c0_123] : memref<64x32xf32, #tpu.memory_space<vmem>>, vector<8x32xf32>
    tpu.vector_store %arg10[%346, %c0_123], %345 {strides = array<i32>} : memref<64x32xf32, #tpu.memory_space<vmem>>, vector<8x32xf32>,
    %c4_i32_124 = arith.constant 4 : i32
    %c8_i32_125 = arith.constant 8 : i32
    %348 = arith.muli %c4_i32_124, %c8_i32_125 : i32
    %349 = tpu.assume_multiple %348, 8 : i32
    %350 = arith.index_cast %349 : i32 to index
    %c0_126 = arith.constant 0 : index
    %351 = vector.load %arg11[%350, %c0_126] : memref<64x128xf32, #tpu.memory_space<vmem>>, vector<8x128xf32>
    %cst_127 = arith.constant dense<0.000000e+00> : vector<8x128xf32>
    %352 = tpu.matmul %345, %240, %cst_127 {dimension_numbers = #tpu.dot_dimension_numbers<[1], [0], [0], [1], [0, 0, 1, 1], [], []>} : vector<8x32xf32>, vector<32x128xf32>, vector<8x128xf32> -> vector<8x128xf32>
    %353 = arith.addf %351, %352 : vector<8x128xf32>
    %354 = vector.broadcast %33 : vector<1x128xf32> to vector<8x128xf32>
    %355 = arith.mulf %353, %354 : vector<8x128xf32>
    %356 = math.tanh %355 : vector<8x128xf32>
    %cst_128 = arith.constant 1.000000e+00 : f32
    %357 = vector.broadcast %cst_128 : f32 to vector<8x128xf32>
    %358 = arith.addf %356, %357 : vector<8x128xf32>
    %cst_129 = arith.constant 5.000000e-01 : f32
    %359 = vector.broadcast %cst_129 : f32 to vector<8x128xf32>
    %360 = arith.mulf %359, %358 : vector<8x128xf32>
    %361 = vector.extract_strided_slice %360 {offsets = [0, 0], sizes = [8, 32], strides = [1, 1]} : vector<8x128xf32> to vector<8x32xf32>
    %362 = vector.extract_strided_slice %360 {offsets = [0, 32], sizes = [8, 32], strides = [1, 1]} : vector<8x128xf32> to vector<8x32xf32>
    %363 = vector.extract_strided_slice %356 {offsets = [0, 64], sizes = [8, 32], strides = [1, 1]} : vector<8x128xf32> to vector<8x32xf32>
    %364 = vector.extract_strided_slice %360 {offsets = [0, 96], sizes = [8, 32], strides = [1, 1]} : vector<8x128xf32> to vector<8x32xf32>
    %365 = arith.mulf %362, %343 : vector<8x32xf32>
    %366 = arith.mulf %361, %363 : vector<8x32xf32>
    %367 = arith.addf %365, %366 : vector<8x32xf32>
    %368 = math.tanh %367 : vector<8x32xf32>
    %369 = arith.mulf %364, %368 : vector<8x32xf32>
    %370 = arith.index_cast %349 : i32 to index
    %c0_130 = arith.constant 0 : index
    %371 = vector.load %arg10[%370, %c0_130] : memref<64x32xf32, #tpu.memory_space<vmem>>, vector<8x32xf32>
    tpu.vector_store %arg10[%370, %c0_130], %369 {strides = array<i32>} : memref<64x32xf32, #tpu.memory_space<vmem>>, vector<8x32xf32>,
    %c5_i32_131 = arith.constant 5 : i32
    %c8_i32_132 = arith.constant 8 : i32
    %372 = arith.muli %c5_i32_131, %c8_i32_132 : i32
    %373 = tpu.assume_multiple %372, 8 : i32
    %374 = arith.index_cast %373 : i32 to index
    %c0_133 = arith.constant 0 : index
    %375 = vector.load %arg11[%374, %c0_133] : memref<64x128xf32, #tpu.memory_space<vmem>>, vector<8x128xf32>
    %cst_134 = arith.constant dense<0.000000e+00> : vector<8x128xf32>
    %376 = tpu.matmul %369, %240, %cst_134 {dimension_numbers = #tpu.dot_dimension_numbers<[1], [0], [0], [1], [0, 0, 1, 1], [], []>} : vector<8x32xf32>, vector<32x128xf32>, vector<8x128xf32> -> vector<8x128xf32>
    %377 = arith.addf %375, %376 : vector<8x128xf32>
    %378 = vector.broadcast %33 : vector<1x128xf32> to vector<8x128xf32>
    %379 = arith.mulf %377, %378 : vector<8x128xf32>
    %380 = math.tanh %379 : vector<8x128xf32>
    %cst_135 = arith.constant 1.000000e+00 : f32
    %381 = vector.broadcast %cst_135 : f32 to vector<8x128xf32>
    %382 = arith.addf %380, %381 : vector<8x128xf32>
    %cst_136 = arith.constant 5.000000e-01 : f32
    %383 = vector.broadcast %cst_136 : f32 to vector<8x128xf32>
    %384 = arith.mulf %383, %382 : vector<8x128xf32>
    %385 = vector.extract_strided_slice %384 {offsets = [0, 0], sizes = [8, 32], strides = [1, 1]} : vector<8x128xf32> to vector<8x32xf32>
    %386 = vector.extract_strided_slice %384 {offsets = [0, 32], sizes = [8, 32], strides = [1, 1]} : vector<8x128xf32> to vector<8x32xf32>
    %387 = vector.extract_strided_slice %380 {offsets = [0, 64], sizes = [8, 32], strides = [1, 1]} : vector<8x128xf32> to vector<8x32xf32>
    %388 = vector.extract_strided_slice %384 {offsets = [0, 96], sizes = [8, 32], strides = [1, 1]} : vector<8x128xf32> to vector<8x32xf32>
    %389 = arith.mulf %386, %367 : vector<8x32xf32>
    %390 = arith.mulf %385, %387 : vector<8x32xf32>
    %391 = arith.addf %389, %390 : vector<8x32xf32>
    %392 = math.tanh %391 : vector<8x32xf32>
    %393 = arith.mulf %388, %392 : vector<8x32xf32>
    %394 = arith.index_cast %373 : i32 to index
    %c0_137 = arith.constant 0 : index
    %395 = vector.load %arg10[%394, %c0_137] : memref<64x32xf32, #tpu.memory_space<vmem>>, vector<8x32xf32>
    tpu.vector_store %arg10[%394, %c0_137], %393 {strides = array<i32>} : memref<64x32xf32, #tpu.memory_space<vmem>>, vector<8x32xf32>,
    %c6_i32_138 = arith.constant 6 : i32
    %c8_i32_139 = arith.constant 8 : i32
    %396 = arith.muli %c6_i32_138, %c8_i32_139 : i32
    %397 = tpu.assume_multiple %396, 8 : i32
    %398 = arith.index_cast %397 : i32 to index
    %c0_140 = arith.constant 0 : index
    %399 = vector.load %arg11[%398, %c0_140] : memref<64x128xf32, #tpu.memory_space<vmem>>, vector<8x128xf32>
    %cst_141 = arith.constant dense<0.000000e+00> : vector<8x128xf32>
    %400 = tpu.matmul %393, %240, %cst_141 {dimension_numbers = #tpu.dot_dimension_numbers<[1], [0], [0], [1], [0, 0, 1, 1], [], []>} : vector<8x32xf32>, vector<32x128xf32>, vector<8x128xf32> -> vector<8x128xf32>
    %401 = arith.addf %399, %400 : vector<8x128xf32>
    %402 = vector.broadcast %33 : vector<1x128xf32> to vector<8x128xf32>
    %403 = arith.mulf %401, %402 : vector<8x128xf32>
    %404 = math.tanh %403 : vector<8x128xf32>
    %cst_142 = arith.constant 1.000000e+00 : f32
    %405 = vector.broadcast %cst_142 : f32 to vector<8x128xf32>
    %406 = arith.addf %404, %405 : vector<8x128xf32>
    %cst_143 = arith.constant 5.000000e-01 : f32
    %407 = vector.broadcast %cst_143 : f32 to vector<8x128xf32>
    %408 = arith.mulf %407, %406 : vector<8x128xf32>
    %409 = vector.extract_strided_slice %408 {offsets = [0, 0], sizes = [8, 32], strides = [1, 1]} : vector<8x128xf32> to vector<8x32xf32>
    %410 = vector.extract_strided_slice %408 {offsets = [0, 32], sizes = [8, 32], strides = [1, 1]} : vector<8x128xf32> to vector<8x32xf32>
    %411 = vector.extract_strided_slice %404 {offsets = [0, 64], sizes = [8, 32], strides = [1, 1]} : vector<8x128xf32> to vector<8x32xf32>
    %412 = vector.extract_strided_slice %408 {offsets = [0, 96], sizes = [8, 32], strides = [1, 1]} : vector<8x128xf32> to vector<8x32xf32>
    %413 = arith.mulf %410, %391 : vector<8x32xf32>
    %414 = arith.mulf %409, %411 : vector<8x32xf32>
    %415 = arith.addf %413, %414 : vector<8x32xf32>
    %416 = math.tanh %415 : vector<8x32xf32>
    %417 = arith.mulf %412, %416 : vector<8x32xf32>
    %418 = arith.index_cast %397 : i32 to index
    %c0_144 = arith.constant 0 : index
    %419 = vector.load %arg10[%418, %c0_144] : memref<64x32xf32, #tpu.memory_space<vmem>>, vector<8x32xf32>
    tpu.vector_store %arg10[%418, %c0_144], %417 {strides = array<i32>} : memref<64x32xf32, #tpu.memory_space<vmem>>, vector<8x32xf32>,
    %c7_i32_145 = arith.constant 7 : i32
    %c8_i32_146 = arith.constant 8 : i32
    %420 = arith.muli %c7_i32_145, %c8_i32_146 : i32
    %421 = tpu.assume_multiple %420, 8 : i32
    %422 = arith.index_cast %421 : i32 to index
    %c0_147 = arith.constant 0 : index
    %423 = vector.load %arg11[%422, %c0_147] : memref<64x128xf32, #tpu.memory_space<vmem>>, vector<8x128xf32>
    %cst_148 = arith.constant dense<0.000000e+00> : vector<8x128xf32>
    %424 = tpu.matmul %417, %240, %cst_148 {dimension_numbers = #tpu.dot_dimension_numbers<[1], [0], [0], [1], [0, 0, 1, 1], [], []>} : vector<8x32xf32>, vector<32x128xf32>, vector<8x128xf32> -> vector<8x128xf32>
    %425 = arith.addf %423, %424 : vector<8x128xf32>
    %426 = vector.broadcast %33 : vector<1x128xf32> to vector<8x128xf32>
    %427 = arith.mulf %425, %426 : vector<8x128xf32>
    %428 = math.tanh %427 : vector<8x128xf32>
    %cst_149 = arith.constant 1.000000e+00 : f32
    %429 = vector.broadcast %cst_149 : f32 to vector<8x128xf32>
    %430 = arith.addf %428, %429 : vector<8x128xf32>
    %cst_150 = arith.constant 5.000000e-01 : f32
    %431 = vector.broadcast %cst_150 : f32 to vector<8x128xf32>
    %432 = arith.mulf %431, %430 : vector<8x128xf32>
    %433 = vector.extract_strided_slice %432 {offsets = [0, 0], sizes = [8, 32], strides = [1, 1]} : vector<8x128xf32> to vector<8x32xf32>
    %434 = vector.extract_strided_slice %432 {offsets = [0, 32], sizes = [8, 32], strides = [1, 1]} : vector<8x128xf32> to vector<8x32xf32>
    %435 = vector.extract_strided_slice %428 {offsets = [0, 64], sizes = [8, 32], strides = [1, 1]} : vector<8x128xf32> to vector<8x32xf32>
    %436 = vector.extract_strided_slice %432 {offsets = [0, 96], sizes = [8, 32], strides = [1, 1]} : vector<8x128xf32> to vector<8x32xf32>
    %437 = arith.mulf %434, %415 : vector<8x32xf32>
    %438 = arith.mulf %433, %435 : vector<8x32xf32>
    %439 = arith.addf %437, %438 : vector<8x32xf32>
    %440 = math.tanh %439 : vector<8x32xf32>
    %441 = arith.mulf %436, %440 : vector<8x32xf32>
    %442 = arith.index_cast %421 : i32 to index
    %c0_151 = arith.constant 0 : index
    %443 = vector.load %arg10[%442, %c0_151] : memref<64x32xf32, #tpu.memory_space<vmem>>, vector<8x32xf32>
    tpu.vector_store %arg10[%442, %c0_151], %441 {strides = array<i32>} : memref<64x32xf32, #tpu.memory_space<vmem>>, vector<8x32xf32>,
    %c8_i32_152 = arith.constant 8 : i32
    %c2 = arith.constant 2 : index
    %c0_153 = arith.constant 0 : index
    %c0_154 = arith.constant 0 : index
    %444 = vector.load %arg5[%c2, %c0_153, %c0_154] : memref<3x32x128xf32, #tpu.memory_space<vmem>>, vector<1x32x128xf32>
    %445 = vector.shape_cast %444 : vector<1x32x128xf32> to vector<32x128xf32>
    %c0_155 = arith.constant 0 : index
    %c0_156 = arith.constant 0 : index
    %446 = vector.load %arg10[%c0_155, %c0_156] : memref<64x32xf32, #tpu.memory_space<vmem>>, vector<64x32xf32>
    %c2_157 = arith.constant 2 : index
    %c0_158 = arith.constant 0 : index
    %c0_159 = arith.constant 0 : index
    %447 = vector.load %arg4[%c2_157, %c0_158, %c0_159] : memref<3x32x128xf32, #tpu.memory_space<vmem>>, vector<1x32x128xf32>
    %448 = vector.shape_cast %447 : vector<1x32x128xf32> to vector<32x128xf32>
    %cst_160 = arith.constant dense<0.000000e+00> : vector<64x128xf32>
    %449 = tpu.matmul %446, %448, %cst_160 {dimension_numbers = #tpu.dot_dimension_numbers<[1], [0], [0], [1], [0, 0, 1, 1], [], []>} : vector<64x32xf32>, vector<32x128xf32>, vector<64x128xf32> -> vector<64x128xf32>
    %c2_161 = arith.constant 2 : index
    %c0_162 = arith.constant 0 : index
    %c0_163 = arith.constant 0 : index
    %450 = vector.load %arg6[%c2_161, %c0_162, %c0_163] : memref<3x1x128xf32, #tpu.memory_space<vmem>>, vector<1x1x128xf32>
    %451 = vector.shape_cast %450 : vector<1x1x128xf32> to vector<1x128xf32>
    %452 = vector.broadcast %451 : vector<1x128xf32> to vector<64x128xf32>
    %453 = arith.addf %449, %452 : vector<64x128xf32>
    %c0_164 = arith.constant 0 : index
    %c0_165 = arith.constant 0 : index
    %454 = vector.load %arg11[%c0_164, %c0_165] : memref<64x128xf32, #tpu.memory_space<vmem>>, vector<64x128xf32>
    tpu.vector_store %arg11[%c0_164, %c0_165], %453 {strides = array<i32>} : memref<64x128xf32, #tpu.memory_space<vmem>>, vector<64x128xf32>,
    %cst_166 = arith.constant 0.000000e+00 : f32
    %455 = vector.broadcast %cst_166 : f32 to vector<8x32xf32>
    %cst_167 = arith.constant 0.000000e+00 : f32
    %456 = vector.broadcast %cst_167 : f32 to vector<8x32xf32>
    %c0_i32_168 = arith.constant 0 : i32
    %c8_i32_169 = arith.constant 8 : i32
    %457 = arith.muli %c0_i32_168, %c8_i32_169 : i32
    %458 = tpu.assume_multiple %457, 8 : i32
    %459 = arith.index_cast %458 : i32 to index
    %c0_170 = arith.constant 0 : index
    %460 = vector.load %arg11[%459, %c0_170] : memref<64x128xf32, #tpu.memory_space<vmem>>, vector<8x128xf32>
    %cst_171 = arith.constant dense<0.000000e+00> : vector<8x128xf32>
    %461 = tpu.matmul %455, %445, %cst_171 {dimension_numbers = #tpu.dot_dimension_numbers<[1], [0], [0], [1], [0, 0, 1, 1], [], []>} : vector<8x32xf32>, vector<32x128xf32>, vector<8x128xf32> -> vector<8x128xf32>
    %462 = arith.addf %460, %461 : vector<8x128xf32>
    %463 = vector.broadcast %33 : vector<1x128xf32> to vector<8x128xf32>
    %464 = arith.mulf %462, %463 : vector<8x128xf32>
    %465 = math.tanh %464 : vector<8x128xf32>
    %cst_172 = arith.constant 1.000000e+00 : f32
    %466 = vector.broadcast %cst_172 : f32 to vector<8x128xf32>
    %467 = arith.addf %465, %466 : vector<8x128xf32>
    %cst_173 = arith.constant 5.000000e-01 : f32
    %468 = vector.broadcast %cst_173 : f32 to vector<8x128xf32>
    %469 = arith.mulf %468, %467 : vector<8x128xf32>
    %470 = vector.extract_strided_slice %469 {offsets = [0, 0], sizes = [8, 32], strides = [1, 1]} : vector<8x128xf32> to vector<8x32xf32>
    %471 = vector.extract_strided_slice %469 {offsets = [0, 32], sizes = [8, 32], strides = [1, 1]} : vector<8x128xf32> to vector<8x32xf32>
    %472 = vector.extract_strided_slice %465 {offsets = [0, 64], sizes = [8, 32], strides = [1, 1]} : vector<8x128xf32> to vector<8x32xf32>
    %473 = vector.extract_strided_slice %469 {offsets = [0, 96], sizes = [8, 32], strides = [1, 1]} : vector<8x128xf32> to vector<8x32xf32>
    %474 = arith.mulf %471, %456 : vector<8x32xf32>
    %475 = arith.mulf %470, %472 : vector<8x32xf32>
    %476 = arith.addf %474, %475 : vector<8x32xf32>
    %477 = math.tanh %476 : vector<8x32xf32>
    %478 = arith.mulf %473, %477 : vector<8x32xf32>
    %479 = arith.index_cast %458 : i32 to index
    %c0_174 = arith.constant 0 : index
    %480 = vector.load %arg10[%479, %c0_174] : memref<64x32xf32, #tpu.memory_space<vmem>>, vector<8x32xf32>
    tpu.vector_store %arg10[%479, %c0_174], %478 {strides = array<i32>} : memref<64x32xf32, #tpu.memory_space<vmem>>, vector<8x32xf32>,
    %c1_i32_175 = arith.constant 1 : i32
    %c8_i32_176 = arith.constant 8 : i32
    %481 = arith.muli %c1_i32_175, %c8_i32_176 : i32
    %482 = tpu.assume_multiple %481, 8 : i32
    %483 = arith.index_cast %482 : i32 to index
    %c0_177 = arith.constant 0 : index
    %484 = vector.load %arg11[%483, %c0_177] : memref<64x128xf32, #tpu.memory_space<vmem>>, vector<8x128xf32>
    %cst_178 = arith.constant dense<0.000000e+00> : vector<8x128xf32>
    %485 = tpu.matmul %478, %445, %cst_178 {dimension_numbers = #tpu.dot_dimension_numbers<[1], [0], [0], [1], [0, 0, 1, 1], [], []>} : vector<8x32xf32>, vector<32x128xf32>, vector<8x128xf32> -> vector<8x128xf32>
    %486 = arith.addf %484, %485 : vector<8x128xf32>
    %487 = vector.broadcast %33 : vector<1x128xf32> to vector<8x128xf32>
    %488 = arith.mulf %486, %487 : vector<8x128xf32>
    %489 = math.tanh %488 : vector<8x128xf32>
    %cst_179 = arith.constant 1.000000e+00 : f32
    %490 = vector.broadcast %cst_179 : f32 to vector<8x128xf32>
    %491 = arith.addf %489, %490 : vector<8x128xf32>
    %cst_180 = arith.constant 5.000000e-01 : f32
    %492 = vector.broadcast %cst_180 : f32 to vector<8x128xf32>
    %493 = arith.mulf %492, %491 : vector<8x128xf32>
    %494 = vector.extract_strided_slice %493 {offsets = [0, 0], sizes = [8, 32], strides = [1, 1]} : vector<8x128xf32> to vector<8x32xf32>
    %495 = vector.extract_strided_slice %493 {offsets = [0, 32], sizes = [8, 32], strides = [1, 1]} : vector<8x128xf32> to vector<8x32xf32>
    %496 = vector.extract_strided_slice %489 {offsets = [0, 64], sizes = [8, 32], strides = [1, 1]} : vector<8x128xf32> to vector<8x32xf32>
    %497 = vector.extract_strided_slice %493 {offsets = [0, 96], sizes = [8, 32], strides = [1, 1]} : vector<8x128xf32> to vector<8x32xf32>
    %498 = arith.mulf %495, %476 : vector<8x32xf32>
    %499 = arith.mulf %494, %496 : vector<8x32xf32>
    %500 = arith.addf %498, %499 : vector<8x32xf32>
    %501 = math.tanh %500 : vector<8x32xf32>
    %502 = arith.mulf %497, %501 : vector<8x32xf32>
    %503 = arith.index_cast %482 : i32 to index
    %c0_181 = arith.constant 0 : index
    %504 = vector.load %arg10[%503, %c0_181] : memref<64x32xf32, #tpu.memory_space<vmem>>, vector<8x32xf32>
    tpu.vector_store %arg10[%503, %c0_181], %502 {strides = array<i32>} : memref<64x32xf32, #tpu.memory_space<vmem>>, vector<8x32xf32>,
    %c2_i32_182 = arith.constant 2 : i32
    %c8_i32_183 = arith.constant 8 : i32
    %505 = arith.muli %c2_i32_182, %c8_i32_183 : i32
    %506 = tpu.assume_multiple %505, 8 : i32
    %507 = arith.index_cast %506 : i32 to index
    %c0_184 = arith.constant 0 : index
    %508 = vector.load %arg11[%507, %c0_184] : memref<64x128xf32, #tpu.memory_space<vmem>>, vector<8x128xf32>
    %cst_185 = arith.constant dense<0.000000e+00> : vector<8x128xf32>
    %509 = tpu.matmul %502, %445, %cst_185 {dimension_numbers = #tpu.dot_dimension_numbers<[1], [0], [0], [1], [0, 0, 1, 1], [], []>} : vector<8x32xf32>, vector<32x128xf32>, vector<8x128xf32> -> vector<8x128xf32>
    %510 = arith.addf %508, %509 : vector<8x128xf32>
    %511 = vector.broadcast %33 : vector<1x128xf32> to vector<8x128xf32>
    %512 = arith.mulf %510, %511 : vector<8x128xf32>
    %513 = math.tanh %512 : vector<8x128xf32>
    %cst_186 = arith.constant 1.000000e+00 : f32
    %514 = vector.broadcast %cst_186 : f32 to vector<8x128xf32>
    %515 = arith.addf %513, %514 : vector<8x128xf32>
    %cst_187 = arith.constant 5.000000e-01 : f32
    %516 = vector.broadcast %cst_187 : f32 to vector<8x128xf32>
    %517 = arith.mulf %516, %515 : vector<8x128xf32>
    %518 = vector.extract_strided_slice %517 {offsets = [0, 0], sizes = [8, 32], strides = [1, 1]} : vector<8x128xf32> to vector<8x32xf32>
    %519 = vector.extract_strided_slice %517 {offsets = [0, 32], sizes = [8, 32], strides = [1, 1]} : vector<8x128xf32> to vector<8x32xf32>
    %520 = vector.extract_strided_slice %513 {offsets = [0, 64], sizes = [8, 32], strides = [1, 1]} : vector<8x128xf32> to vector<8x32xf32>
    %521 = vector.extract_strided_slice %517 {offsets = [0, 96], sizes = [8, 32], strides = [1, 1]} : vector<8x128xf32> to vector<8x32xf32>
    %522 = arith.mulf %519, %500 : vector<8x32xf32>
    %523 = arith.mulf %518, %520 : vector<8x32xf32>
    %524 = arith.addf %522, %523 : vector<8x32xf32>
    %525 = math.tanh %524 : vector<8x32xf32>
    %526 = arith.mulf %521, %525 : vector<8x32xf32>
    %527 = arith.index_cast %506 : i32 to index
    %c0_188 = arith.constant 0 : index
    %528 = vector.load %arg10[%527, %c0_188] : memref<64x32xf32, #tpu.memory_space<vmem>>, vector<8x32xf32>
    tpu.vector_store %arg10[%527, %c0_188], %526 {strides = array<i32>} : memref<64x32xf32, #tpu.memory_space<vmem>>, vector<8x32xf32>,
    %c3_i32_189 = arith.constant 3 : i32
    %c8_i32_190 = arith.constant 8 : i32
    %529 = arith.muli %c3_i32_189, %c8_i32_190 : i32
    %530 = tpu.assume_multiple %529, 8 : i32
    %531 = arith.index_cast %530 : i32 to index
    %c0_191 = arith.constant 0 : index
    %532 = vector.load %arg11[%531, %c0_191] : memref<64x128xf32, #tpu.memory_space<vmem>>, vector<8x128xf32>
    %cst_192 = arith.constant dense<0.000000e+00> : vector<8x128xf32>
    %533 = tpu.matmul %526, %445, %cst_192 {dimension_numbers = #tpu.dot_dimension_numbers<[1], [0], [0], [1], [0, 0, 1, 1], [], []>} : vector<8x32xf32>, vector<32x128xf32>, vector<8x128xf32> -> vector<8x128xf32>
    %534 = arith.addf %532, %533 : vector<8x128xf32>
    %535 = vector.broadcast %33 : vector<1x128xf32> to vector<8x128xf32>
    %536 = arith.mulf %534, %535 : vector<8x128xf32>
    %537 = math.tanh %536 : vector<8x128xf32>
    %cst_193 = arith.constant 1.000000e+00 : f32
    %538 = vector.broadcast %cst_193 : f32 to vector<8x128xf32>
    %539 = arith.addf %537, %538 : vector<8x128xf32>
    %cst_194 = arith.constant 5.000000e-01 : f32
    %540 = vector.broadcast %cst_194 : f32 to vector<8x128xf32>
    %541 = arith.mulf %540, %539 : vector<8x128xf32>
    %542 = vector.extract_strided_slice %541 {offsets = [0, 0], sizes = [8, 32], strides = [1, 1]} : vector<8x128xf32> to vector<8x32xf32>
    %543 = vector.extract_strided_slice %541 {offsets = [0, 32], sizes = [8, 32], strides = [1, 1]} : vector<8x128xf32> to vector<8x32xf32>
    %544 = vector.extract_strided_slice %537 {offsets = [0, 64], sizes = [8, 32], strides = [1, 1]} : vector<8x128xf32> to vector<8x32xf32>
    %545 = vector.extract_strided_slice %541 {offsets = [0, 96], sizes = [8, 32], strides = [1, 1]} : vector<8x128xf32> to vector<8x32xf32>
    %546 = arith.mulf %543, %524 : vector<8x32xf32>
    %547 = arith.mulf %542, %544 : vector<8x32xf32>
    %548 = arith.addf %546, %547 : vector<8x32xf32>
    %549 = math.tanh %548 : vector<8x32xf32>
    %550 = arith.mulf %545, %549 : vector<8x32xf32>
    %551 = arith.index_cast %530 : i32 to index
    %c0_195 = arith.constant 0 : index
    %552 = vector.load %arg10[%551, %c0_195] : memref<64x32xf32, #tpu.memory_space<vmem>>, vector<8x32xf32>
    tpu.vector_store %arg10[%551, %c0_195], %550 {strides = array<i32>} : memref<64x32xf32, #tpu.memory_space<vmem>>, vector<8x32xf32>,
    %c4_i32_196 = arith.constant 4 : i32
    %c8_i32_197 = arith.constant 8 : i32
    %553 = arith.muli %c4_i32_196, %c8_i32_197 : i32
    %554 = tpu.assume_multiple %553, 8 : i32
    %555 = arith.index_cast %554 : i32 to index
    %c0_198 = arith.constant 0 : index
    %556 = vector.load %arg11[%555, %c0_198] : memref<64x128xf32, #tpu.memory_space<vmem>>, vector<8x128xf32>
    %cst_199 = arith.constant dense<0.000000e+00> : vector<8x128xf32>
    %557 = tpu.matmul %550, %445, %cst_199 {dimension_numbers = #tpu.dot_dimension_numbers<[1], [0], [0], [1], [0, 0, 1, 1], [], []>} : vector<8x32xf32>, vector<32x128xf32>, vector<8x128xf32> -> vector<8x128xf32>
    %558 = arith.addf %556, %557 : vector<8x128xf32>
    %559 = vector.broadcast %33 : vector<1x128xf32> to vector<8x128xf32>
    %560 = arith.mulf %558, %559 : vector<8x128xf32>
    %561 = math.tanh %560 : vector<8x128xf32>
    %cst_200 = arith.constant 1.000000e+00 : f32
    %562 = vector.broadcast %cst_200 : f32 to vector<8x128xf32>
    %563 = arith.addf %561, %562 : vector<8x128xf32>
    %cst_201 = arith.constant 5.000000e-01 : f32
    %564 = vector.broadcast %cst_201 : f32 to vector<8x128xf32>
    %565 = arith.mulf %564, %563 : vector<8x128xf32>
    %566 = vector.extract_strided_slice %565 {offsets = [0, 0], sizes = [8, 32], strides = [1, 1]} : vector<8x128xf32> to vector<8x32xf32>
    %567 = vector.extract_strided_slice %565 {offsets = [0, 32], sizes = [8, 32], strides = [1, 1]} : vector<8x128xf32> to vector<8x32xf32>
    %568 = vector.extract_strided_slice %561 {offsets = [0, 64], sizes = [8, 32], strides = [1, 1]} : vector<8x128xf32> to vector<8x32xf32>
    %569 = vector.extract_strided_slice %565 {offsets = [0, 96], sizes = [8, 32], strides = [1, 1]} : vector<8x128xf32> to vector<8x32xf32>
    %570 = arith.mulf %567, %548 : vector<8x32xf32>
    %571 = arith.mulf %566, %568 : vector<8x32xf32>
    %572 = arith.addf %570, %571 : vector<8x32xf32>
    %573 = math.tanh %572 : vector<8x32xf32>
    %574 = arith.mulf %569, %573 : vector<8x32xf32>
    %575 = arith.index_cast %554 : i32 to index
    %c0_202 = arith.constant 0 : index
    %576 = vector.load %arg10[%575, %c0_202] : memref<64x32xf32, #tpu.memory_space<vmem>>, vector<8x32xf32>
    tpu.vector_store %arg10[%575, %c0_202], %574 {strides = array<i32>} : memref<64x32xf32, #tpu.memory_space<vmem>>, vector<8x32xf32>,
    %c5_i32_203 = arith.constant 5 : i32
    %c8_i32_204 = arith.constant 8 : i32
    %577 = arith.muli %c5_i32_203, %c8_i32_204 : i32
    %578 = tpu.assume_multiple %577, 8 : i32
    %579 = arith.index_cast %578 : i32 to index
    %c0_205 = arith.constant 0 : index
    %580 = vector.load %arg11[%579, %c0_205] : memref<64x128xf32, #tpu.memory_space<vmem>>, vector<8x128xf32>
    %cst_206 = arith.constant dense<0.000000e+00> : vector<8x128xf32>
    %581 = tpu.matmul %574, %445, %cst_206 {dimension_numbers = #tpu.dot_dimension_numbers<[1], [0], [0], [1], [0, 0, 1, 1], [], []>} : vector<8x32xf32>, vector<32x128xf32>, vector<8x128xf32> -> vector<8x128xf32>
    %582 = arith.addf %580, %581 : vector<8x128xf32>
    %583 = vector.broadcast %33 : vector<1x128xf32> to vector<8x128xf32>
    %584 = arith.mulf %582, %583 : vector<8x128xf32>
    %585 = math.tanh %584 : vector<8x128xf32>
    %cst_207 = arith.constant 1.000000e+00 : f32
    %586 = vector.broadcast %cst_207 : f32 to vector<8x128xf32>
    %587 = arith.addf %585, %586 : vector<8x128xf32>
    %cst_208 = arith.constant 5.000000e-01 : f32
    %588 = vector.broadcast %cst_208 : f32 to vector<8x128xf32>
    %589 = arith.mulf %588, %587 : vector<8x128xf32>
    %590 = vector.extract_strided_slice %589 {offsets = [0, 0], sizes = [8, 32], strides = [1, 1]} : vector<8x128xf32> to vector<8x32xf32>
    %591 = vector.extract_strided_slice %589 {offsets = [0, 32], sizes = [8, 32], strides = [1, 1]} : vector<8x128xf32> to vector<8x32xf32>
    %592 = vector.extract_strided_slice %585 {offsets = [0, 64], sizes = [8, 32], strides = [1, 1]} : vector<8x128xf32> to vector<8x32xf32>
    %593 = vector.extract_strided_slice %589 {offsets = [0, 96], sizes = [8, 32], strides = [1, 1]} : vector<8x128xf32> to vector<8x32xf32>
    %594 = arith.mulf %591, %572 : vector<8x32xf32>
    %595 = arith.mulf %590, %592 : vector<8x32xf32>
    %596 = arith.addf %594, %595 : vector<8x32xf32>
    %597 = math.tanh %596 : vector<8x32xf32>
    %598 = arith.mulf %593, %597 : vector<8x32xf32>
    %599 = arith.index_cast %578 : i32 to index
    %c0_209 = arith.constant 0 : index
    %600 = vector.load %arg10[%599, %c0_209] : memref<64x32xf32, #tpu.memory_space<vmem>>, vector<8x32xf32>
    tpu.vector_store %arg10[%599, %c0_209], %598 {strides = array<i32>} : memref<64x32xf32, #tpu.memory_space<vmem>>, vector<8x32xf32>,
    %c6_i32_210 = arith.constant 6 : i32
    %c8_i32_211 = arith.constant 8 : i32
    %601 = arith.muli %c6_i32_210, %c8_i32_211 : i32
    %602 = tpu.assume_multiple %601, 8 : i32
    %603 = arith.index_cast %602 : i32 to index
    %c0_212 = arith.constant 0 : index
    %604 = vector.load %arg11[%603, %c0_212] : memref<64x128xf32, #tpu.memory_space<vmem>>, vector<8x128xf32>
    %cst_213 = arith.constant dense<0.000000e+00> : vector<8x128xf32>
    %605 = tpu.matmul %598, %445, %cst_213 {dimension_numbers = #tpu.dot_dimension_numbers<[1], [0], [0], [1], [0, 0, 1, 1], [], []>} : vector<8x32xf32>, vector<32x128xf32>, vector<8x128xf32> -> vector<8x128xf32>
    %606 = arith.addf %604, %605 : vector<8x128xf32>
    %607 = vector.broadcast %33 : vector<1x128xf32> to vector<8x128xf32>
    %608 = arith.mulf %606, %607 : vector<8x128xf32>
    %609 = math.tanh %608 : vector<8x128xf32>
    %cst_214 = arith.constant 1.000000e+00 : f32
    %610 = vector.broadcast %cst_214 : f32 to vector<8x128xf32>
    %611 = arith.addf %609, %610 : vector<8x128xf32>
    %cst_215 = arith.constant 5.000000e-01 : f32
    %612 = vector.broadcast %cst_215 : f32 to vector<8x128xf32>
    %613 = arith.mulf %612, %611 : vector<8x128xf32>
    %614 = vector.extract_strided_slice %613 {offsets = [0, 0], sizes = [8, 32], strides = [1, 1]} : vector<8x128xf32> to vector<8x32xf32>
    %615 = vector.extract_strided_slice %613 {offsets = [0, 32], sizes = [8, 32], strides = [1, 1]} : vector<8x128xf32> to vector<8x32xf32>
    %616 = vector.extract_strided_slice %609 {offsets = [0, 64], sizes = [8, 32], strides = [1, 1]} : vector<8x128xf32> to vector<8x32xf32>
    %617 = vector.extract_strided_slice %613 {offsets = [0, 96], sizes = [8, 32], strides = [1, 1]} : vector<8x128xf32> to vector<8x32xf32>
    %618 = arith.mulf %615, %596 : vector<8x32xf32>
    %619 = arith.mulf %614, %616 : vector<8x32xf32>
    %620 = arith.addf %618, %619 : vector<8x32xf32>
    %621 = math.tanh %620 : vector<8x32xf32>
    %622 = arith.mulf %617, %621 : vector<8x32xf32>
    %623 = arith.index_cast %602 : i32 to index
    %c0_216 = arith.constant 0 : index
    %624 = vector.load %arg10[%623, %c0_216] : memref<64x32xf32, #tpu.memory_space<vmem>>, vector<8x32xf32>
    tpu.vector_store %arg10[%623, %c0_216], %622 {strides = array<i32>} : memref<64x32xf32, #tpu.memory_space<vmem>>, vector<8x32xf32>,
    %c7_i32_217 = arith.constant 7 : i32
    %c8_i32_218 = arith.constant 8 : i32
    %625 = arith.muli %c7_i32_217, %c8_i32_218 : i32
    %626 = tpu.assume_multiple %625, 8 : i32
    %627 = arith.index_cast %626 : i32 to index
    %c0_219 = arith.constant 0 : index
    %628 = vector.load %arg11[%627, %c0_219] : memref<64x128xf32, #tpu.memory_space<vmem>>, vector<8x128xf32>
    %cst_220 = arith.constant dense<0.000000e+00> : vector<8x128xf32>
    %629 = tpu.matmul %622, %445, %cst_220 {dimension_numbers = #tpu.dot_dimension_numbers<[1], [0], [0], [1], [0, 0, 1, 1], [], []>} : vector<8x32xf32>, vector<32x128xf32>, vector<8x128xf32> -> vector<8x128xf32>
    %630 = arith.addf %628, %629 : vector<8x128xf32>
    %631 = vector.broadcast %33 : vector<1x128xf32> to vector<8x128xf32>
    %632 = arith.mulf %630, %631 : vector<8x128xf32>
    %633 = math.tanh %632 : vector<8x128xf32>
    %cst_221 = arith.constant 1.000000e+00 : f32
    %634 = vector.broadcast %cst_221 : f32 to vector<8x128xf32>
    %635 = arith.addf %633, %634 : vector<8x128xf32>
    %cst_222 = arith.constant 5.000000e-01 : f32
    %636 = vector.broadcast %cst_222 : f32 to vector<8x128xf32>
    %637 = arith.mulf %636, %635 : vector<8x128xf32>
    %638 = vector.extract_strided_slice %637 {offsets = [0, 0], sizes = [8, 32], strides = [1, 1]} : vector<8x128xf32> to vector<8x32xf32>
    %639 = vector.extract_strided_slice %637 {offsets = [0, 32], sizes = [8, 32], strides = [1, 1]} : vector<8x128xf32> to vector<8x32xf32>
    %640 = vector.extract_strided_slice %633 {offsets = [0, 64], sizes = [8, 32], strides = [1, 1]} : vector<8x128xf32> to vector<8x32xf32>
    %641 = vector.extract_strided_slice %637 {offsets = [0, 96], sizes = [8, 32], strides = [1, 1]} : vector<8x128xf32> to vector<8x32xf32>
    %642 = arith.mulf %639, %620 : vector<8x32xf32>
    %643 = arith.mulf %638, %640 : vector<8x32xf32>
    %644 = arith.addf %642, %643 : vector<8x32xf32>
    %645 = math.tanh %644 : vector<8x32xf32>
    %646 = arith.mulf %641, %645 : vector<8x32xf32>
    %647 = arith.index_cast %626 : i32 to index
    %c0_223 = arith.constant 0 : index
    %648 = vector.load %arg10[%647, %c0_223] : memref<64x32xf32, #tpu.memory_space<vmem>>, vector<8x32xf32>
    tpu.vector_store %arg10[%647, %c0_223], %646 {strides = array<i32>} : memref<64x32xf32, #tpu.memory_space<vmem>>, vector<8x32xf32>,
    %c8_i32_224 = arith.constant 8 : i32
    %c0_225 = arith.constant 0 : index
    %c0_226 = arith.constant 0 : index
    %649 = vector.load %arg10[%c0_225, %c0_226] : memref<64x32xf32, #tpu.memory_space<vmem>>, vector<64x32xf32>
    %c0_227 = arith.constant 0 : index
    %c0_228 = arith.constant 0 : index
    %650 = vector.load %arg7[%c0_227, %c0_228] : memref<32x16xf32, #tpu.memory_space<vmem>>, vector<32x16xf32>
    %cst_229 = arith.constant dense<0.000000e+00> : vector<64x16xf32>
    %651 = tpu.matmul %649, %650, %cst_229 {dimension_numbers = #tpu.dot_dimension_numbers<[1], [0], [0], [1], [0, 0, 1, 1], [], []>} : vector<64x32xf32>, vector<32x16xf32>, vector<64x16xf32> -> vector<64x16xf32>
    %c0_230 = arith.constant 0 : index
    %c0_231 = arith.constant 0 : index
    %652 = vector.load %arg8[%c0_230, %c0_231] : memref<1x16xf32, #tpu.memory_space<vmem>>, vector<1x16xf32>
    %653 = vector.broadcast %652 : vector<1x16xf32> to vector<64x16xf32>
    %654 = arith.addf %651, %653 : vector<64x16xf32>
    %cst_232 = arith.constant 0x7FC00000 : f32
    %655 = vector.shape_cast %10 : vector<64x1xi1> to vector<64x1xi1>
    %656 = vector.broadcast %655 : vector<64x1xi1> to vector<64x16xi1>
    %657 = vector.broadcast %cst_232 : f32 to vector<64x16xf32>
    %658 = arith.select %656, %654, %657 : vector<64x16xi1>, vector<64x16xf32>
    %c0_233 = arith.constant 0 : index
    %c0_234 = arith.constant 0 : index
    %c0_235 = arith.constant 0 : index
    %659 = vector.load %arg9[%c0_233, %c0_234, %c0_235] : memref<1x64x16xf32, #tpu.memory_space<vmem>>, vector<1x64x16xf32>
    %660 = vector.shape_cast %659 : vector<1x64x16xf32> to vector<64x16xf32>
    %661 = vector.shape_cast %658 : vector<64x16xf32> to vector<1x64x16xf32>
    tpu.vector_store %arg9[%c0_233, %c0_234, %c0_235], %661 {strides = array<i32>} : memref<1x64x16xf32, #tpu.memory_space<vmem>>, vector<1x64x16xf32>,
    return
  }
  func.func @transform_0(%arg0: i32) -> (i32, i32, i32) {
    %c0_i32 = arith.constant 0 : i32
    %c0_i32_0 = arith.constant 0 : i32
    %c0_i32_1 = arith.constant 0 : i32
    return %arg0, %c0_i32, %c0_i32_0 : i32, i32, i32
  }
  func.func @transform_1(%arg0: i32) -> (i32, i32) {
    %c0_i32 = arith.constant 0 : i32
    %c0_i32_0 = arith.constant 0 : i32
    %c0_i32_1 = arith.constant 0 : i32
    return %c0_i32, %c0_i32_0 : i32, i32
  }
  func.func @transform_2(%arg0: i32) -> (i32, i32) {
    %c0_i32 = arith.constant 0 : i32
    %c0_i32_0 = arith.constant 0 : i32
    %c0_i32_1 = arith.constant 0 : i32
    return %c0_i32, %c0_i32_0 : i32, i32
  }
  func.func @transform_3(%arg0: i32) -> (i32, i32, i32) {
    %c0_i32 = arith.constant 0 : i32
    %c0_i32_0 = arith.constant 0 : i32
    %c0_i32_1 = arith.constant 0 : i32
    %c0_i32_2 = arith.constant 0 : i32
    return %c0_i32, %c0_i32_0, %c0_i32_1 : i32, i32, i32
  }
  func.func @transform_4(%arg0: i32) -> (i32, i32, i32) {
    %c0_i32 = arith.constant 0 : i32
    %c0_i32_0 = arith.constant 0 : i32
    %c0_i32_1 = arith.constant 0 : i32
    %c0_i32_2 = arith.constant 0 : i32
    return %c0_i32, %c0_i32_0, %c0_i32_1 : i32, i32, i32
  }
  func.func @transform_5(%arg0: i32) -> (i32, i32, i32) {
    %c0_i32 = arith.constant 0 : i32
    %c0_i32_0 = arith.constant 0 : i32
    %c0_i32_1 = arith.constant 0 : i32
    %c0_i32_2 = arith.constant 0 : i32
    return %c0_i32, %c0_i32_0, %c0_i32_1 : i32, i32, i32
  }
  func.func @transform_6(%arg0: i32) -> (i32, i32) {
    %c0_i32 = arith.constant 0 : i32
    %c0_i32_0 = arith.constant 0 : i32
    %c0_i32_1 = arith.constant 0 : i32
    return %c0_i32, %c0_i32_0 : i32, i32
  }
  func.func @transform_7(%arg0: i32) -> (i32, i32) {
    %c0_i32 = arith.constant 0 : i32
    %c0_i32_0 = arith.constant 0 : i32
    %c0_i32_1 = arith.constant 0 : i32
    return %c0_i32, %c0_i32_0 : i32, i32
  }
  func.func @transform_8(%arg0: i32) -> (i32, i32, i32) {
    %c0_i32 = arith.constant 0 : i32
    %c0_i32_0 = arith.constant 0 : i32
    %c0_i32_1 = arith.constant 0 : i32
    return %arg0, %c0_i32, %c0_i32_0 : i32, i32, i32
  }
}

</mosaic_0001>

<llo_original>
// kernel: tpu_custom_call.1
$region0: #{tpu_custom_call.1}
  #allocation0 [shape = 'u32[]', space=smem, size = 0x4, offset = 0x4, fixed_abs, tag = 'smem constant byte address 0x4 - core index']
  #allocation1 [shape = 'u32[144,128]{1,0:T(1,128)}', space=vmem, size = 0x12000, scoped, tag = 'internal scratch']
  #allocation2 [shape = 'f32[64,32]{1,0:T(8,128)}', space=vmem, size = 0x8000, scoped, tag = 'scratch operand']
  #allocation3 [shape = 'f32[64,128]{1,0:T(8,128)}', space=vmem, size = 0x8000, scoped, tag = 'scratch operand']
  %s0 = inlined_call_operand.vmem [shape: f32[1,64,4], index: 0, kind: input, shape index: {}]
  %s1 = inlined_call_operand.vmem [shape: f32[4,32], index: 1, kind: input, shape index: {}]
  %s2 = inlined_call_operand.vmem [shape: f32[1,32], index: 2, kind: input, shape index: {}]
  %s3 = inlined_call_operand.vmem [shape: f32[3,32,128], index: 3, kind: input, shape index: {}]
  %s4 = inlined_call_operand.hbm [shape: f32[3,32,128], index: 4, kind: input, shape index: {}]
  %s5 = inlined_call_operand.vmem [shape: f32[3,1,128], index: 5, kind: input, shape index: {}]
  %s6 = inlined_call_operand.vmem [shape: f32[32,16], index: 6, kind: input, shape index: {}]
  %s7 = inlined_call_operand.vmem [shape: f32[1,16], index: 7, kind: input, shape index: {}]
  %s8 = inlined_call_operand.vmem [shape: f32[1,64,16], index: 8, kind: output, shape index: {}]
  %s9 = sld [smem:[#allocation0]]
  $region46: #{tpu_custom_call.1} parent=0
    _
  %s11 = ssub.s32 1, %s9
  %s12 = scalar_select 0, %s11, %s9
  $region1: #{tpu_custom_call.1} parent=0
    #allocation4 [shape = 'u8[49152]{0}', space=vmem, size = 0xc000, scoped, tag = 'input window, operand 4, single buffered']
    #allocation5 [shape = 's32[1]{0}', space=sflag, size = 0x4, scoped, tag = 'scoped memory for tpu_custom_call.1']
    %13 = vsyncpa [#allocation5], 0
    // Predicated region
    $region2: #{tpu_custom_call.1} parent=1 // pred_check
      _
    $region3: #{tpu_custom_call.1} parent=1 // pred_check_branch
      %15 = sbr.rel (0) target = $region5
    $region4: #{tpu_custom_call.1} parent=1 // pred_region
      _
    $region5: #{tpu_custom_call.1} parent=1 // pred_fallthru
      _
    // Predicated region
    $region6: #{tpu_custom_call.1} parent=1 // pred_check
      _
    $region7: #{tpu_custom_call.1} parent=1 // pred_check_branch
      %17 = sbr.rel (0) target = $region9
    $region8: #{tpu_custom_call.1} parent=1 // pred_region
      _
    $region9: #{tpu_custom_call.1} parent=1 // pred_fallthru
      _
    // Predicated region
    $region10: #{tpu_custom_call.1} parent=1 // pred_check
      _
    $region11: #{tpu_custom_call.1} parent=1 // pred_check_branch
      %19 = sbr.rel (0) target = $region13
    $region12: #{tpu_custom_call.1} parent=1 // pred_region
      _
    $region13: #{tpu_custom_call.1} parent=1 // pred_fallthru
      _
    // Predicated region
    $region14: #{tpu_custom_call.1} parent=1 // pred_check
      _
    $region15: #{tpu_custom_call.1} parent=1 // pred_check_branch
      %21 = sbr.rel (0) target = $region17
    $region16: #{tpu_custom_call.1} parent=1 // pred_region
      _
    $region17: #{tpu_custom_call.1} parent=1 // pred_fallthru
      _
    // Predicated region
    $region18: #{tpu_custom_call.1} parent=1 // pred_check
      _
    $region19: #{tpu_custom_call.1} parent=1 // pred_check_branch
      %23 = sbr.rel (0) target = $region21
    $region20: #{tpu_custom_call.1} parent=1 // pred_region
      %s25 = ssub.s32 1536, 1536
      %26 = vsyncadd [#allocation5], %s25
      %s27 = sshll.u32 [#allocation4], 4
      %s28 = int_to_ptr.vmem [resolvable:$true] %s27
      %33 = dma.hbm_to_vmem [thread:$0]  %s4, 1536, %s28, [#allocation5], 128, 128, 8
    $region21: #{tpu_custom_call.1} parent=1 // pred_fallthru
      _
    // Predicated region
    $region22: #{tpu_custom_call.1} parent=1 // pred_check
      _
    $region23: #{tpu_custom_call.1} parent=1 // pred_check_branch
      %35 = sbr.rel (0) target = $region25
    $region24: #{tpu_custom_call.1} parent=1 // pred_region
      _
    $region25: #{tpu_custom_call.1} parent=1 // pred_fallthru
      _
    // Predicated region
    $region26: #{tpu_custom_call.1} parent=1 // pred_check
      _
    $region27: #{tpu_custom_call.1} parent=1 // pred_check_branch
      %37 = sbr.rel (0) target = $region29
    $region28: #{tpu_custom_call.1} parent=1 // pred_region
      _
    $region29: #{tpu_custom_call.1} parent=1 // pred_fallthru
      _
    // Predicated region
    $region30: #{tpu_custom_call.1} parent=1 // pred_check
      _
    $region31: #{tpu_custom_call.1} parent=1 // pred_check_branch
      %39 = sbr.rel (0) target = $region33
    $region32: #{tpu_custom_call.1} parent=1 // pred_region
      _
    $region33: #{tpu_custom_call.1} parent=1 // pred_fallthru
      _
    // Predicated region
    $region34: #{tpu_custom_call.1} parent=1 // pred_check
      _
    $region35: #{tpu_custom_call.1} parent=1 // pred_check_branch
      %41 = sbr.rel (0) target = $region37
    $region36: #{tpu_custom_call.1} parent=1 // pred_region
      %42 = dma.done [#allocation5], 1536
    $region37: #{tpu_custom_call.1} parent=1 // pred_fallthru
      _
    %v43 = vld [vmem:[%s0] sm:$0xff]
    %v44 = vld [vmem:[%s0 + $0x8] sm:$0xff]
    %v45 = vld [vmem:[%s0 + $0x10] sm:$0xff]
    %v46 = vld [vmem:[%s0 + $0x18] sm:$0xff]
    %v47 = vld [vmem:[%s0 + $0x20] sm:$0xff]
    %v48 = vld [vmem:[%s0 + $0x28] sm:$0xff]
    %v49 = vld [vmem:[%s0 + $0x30] sm:$0xff]
    %v50 = vld [vmem:[%s0 + $0x38] sm:$0xff]
    %vm51 = vcmp.ne.f32.partialorder %v43, %v43
    %vm52 = vcmp.ne.f32.partialorder %v44, %v44
    %vm53 = vcmp.ne.f32.partialorder %v45, %v45
    %vm54 = vcmp.ne.f32.partialorder %v46, %v46
    %vm55 = vcmp.ne.f32.partialorder %v47, %v47
    %vm56 = vcmp.ne.f32.partialorder %v48, %v48
    %vm57 = vcmp.ne.f32.partialorder %v49, %v49
    %vm58 = vcmp.ne.f32.partialorder %v50, %v50
    %v59 = vsel %vm51, 1.0, 0.0
    %v60 = vsel %vm52, 1.0, 0.0
    %v61 = vsel %vm53, 1.0, 0.0
    %v62 = vsel %vm54, 1.0, 0.0
    %v63 = vsel %vm55, 1.0, 0.0
    %v64 = vsel %vm56, 1.0, 0.0
    %v65 = vsel %vm57, 1.0, 0.0
    %v66 = vsel %vm58, 1.0, 0.0
    %vm67 = vcmask 31744
    %v68 = vsel %vm67, %v59, -inf
    %69 = vmax.xlane.f32.xlu0 %v68
    %v70 = vpop.xlane.xlu0 %69
    %v71 = vsel %vm67, %v60, -inf
    %72 = vmax.xlane.f32.xlu0 %v71
    %v73 = vpop.xlane.xlu0 %72
    %v74 = vsel %vm67, %v61, -inf
    %75 = vmax.xlane.f32.xlu0 %v74
    %v76 = vpop.xlane.xlu0 %75
    %v77 = vsel %vm67, %v62, -inf
    %78 = vmax.xlane.f32.xlu0 %v77
    %v79 = vpop.xlane.xlu0 %78
    %v80 = vsel %vm67, %v63, -inf
    %81 = vmax.xlane.f32.xlu0 %v80
    %v82 = vpop.xlane.xlu0 %81
    %v83 = vsel %vm67, %v64, -inf
    %84 = vmax.xlane.f32.xlu0 %v83
    %v85 = vpop.xlane.xlu0 %84
    %v86 = vsel %vm67, %v65, -inf
    %87 = vmax.xlane.f32.xlu0 %v86
    %v88 = vpop.xlane.xlu0 %87
    %v89 = vsel %vm67, %v66, -inf
    %90 = vmax.xlane.f32.xlu0 %v89
    %v91 = vpop.xlane.xlu0 %90
    %vm92 = vcmp.gt.f32.partialorder %v70, 0.0
    %vm93 = vcmp.gt.f32.partialorder %v73, 0.0
    %vm94 = vcmp.gt.f32.partialorder %v76, 0.0
    %vm95 = vcmp.gt.f32.partialorder %v79, 0.0
    %vm96 = vcmp.gt.f32.partialorder %v82, 0.0
    %vm97 = vcmp.gt.f32.partialorder %v85, 0.0
    %vm98 = vcmp.gt.f32.partialorder %v88, 0.0
    %vm99 = vcmp.gt.f32.partialorder %v91, 0.0
    %vm100 = vmxor %vm92, 1
    %vm101 = vmxor %vm93, 1
    %vm102 = vmxor %vm94, 1
    %vm103 = vmxor %vm95, 1
    %vm104 = vmxor %vm96, 1
    %vm105 = vmxor %vm97, 1
    %vm106 = vmxor %vm98, 1
    %vm107 = vmxor %vm99, 1
    %v108 = vsel %vm100, 1, 0
    %v109 = vsel %vm101, 1, 0
    %v110 = vsel %vm102, 1, 0
    %v111 = vsel %vm103, 1, 0
    %v112 = vsel %vm104, 1, 0
    %v113 = vsel %vm105, 1, 0
    %v114 = vsel %vm106, 1, 0
    %v115 = vsel %vm107, 1, 0
    %vm116 = vcmp.eq.s32.totalorder %v108, 1
    %vm117 = vcmp.eq.s32.totalorder %v109, 1
    %vm118 = vcmp.eq.s32.totalorder %v110, 1
    %vm119 = vcmp.eq.s32.totalorder %v111, 1
    %vm120 = vcmp.eq.s32.totalorder %v112, 1
    %vm121 = vcmp.eq.s32.totalorder %v113, 1
    %vm122 = vcmp.eq.s32.totalorder %v114, 1
    %vm123 = vcmp.eq.s32.totalorder %v115, 1
    %v124 = vsel %vm116, %v43, 0.0
    %v125 = vsel %vm117, %v44, 0.0
    %v126 = vsel %vm118, %v45, 0.0
    %v127 = vsel %vm119, %v46, 0.0
    %v128 = vsel %vm120, %v47, 0.0
    %v129 = vsel %vm121, %v48, 0.0
    %v130 = vsel %vm122, %v49, 0.0
    %v131 = vsel %vm123, %v50, 0.0
    %v132 = vld [vmem:[%s1] sm:$0xf]
    %v133 = vld [vmem:[%s2] sm:$0x1]
    %v135 = vlaneseq
    %v136 = vshrl.u32 %v135, 7
    %v137 = vsub.s32 0, %v136
    %v138 = vrot.slane %v133, %v137
    %v141 = vsel %vm67, %v124, 0
    %v144 = vsel %vm67, %v125, 0
    %v147 = vsel %vm67, %v126, 0
    %v150 = vsel %vm67, %v127, 0
    %v153 = vsel %vm67, %v128, 0
    %v156 = vsel %vm67, %v129, 0
    %v159 = vsel %vm67, %v130, 0
    %v162 = vsel %vm67, %v131, 0
    %vm164 = vcmask 1043456
    %v166 = vsel %vm164, %v132, 0
    %168 = vmatprep.subr.mxu0 0.0
    %169 = vmatpush1.msra.mxu0 %v166
    %170 = vmatprep.subr.mxu0 0.0
    %171 = vmatpush1.msra.mxu0 0.0
    %172 = vmatprep.subr.mxu0 0.0
    %173 = vmatpush1.msra.mxu0 0.0
    %174 = vmatprep.subr.mxu0 0.0
    %175 = vmatpush1.msra.mxu0 0.0
    %176 = vmatprep.subr.mxu0 0.0
    %177 = vmatpush1.msra.mxu0 0.0
    %178 = vmatprep.subr.mxu0 0.0
    %179 = vmatpush1.msra.mxu0 0.0
    %180 = vmatprep.subr.mxu0 0.0
    %181 = vmatpush1.msra.mxu0 0.0
    %182 = vmatprep.subr.mxu0 0.0
    %183 = vmatpush1.msra.mxu0 0.0
    %184 = vmatprep.subr.mxu0 0.0
    %185 = vmatpush1.msra.mxu0 0.0
    %186 = vmatprep.subr.mxu0 0.0
    %187 = vmatpush1.msra.mxu0 0.0
    %188 = vmatprep.subr.mxu0 0.0
    %189 = vmatpush1.msra.mxu0 0.0
    %190 = vmatprep.subr.mxu0 0.0
    %191 = vmatpush1.msra.mxu0 0.0
    %192 = vmatprep.subr.mxu0 0.0
    %193 = vmatpush1.msra.mxu0 0.0
    %194 = vmatprep.subr.mxu0 0.0
    %195 = vmatpush1.msra.mxu0 0.0
    %196 = vmatprep.subr.mxu0 0.0
    %197 = vmatpush1.msra.mxu0 0.0
    %198 = vmatprep.subr.mxu0 0.0
    %199 = vmatpush1.msra.mxu0 0.0
    %200 = vmatprep.subr.mxu0 0.0
    %201 = vmatpush1.msra.mxu0 0.0
    %202 = vmatprep.subr.mxu0 0.0
    %203 = vmatpush1.msra.mxu0 0.0
    %204 = vmatprep.subr.mxu0 0.0
    %205 = vmatpush1.msra.mxu0 0.0
    %206 = vmatprep.subr.mxu0 0.0
    %207 = vmatpush1.msra.mxu0 0.0
    %208 = vmatprep.subr.mxu0 0.0
    %209 = vmatpush1.msra.mxu0 0.0
    %210 = vmatprep.subr.mxu0 0.0
    %211 = vmatpush1.msra.mxu0 0.0
    %212 = vmatprep.subr.mxu0 0.0
    %213 = vmatpush1.msra.mxu0 0.0
    %214 = vmatprep.subr.mxu0 0.0
    %215 = vmatpush1.msra.mxu0 0.0
    %216 = vmatprep.subr.mxu0 0.0
    %217 = vmatpush1.msra.mxu0 0.0
    %218 = vmatprep.subr.mxu0 0.0
    %219 = vmatpush1.msra.mxu0 0.0
    %220 = vmatprep.subr.mxu0 0.0
    %221 = vmatpush1.msra.mxu0 0.0
    %222 = vmatprep.subr.mxu0 0.0
    %223 = vmatpush1.msra.mxu0 0.0
    %224 = vmatprep.subr.mxu0 0.0
    %225 = vmatpush1.msra.mxu0 0.0
    %226 = vmatprep.subr.mxu0 0.0
    %227 = vmatpush1.msra.mxu0 0.0
    %228 = vmatprep.subr.mxu0 0.0
    %229 = vmatpush1.msra.mxu0 0.0
    %230 = vmatprep.subr.mxu0 0.0
    %231 = vmatpush1.msra.mxu0 0.0
    %232 = vmatprep.mubr.f32.mxu0 0.0
    %233 = vmatmul.mubr.f32.gmra.mrb[0].mxu0 %v141
    %v234 = vpop.f32.mrb[0].mxu0
    %v235 = vadd.f32 %v138, %v234
    %v236 = vpop.f32.mrb[0].mxu0
    %237 = vmatprep.mubr.f32.mxu0 0.0
    %238 = vmatmul.mubr.f32.gmra.mrb[0].mxu0 %v144
    %v239 = vpop.f32.mrb[0].mxu0
    %v240 = vadd.f32 %v138, %v239
    %v241 = vpop.f32.mrb[0].mxu0
    %242 = vmatprep.mubr.f32.mxu0 0.0
    %243 = vmatmul.mubr.f32.gmra.mrb[0].mxu0 %v147
    %v244 = vpop.f32.mrb[0].mxu0
    %v245 = vadd.f32 %v138, %v244
    %v246 = vpop.f32.mrb[0].mxu0
    %247 = vmatprep.mubr.f32.mxu0 0.0
    %248 = vmatmul.mubr.f32.gmra.mrb[0].mxu0 %v150
    %v249 = vpop.f32.mrb[0].mxu0
    %v250 = vadd.f32 %v138, %v249
    %v251 = vpop.f32.mrb[0].mxu0
    %252 = vmatprep.mubr.f32.mxu0 0.0
    %253 = vmatmul.mubr.f32.gmra.mrb[0].mxu0 %v153
    %v254 = vpop.f32.mrb[0].mxu0
    %v255 = vadd.f32 %v138, %v254
    %v256 = vpop.f32.mrb[0].mxu0
    %257 = vmatprep.mubr.f32.mxu0 0.0
    %258 = vmatmul.mubr.f32.gmra.mrb[0].mxu0 %v156
    %v259 = vpop.f32.mrb[0].mxu0
    %v260 = vadd.f32 %v138, %v259
    %v261 = vpop.f32.mrb[0].mxu0
    %262 = vmatprep.mubr.f32.mxu0 0.0
    %263 = vmatmul.mubr.f32.gmra.mrb[0].mxu0 %v159
    %v264 = vpop.f32.mrb[0].mxu0
    %v265 = vadd.f32 %v138, %v264
    %v266 = vpop.f32.mrb[0].mxu0
    %267 = vmatprep.mubr.f32.mxu0 0.0
    %268 = vmatmul.mubr.f32.gmra.mrb[0].mxu0 %v162
    %v269 = vpop.f32.mrb[0].mxu0
    %v270 = vadd.f32 %v138, %v269
    %v271 = vpop.f32.mrb[0].mxu0
    %272 = vdwg.mxu0
    %v273 = vsel %vm116, %v235, 0.0
    %v274 = vsel %vm117, %v240, 0.0
    %v275 = vsel %vm118, %v245, 0.0
    %v276 = vsel %vm119, %v250, 0.0
    %v277 = vsel %vm120, %v255, 0.0
    %v278 = vsel %vm121, %v260, 0.0
    %v279 = vsel %vm122, %v265, 0.0
    %v280 = vsel %vm123, %v270, 0.0
    %vm281 = vcmask 261120
    %282 = vst.msk [vmem:[#allocation2] sm:$0xff] %vm281, %v273
    %283 = vst.msk [vmem:[#allocation2 + $0x8] sm:$0xff] %vm281, %v274
    %284 = vst.msk [vmem:[#allocation2 + $0x10] sm:$0xff] %vm281, %v275
    %285 = vst.msk [vmem:[#allocation2 + $0x18] sm:$0xff] %vm281, %v276
    %286 = vst.msk [vmem:[#allocation2 + $0x20] sm:$0xff] %vm281, %v277
    %287 = vst.msk [vmem:[#allocation2 + $0x28] sm:$0xff] %vm281, %v278
    %288 = vst.msk [vmem:[#allocation2 + $0x30] sm:$0xff] %vm281, %v279
    %289 = vst.msk [vmem:[#allocation2 + $0x38] sm:$0xff] %vm281, %v280
    %v290 = vlaneseq
    %v291 = vand.u32 %v290, 127
    %vm292 = vcmp.ge.s32.totalorder %v291, 64
    %vm293 = vcmp.lt.s32.totalorder %v291, 96
    %vm294 = vmand %vm292, %vm293
    %v295 = vsel %vm294, 1.0, 0.5
    %v296 = vld [vmem:[#allocation4] sm:$0xff]
    %v297 = vld [vmem:[#allocation4 + $0x8] sm:$0xff]
    %v298 = vld [vmem:[#allocation4 + $0x10] sm:$0xff]
    %v299 = vld [vmem:[#allocation4 + $0x18] sm:$0xff]
    %v300 = vld [vmem:[#allocation2] sm:$0xff]
    %v301 = vld [vmem:[#allocation2 + $0x8] sm:$0xff]
    %v302 = vld [vmem:[#allocation2 + $0x10] sm:$0xff]
    %v303 = vld [vmem:[#allocation2 + $0x18] sm:$0xff]
    %v304 = vld [vmem:[#allocation2 + $0x20] sm:$0xff]
    %v305 = vld [vmem:[#allocation2 + $0x28] sm:$0xff]
    %v306 = vld [vmem:[#allocation2 + $0x30] sm:$0xff]
    %v307 = vld [vmem:[#allocation2 + $0x38] sm:$0xff]
    %v308 = vld [vmem:[%s3] sm:$0xff]
    %v309 = vld [vmem:[%s3 + $0x8] sm:$0xff]
    %v310 = vld [vmem:[%s3 + $0x10] sm:$0xff]
    %v311 = vld [vmem:[%s3 + $0x18] sm:$0xff]
    %v312 = vld [vmem:[%s5] sm:$0x1]
    %v314 = vlaneseq
    %v315 = vshrl.u32 %v314, 7
    %v316 = vsub.s32 0, %v315
    %v317 = vrot.slane %v312, %v316
    %v320 = vsel %vm281, %v300, 0
    %v323 = vsel %vm281, %v301, 0
    %v326 = vsel %vm281, %v302, 0
    %v329 = vsel %vm281, %v303, 0
    %v332 = vsel %vm281, %v304, 0
    %v335 = vsel %vm281, %v305, 0
    %v338 = vsel %vm281, %v306, 0
    %v341 = vsel %vm281, %v307, 0
    %343 = vmatprep.subr.mxu0 0.0
    %344 = vmatpush1.msra.mxu0 %v308
    %345 = vmatprep.subr.mxu0 0.0
    %346 = vmatpush1.msra.mxu0 %v309
    %347 = vmatprep.subr.mxu0 0.0
    %348 = vmatpush1.msra.mxu0 %v310
    %349 = vmatprep.subr.mxu0 0.0
    %350 = vmatpush1.msra.mxu0 %v311
    %351 = vmatprep.subr.mxu0 0.0
    %352 = vmatpush1.msra.mxu0 0.0
    %353 = vmatprep.subr.mxu0 0.0
    %354 = vmatpush1.msra.mxu0 0.0
    %355 = vmatprep.subr.mxu0 0.0
    %356 = vmatpush1.msra.mxu0 0.0
    %357 = vmatprep.subr.mxu0 0.0
    %358 = vmatpush1.msra.mxu0 0.0
    %359 = vmatprep.subr.mxu0 0.0
    %360 = vmatpush1.msra.mxu0 0.0
    %361 = vmatprep.subr.mxu0 0.0
    %362 = vmatpush1.msra.mxu0 0.0
    %363 = vmatprep.subr.mxu0 0.0
    %364 = vmatpush1.msra.mxu0 0.0
    %365 = vmatprep.subr.mxu0 0.0
    %366 = vmatpush1.msra.mxu0 0.0
    %367 = vmatprep.subr.mxu0 0.0
    %368 = vmatpush1.msra.mxu0 0.0
    %369 = vmatprep.subr.mxu0 0.0
    %370 = vmatpush1.msra.mxu0 0.0
    %371 = vmatprep.subr.mxu0 0.0
    %372 = vmatpush1.msra.mxu0 0.0
    %373 = vmatprep.subr.mxu0 0.0
    %374 = vmatpush1.msra.mxu0 0.0
    %375 = vmatprep.subr.mxu0 0.0
    %376 = vmatpush1.msra.mxu0 0.0
    %377 = vmatprep.subr.mxu0 0.0
    %378 = vmatpush1.msra.mxu0 0.0
    %379 = vmatprep.subr.mxu0 0.0
    %380 = vmatpush1.msra.mxu0 0.0
    %381 = vmatprep.subr.mxu0 0.0
    %382 = vmatpush1.msra.mxu0 0.0
    %383 = vmatprep.subr.mxu0 0.0
    %384 = vmatpush1.msra.mxu0 0.0
    %385 = vmatprep.subr.mxu0 0.0
    %386 = vmatpush1.msra.mxu0 0.0
    %387 = vmatprep.subr.mxu0 0.0
    %388 = vmatpush1.msra.mxu0 0.0
    %389 = vmatprep.subr.mxu0 0.0
    %390 = vmatpush1.msra.mxu0 0.0
    %391 = vmatprep.subr.mxu0 0.0
    %392 = vmatpush1.msra.mxu0 0.0
    %393 = vmatprep.subr.mxu0 0.0
    %394 = vmatpush1.msra.mxu0 0.0
    %395 = vmatprep.subr.mxu0 0.0
    %396 = vmatpush1.msra.mxu0 0.0
    %397 = vmatprep.subr.mxu0 0.0
    %398 = vmatpush1.msra.mxu0 0.0
    %399 = vmatprep.subr.mxu0 0.0
    %400 = vmatpush1.msra.mxu0 0.0
    %401 = vmatprep.subr.mxu0 0.0
    %402 = vmatpush1.msra.mxu0 0.0
    %403 = vmatprep.subr.mxu0 0.0
    %404 = vmatpush1.msra.mxu0 0.0
    %405 = vmatprep.subr.mxu0 0.0
    %406 = vmatpush1.msra.mxu0 0.0
    %407 = vmatprep.mubr.f32.mxu0 0.0
    %408 = vmatmul.mubr.f32.gmra.mrb[0].mxu0 %v320
    %v409 = vpop.f32.mrb[0].mxu0
    %v410 = vadd.f32 %v317, %v409
    %v411 = vpop.f32.mrb[0].mxu0
    %412 = vmatprep.mubr.f32.mxu0 0.0
    %413 = vmatmul.mubr.f32.gmra.mrb[0].mxu0 %v323
    %v414 = vpop.f32.mrb[0].mxu0
    %v415 = vadd.f32 %v317, %v414
    %v416 = vpop.f32.mrb[0].mxu0
    %417 = vmatprep.mubr.f32.mxu0 0.0
    %418 = vmatmul.mubr.f32.gmra.mrb[0].mxu0 %v326
    %v419 = vpop.f32.mrb[0].mxu0
    %v420 = vadd.f32 %v317, %v419
    %v421 = vpop.f32.mrb[0].mxu0
    %422 = vmatprep.mubr.f32.mxu0 0.0
    %423 = vmatmul.mubr.f32.gmra.mrb[0].mxu0 %v329
    %v424 = vpop.f32.mrb[0].mxu0
    %v425 = vadd.f32 %v317, %v424
    %v426 = vpop.f32.mrb[0].mxu0
    %427 = vmatprep.mubr.f32.mxu0 0.0
    %428 = vmatmul.mubr.f32.gmra.mrb[0].mxu0 %v332
    %v429 = vpop.f32.mrb[0].mxu0
    %v430 = vadd.f32 %v317, %v429
    %v431 = vpop.f32.mrb[0].mxu0
    %432 = vmatprep.mubr.f32.mxu0 0.0
    %433 = vmatmul.mubr.f32.gmra.mrb[0].mxu0 %v335
    %v434 = vpop.f32.mrb[0].mxu0
    %v435 = vadd.f32 %v317, %v434
    %v436 = vpop.f32.mrb[0].mxu0
    %437 = vmatprep.mubr.f32.mxu0 0.0
    %438 = vmatmul.mubr.f32.gmra.mrb[0].mxu0 %v338
    %v439 = vpop.f32.mrb[0].mxu0
    %v440 = vadd.f32 %v317, %v439
    %v441 = vpop.f32.mrb[0].mxu0
    %442 = vmatprep.mubr.f32.mxu0 0.0
    %443 = vmatmul.mubr.f32.gmra.mrb[0].mxu0 %v341
    %v444 = vpop.f32.mrb[0].mxu0
    %v445 = vadd.f32 %v317, %v444
    %v446 = vpop.f32.mrb[0].mxu0
    %447 = vdwg.mxu0
    %448 = vst [vmem:[#allocation3] sm:$0xff] %v410
    %449 = vst [vmem:[#allocation3 + $0x8] sm:$0xff] %v415
    %450 = vst [vmem:[#allocation3 + $0x10] sm:$0xff] %v420
    %451 = vst [vmem:[#allocation3 + $0x18] sm:$0xff] %v425
    %452 = vst [vmem:[#allocation3 + $0x20] sm:$0xff] %v430
    %453 = vst [vmem:[#allocation3 + $0x28] sm:$0xff] %v435
    %454 = vst [vmem:[#allocation3 + $0x30] sm:$0xff] %v440
    %455 = vst [vmem:[#allocation3 + $0x38] sm:$0xff] %v445
    %v456 = vld [vmem:[#allocation3] sm:$0xff]
    %v458 = vsel %vm281, 0.0, 0
    %460 = vmatprep.subr.mxu0 0.0
    %461 = vmatpush1.msra.mxu0 %v296
    %462 = vmatprep.subr.mxu0 0.0
    %463 = vmatpush1.msra.mxu0 %v297
    %464 = vmatprep.subr.mxu0 0.0
    %465 = vmatpush1.msra.mxu0 %v298
    %466 = vmatprep.subr.mxu0 0.0
    %467 = vmatpush1.msra.mxu0 %v299
    %468 = vmatprep.subr.mxu0 0.0
    %469 = vmatpush1.msra.mxu0 0.0
    %470 = vmatprep.subr.mxu0 0.0
    %471 = vmatpush1.msra.mxu0 0.0
    %472 = vmatprep.subr.mxu0 0.0
    %473 = vmatpush1.msra.mxu0 0.0
    %474 = vmatprep.subr.mxu0 0.0
    %475 = vmatpush1.msra.mxu0 0.0
    %476 = vmatprep.subr.mxu0 0.0
    %477 = vmatpush1.msra.mxu0 0.0
    %478 = vmatprep.subr.mxu0 0.0
    %479 = vmatpush1.msra.mxu0 0.0
    %480 = vmatprep.subr.mxu0 0.0
    %481 = vmatpush1.msra.mxu0 0.0
    %482 = vmatprep.subr.mxu0 0.0
    %483 = vmatpush1.msra.mxu0 0.0
    %484 = vmatprep.subr.mxu0 0.0
    %485 = vmatpush1.msra.mxu0 0.0
    %486 = vmatprep.subr.mxu0 0.0
    %487 = vmatpush1.msra.mxu0 0.0
    %488 = vmatprep.subr.mxu0 0.0
    %489 = vmatpush1.msra.mxu0 0.0
    %490 = vmatprep.subr.mxu0 0.0
    %491 = vmatpush1.msra.mxu0 0.0
    %492 = vmatprep.subr.mxu0 0.0
    %493 = vmatpush1.msra.mxu0 0.0
    %494 = vmatprep.subr.mxu0 0.0
    %495 = vmatpush1.msra.mxu0 0.0
    %496 = vmatprep.subr.mxu0 0.0
    %497 = vmatpush1.msra.mxu0 0.0
    %498 = vmatprep.subr.mxu0 0.0
    %499 = vmatpush1.msra.mxu0 0.0
    %500 = vmatprep.subr.mxu0 0.0
    %501 = vmatpush1.msra.mxu0 0.0
    %502 = vmatprep.subr.mxu0 0.0
    %503 = vmatpush1.msra.mxu0 0.0
    %504 = vmatprep.subr.mxu0 0.0
    %505 = vmatpush1.msra.mxu0 0.0
    %506 = vmatprep.subr.mxu0 0.0
    %507 = vmatpush1.msra.mxu0 0.0
    %508 = vmatprep.subr.mxu0 0.0
    %509 = vmatpush1.msra.mxu0 0.0
    %510 = vmatprep.subr.mxu0 0.0
    %511 = vmatpush1.msra.mxu0 0.0
    %512 = vmatprep.subr.mxu0 0.0
    %513 = vmatpush1.msra.mxu0 0.0
    %514 = vmatprep.subr.mxu0 0.0
    %515 = vmatpush1.msra.mxu0 0.0
    %516 = vmatprep.subr.mxu0 0.0
    %517 = vmatpush1.msra.mxu0 0.0
    %518 = vmatprep.subr.mxu0 0.0
    %519 = vmatpush1.msra.mxu0 0.0
    %520 = vmatprep.subr.mxu0 0.0
    %521 = vmatpush1.msra.mxu0 0.0
    %522 = vmatprep.subr.mxu0 0.0
    %523 = vmatpush1.msra.mxu0 0.0
    %524 = vmatprep.mubr.f32.mxu0 0.0
    %525 = vmatmul.mubr.f32.gmra.mrb[0].mxu0 %v458
    %v526 = vpop.f32.mrb[0].mxu0
    %v527 = vadd.f32 0.0, %v526
    %v528 = vpop.f32.mrb[0].mxu0
    %529 = vdwg.mxu0
    %v530 = vadd.f32 %v456, %v527
    %v531 = vmul.f32 %v530, %v295
    %v532 = vtanh.pop %v531
    %v533 = vadd.f32 %v532, 1.0
    %v534 = vmul.f32 %v533, 0.5
    %v535 = vmul.f32 %v534, 0.0
    %537 = vrot.lane.b32.xlu0 %v532, 64
    %v538 = vpop.permute.xlu0 %537
    %v540 = vmul.f32 %v534, %v538
    %542 = vrot.lane.b32.xlu0 %v540, 32
    %v543 = vpop.permute.xlu0 %542
    %v545 = vadd.f32 %v535, %v543
    %v546 = vtanh.pop %v545
    %548 = vrot.lane.b32.xlu0 %v546, 64
    %v549 = vpop.permute.xlu0 %548
    %v551 = vmul.f32 %v534, %v549
    %553 = vrot.lane.b32.xlu0 %v551, 32
    %v554 = vpop.permute.xlu0 %553
    %556 = vst.msk [vmem:[#allocation2] sm:$0xff] %vm281, %v554
    %s557 = scalar_lea.vmem [#allocation3], 8
    %v558 = vld [vmem:[%s557] sm:$0xff]
    %v559 = vsel %vm281, %v554, 0
    %561 = vmatprep.subr.mxu0 0.0
    %562 = vmatpush1.msra.mxu0 %v296
    %563 = vmatprep.subr.mxu0 0.0
    %564 = vmatpush1.msra.mxu0 %v297
    %565 = vmatprep.subr.mxu0 0.0
    %566 = vmatpush1.msra.mxu0 %v298
    %567 = vmatprep.subr.mxu0 0.0
    %568 = vmatpush1.msra.mxu0 %v299
    %569 = vmatprep.subr.mxu0 0.0
    %570 = vmatpush1.msra.mxu0 0.0
    %571 = vmatprep.subr.mxu0 0.0
    %572 = vmatpush1.msra.mxu0 0.0
    %573 = vmatprep.subr.mxu0 0.0
    %574 = vmatpush1.msra.mxu0 0.0
    %575 = vmatprep.subr.mxu0 0.0
    %576 = vmatpush1.msra.mxu0 0.0
    %577 = vmatprep.subr.mxu0 0.0
    %578 = vmatpush1.msra.mxu0 0.0
    %579 = vmatprep.subr.mxu0 0.0
    %580 = vmatpush1.msra.mxu0 0.0
    %581 = vmatprep.subr.mxu0 0.0
    %582 = vmatpush1.msra.mxu0 0.0
    %583 = vmatprep.subr.mxu0 0.0
    %584 = vmatpush1.msra.mxu0 0.0
    %585 = vmatprep.subr.mxu0 0.0
    %586 = vmatpush1.msra.mxu0 0.0
    %587 = vmatprep.subr.mxu0 0.0
    %588 = vmatpush1.msra.mxu0 0.0
    %589 = vmatprep.subr.mxu0 0.0
    %590 = vmatpush1.msra.mxu0 0.0
    %591 = vmatprep.subr.mxu0 0.0
    %592 = vmatpush1.msra.mxu0 0.0
    %593 = vmatprep.subr.mxu0 0.0
    %594 = vmatpush1.msra.mxu0 0.0
    %595 = vmatprep.subr.mxu0 0.0
    %596 = vmatpush1.msra.mxu0 0.0
    %597 = vmatprep.subr.mxu0 0.0
    %598 = vmatpush1.msra.mxu0 0.0
    %599 = vmatprep.subr.mxu0 0.0
    %600 = vmatpush1.msra.mxu0 0.0
    %601 = vmatprep.subr.mxu0 0.0
    %602 = vmatpush1.msra.mxu0 0.0
    %603 = vmatprep.subr.mxu0 0.0
    %604 = vmatpush1.msra.mxu0 0.0
    %605 = vmatprep.subr.mxu0 0.0
    %606 = vmatpush1.msra.mxu0 0.0
    %607 = vmatprep.subr.mxu0 0.0
    %608 = vmatpush1.msra.mxu0 0.0
    %609 = vmatprep.subr.mxu0 0.0
    %610 = vmatpush1.msra.mxu0 0.0
    %611 = vmatprep.subr.mxu0 0.0
    %612 = vmatpush1.msra.mxu0 0.0
    %613 = vmatprep.subr.mxu0 0.0
    %614 = vmatpush1.msra.mxu0 0.0
    %615 = vmatprep.subr.mxu0 0.0
    %616 = vmatpush1.msra.mxu0 0.0
    %617 = vmatprep.subr.mxu0 0.0
    %618 = vmatpush1.msra.mxu0 0.0
    %619 = vmatprep.subr.mxu0 0.0
    %620 = vmatpush1.msra.mxu0 0.0
    %621 = vmatprep.subr.mxu0 0.0
    %622 = vmatpush1.msra.mxu0 0.0
    %623 = vmatprep.subr.mxu0 0.0
    %624 = vmatpush1.msra.mxu0 0.0
    %625 = vmatprep.mubr.f32.mxu0 0.0
    %626 = vmatmul.mubr.f32.gmra.mrb[0].mxu0 %v559
    %v627 = vpop.f32.mrb[0].mxu0
    %v628 = vadd.f32 0.0, %v627
    %v629 = vpop.f32.mrb[0].mxu0
    %630 = vdwg.mxu0
    %v631 = vadd.f32 %v558, %v628
    %v632 = vmul.f32 %v631, %v295
    %v633 = vtanh.pop %v632
    %v634 = vadd.f32 %v633, 1.0
    %v635 = vmul.f32 %v634, 0.5
    %v636 = vmul.f32 %v635, %v545
    %638 = vrot.lane.b32.xlu0 %v633, 64
    %v639 = vpop.permute.xlu0 %638
    %v641 = vmul.f32 %v635, %v639
    %643 = vrot.lane.b32.xlu0 %v641, 32
    %v644 = vpop.permute.xlu0 %643
    %v646 = vadd.f32 %v636, %v644
    %v647 = vtanh.pop %v646
    %649 = vrot.lane.b32.xlu0 %v647, 64
    %v650 = vpop.permute.xlu0 %649
    %v652 = vmul.f32 %v635, %v650
    %654 = vrot.lane.b32.xlu0 %v652, 32
    %v655 = vpop.permute.xlu0 %654
    %s657 = scalar_lea.vmem [#allocation2], 8
    %658 = vst.msk [vmem:[%s657] sm:$0xff] %vm281, %v655
    %s659 = scalar_lea.vmem [#allocation3], 16
    %v660 = vld [vmem:[%s659] sm:$0xff]
    %v661 = vsel %vm281, %v655, 0
    %663 = vmatprep.subr.mxu0 0.0
    %664 = vmatpush1.msra.mxu0 %v296
    %665 = vmatprep.subr.mxu0 0.0
    %666 = vmatpush1.msra.mxu0 %v297
    %667 = vmatprep.subr.mxu0 0.0
    %668 = vmatpush1.msra.mxu0 %v298
    %669 = vmatprep.subr.mxu0 0.0
    %670 = vmatpush1.msra.mxu0 %v299
    %671 = vmatprep.subr.mxu0 0.0
    %672 = vmatpush1.msra.mxu0 0.0
    %673 = vmatprep.subr.mxu0 0.0
    %674 = vmatpush1.msra.mxu0 0.0
    %675 = vmatprep.subr.mxu0 0.0
    %676 = vmatpush1.msra.mxu0 0.0
    %677 = vmatprep.subr.mxu0 0.0
    %678 = vmatpush1.msra.mxu0 0.0
    %679 = vmatprep.subr.mxu0 0.0
    %680 = vmatpush1.msra.mxu0 0.0
    %681 = vmatprep.subr.mxu0 0.0
    %682 = vmatpush1.msra.mxu0 0.0
    %683 = vmatprep.subr.mxu0 0.0
    %684 = vmatpush1.msra.mxu0 0.0
    %685 = vmatprep.subr.mxu0 0.0
    %686 = vmatpush1.msra.mxu0 0.0
    %687 = vmatprep.subr.mxu0 0.0
    %688 = vmatpush1.msra.mxu0 0.0
    %689 = vmatprep.subr.mxu0 0.0
    %690 = vmatpush1.msra.mxu0 0.0
    %691 = vmatprep.subr.mxu0 0.0
    %692 = vmatpush1.msra.mxu0 0.0
    %693 = vmatprep.subr.mxu0 0.0
    %694 = vmatpush1.msra.mxu0 0.0
    %695 = vmatprep.subr.mxu0 0.0
    %696 = vmatpush1.msra.mxu0 0.0
    %697 = vmatprep.subr.mxu0 0.0
    %698 = vmatpush1.msra.mxu0 0.0
    %699 = vmatprep.subr.mxu0 0.0
    %700 = vmatpush1.msra.mxu0 0.0
    %701 = vmatprep.subr.mxu0 0.0
    %702 = vmatpush1.msra.mxu0 0.0
    %703 = vmatprep.subr.mxu0 0.0
    %704 = vmatpush1.msra.mxu0 0.0
    %705 = vmatprep.subr.mxu0 0.0
    %706 = vmatpush1.msra.mxu0 0.0
    %707 = vmatprep.subr.mxu0 0.0
    %708 = vmatpush1.msra.mxu0 0.0
    %709 = vmatprep.subr.mxu0 0.0
    %710 = vmatpush1.msra.mxu0 0.0
    %711 = vmatprep.subr.mxu0 0.0
    %712 = vmatpush1.msra.mxu0 0.0
    %713 = vmatprep.subr.mxu0 0.0
    %714 = vmatpush1.msra.mxu0 0.0
    %715 = vmatprep.subr.mxu0 0.0
    %716 = vmatpush1.msra.mxu0 0.0
    %717 = vmatprep.subr.mxu0 0.0
    %718 = vmatpush1.msra.mxu0 0.0
    %719 = vmatprep.subr.mxu0 0.0
    %720 = vmatpush1.msra.mxu0 0.0
    %721 = vmatprep.subr.mxu0 0.0
    %722 = vmatpush1.msra.mxu0 0.0
    %723 = vmatprep.subr.mxu0 0.0
    %724 = vmatpush1.msra.mxu0 0.0
    %725 = vmatprep.subr.mxu0 0.0
    %726 = vmatpush1.msra.mxu0 0.0
    %727 = vmatprep.mubr.f32.mxu0 0.0
    %728 = vmatmul.mubr.f32.gmra.mrb[0].mxu0 %v661
    %v729 = vpop.f32.mrb[0].mxu0
    %v730 = vadd.f32 0.0, %v729
    %v731 = vpop.f32.mrb[0].mxu0
    %732 = vdwg.mxu0
    %v733 = vadd.f32 %v660, %v730
    %v734 = vmul.f32 %v733, %v295
    %v735 = vtanh.pop %v734
    %v736 = vadd.f32 %v735, 1.0
    %v737 = vmul.f32 %v736, 0.5
    %v738 = vmul.f32 %v737, %v646
    %740 = vrot.lane.b32.xlu0 %v735, 64
    %v741 = vpop.permute.xlu0 %740
    %v743 = vmul.f32 %v737, %v741
    %745 = vrot.lane.b32.xlu0 %v743, 32
    %v746 = vpop.permute.xlu0 %745
    %v748 = vadd.f32 %v738, %v746
    %v749 = vtanh.pop %v748
    %751 = vrot.lane.b32.xlu0 %v749, 64
    %v752 = vpop.permute.xlu0 %751
    %v754 = vmul.f32 %v737, %v752
    %756 = vrot.lane.b32.xlu0 %v754, 32
    %v757 = vpop.permute.xlu0 %756
    %s759 = scalar_lea.vmem [#allocation2], 16
    %760 = vst.msk [vmem:[%s759] sm:$0xff] %vm281, %v757
    %s761 = scalar_lea.vmem [#allocation3], 24
    %v762 = vld [vmem:[%s761] sm:$0xff]
    %v763 = vsel %vm281, %v757, 0
    %765 = vmatprep.subr.mxu0 0.0
    %766 = vmatpush1.msra.mxu0 %v296
    %767 = vmatprep.subr.mxu0 0.0
    %768 = vmatpush1.msra.mxu0 %v297
    %769 = vmatprep.subr.mxu0 0.0
    %770 = vmatpush1.msra.mxu0 %v298
    %771 = vmatprep.subr.mxu0 0.0
    %772 = vmatpush1.msra.mxu0 %v299
    %773 = vmatprep.subr.mxu0 0.0
    %774 = vmatpush1.msra.mxu0 0.0
    %775 = vmatprep.subr.mxu0 0.0
    %776 = vmatpush1.msra.mxu0 0.0
    %777 = vmatprep.subr.mxu0 0.0
    %778 = vmatpush1.msra.mxu0 0.0
    %779 = vmatprep.subr.mxu0 0.0
    %780 = vmatpush1.msra.mxu0 0.0
    %781 = vmatprep.subr.mxu0 0.0
    %782 = vmatpush1.msra.mxu0 0.0
    %783 = vmatprep.subr.mxu0 0.0
    %784 = vmatpush1.msra.mxu0 0.0
    %785 = vmatprep.subr.mxu0 0.0
    %786 = vmatpush1.msra.mxu0 0.0
    %787 = vmatprep.subr.mxu0 0.0
    %788 = vmatpush1.msra.mxu0 0.0
    %789 = vmatprep.subr.mxu0 0.0
    %790 = vmatpush1.msra.mxu0 0.0
    %791 = vmatprep.subr.mxu0 0.0
    %792 = vmatpush1.msra.mxu0 0.0
    %793 = vmatprep.subr.mxu0 0.0
    %794 = vmatpush1.msra.mxu0 0.0
    %795 = vmatprep.subr.mxu0 0.0
    %796 = vmatpush1.msra.mxu0 0.0
    %797 = vmatprep.subr.mxu0 0.0
    %798 = vmatpush1.msra.mxu0 0.0
    %799 = vmatprep.subr.mxu0 0.0
    %800 = vmatpush1.msra.mxu0 0.0
    %801 = vmatprep.subr.mxu0 0.0
    %802 = vmatpush1.msra.mxu0 0.0
    %803 = vmatprep.subr.mxu0 0.0
    %804 = vmatpush1.msra.mxu0 0.0
    %805 = vmatprep.subr.mxu0 0.0
    %806 = vmatpush1.msra.mxu0 0.0
    %807 = vmatprep.subr.mxu0 0.0
    %808 = vmatpush1.msra.mxu0 0.0
    %809 = vmatprep.subr.mxu0 0.0
    %810 = vmatpush1.msra.mxu0 0.0
    %811 = vmatprep.subr.mxu0 0.0
    %812 = vmatpush1.msra.mxu0 0.0
    %813 = vmatprep.subr.mxu0 0.0
    %814 = vmatpush1.msra.mxu0 0.0
    %815 = vmatprep.subr.mxu0 0.0
    %816 = vmatpush1.msra.mxu0 0.0
    %817 = vmatprep.subr.mxu0 0.0
    %818 = vmatpush1.msra.mxu0 0.0
    %819 = vmatprep.subr.mxu0 0.0
    %820 = vmatpush1.msra.mxu0 0.0
    %821 = vmatprep.subr.mxu0 0.0
    %822 = vmatpush1.msra.mxu0 0.0
    %823 = vmatprep.subr.mxu0 0.0
    %824 = vmatpush1.msra.mxu0 0.0
    %825 = vmatprep.subr.mxu0 0.0
    %826 = vmatpush1.msra.mxu0 0.0
    %827 = vmatprep.subr.mxu0 0.0
    %828 = vmatpush1.msra.mxu0 0.0
    %829 = vmatprep.mubr.f32.mxu0 0.0
    %830 = vmatmul.mubr.f32.gmra.mrb[0].mxu0 %v763
    %v831 = vpop.f32.mrb[0].mxu0
    %v832 = vadd.f32 0.0, %v831
    %v833 = vpop.f32.mrb[0].mxu0
    %834 = vdwg.mxu0
    %v835 = vadd.f32 %v762, %v832
    %v836 = vmul.f32 %v835, %v295
    %v837 = vtanh.pop %v836
    %v838 = vadd.f32 %v837, 1.0
    %v839 = vmul.f32 %v838, 0.5
    %v840 = vmul.f32 %v839, %v748
    %842 = vrot.lane.b32.xlu0 %v837, 64
    %v843 = vpop.permute.xlu0 %842
    %v845 = vmul.f32 %v839, %v843
    %847 = vrot.lane.b32.xlu0 %v845, 32
    %v848 = vpop.permute.xlu0 %847
    %v850 = vadd.f32 %v840, %v848
    %v851 = vtanh.pop %v850
    %853 = vrot.lane.b32.xlu0 %v851, 64
    %v854 = vpop.permute.xlu0 %853
    %v856 = vmul.f32 %v839, %v854
    %858 = vrot.lane.b32.xlu0 %v856, 32
    %v859 = vpop.permute.xlu0 %858
    %s861 = scalar_lea.vmem [#allocation2], 24
    %862 = vst.msk [vmem:[%s861] sm:$0xff] %vm281, %v859
    %s863 = scalar_lea.vmem [#allocation3], 32
    %v864 = vld [vmem:[%s863] sm:$0xff]
    %v865 = vsel %vm281, %v859, 0
    %867 = vmatprep.subr.mxu0 0.0
    %868 = vmatpush1.msra.mxu0 %v296
    %869 = vmatprep.subr.mxu0 0.0
    %870 = vmatpush1.msra.mxu0 %v297
    %871 = vmatprep.subr.mxu0 0.0
    %872 = vmatpush1.msra.mxu0 %v298
    %873 = vmatprep.subr.mxu0 0.0
    %874 = vmatpush1.msra.mxu0 %v299
    %875 = vmatprep.subr.mxu0 0.0
    %876 = vmatpush1.msra.mxu0 0.0
    %877 = vmatprep.subr.mxu0 0.0
    %878 = vmatpush1.msra.mxu0 0.0
    %879 = vmatprep.subr.mxu0 0.0
    %880 = vmatpush1.msra.mxu0 0.0
    %881 = vmatprep.subr.mxu0 0.0
    %882 = vmatpush1.msra.mxu0 0.0
    %883 = vmatprep.subr.mxu0 0.0
    %884 = vmatpush1.msra.mxu0 0.0
    %885 = vmatprep.subr.mxu0 0.0
    %886 = vmatpush1.msra.mxu0 0.0
    %887 = vmatprep.subr.mxu0 0.0
    %888 = vmatpush1.msra.mxu0 0.0
    %889 = vmatprep.subr.mxu0 0.0
    %890 = vmatpush1.msra.mxu0 0.0
    %891 = vmatprep.subr.mxu0 0.0
    %892 = vmatpush1.msra.mxu0 0.0
    %893 = vmatprep.subr.mxu0 0.0
    %894 = vmatpush1.msra.mxu0 0.0
    %895 = vmatprep.subr.mxu0 0.0
    %896 = vmatpush1.msra.mxu0 0.0
    %897 = vmatprep.subr.mxu0 0.0
    %898 = vmatpush1.msra.mxu0 0.0
    %899 = vmatprep.subr.mxu0 0.0
    %900 = vmatpush1.msra.mxu0 0.0
    %901 = vmatprep.subr.mxu0 0.0
    %902 = vmatpush1.msra.mxu0 0.0
    %903 = vmatprep.subr.mxu0 0.0
    %904 = vmatpush1.msra.mxu0 0.0
    %905 = vmatprep.subr.mxu0 0.0
    %906 = vmatpush1.msra.mxu0 0.0
    %907 = vmatprep.subr.mxu0 0.0
    %908 = vmatpush1.msra.mxu0 0.0
    %909 = vmatprep.subr.mxu0 0.0
    %910 = vmatpush1.msra.mxu0 0.0
    %911 = vmatprep.subr.mxu0 0.0
    %912 = vmatpush1.msra.mxu0 0.0
    %913 = vmatprep.subr.mxu0 0.0
    %914 = vmatpush1.msra.mxu0 0.0
    %915 = vmatprep.subr.mxu0 0.0
    %916 = vmatpush1.msra.mxu0 0.0
    %917 = vmatprep.subr.mxu0 0.0
    %918 = vmatpush1.msra.mxu0 0.0
    %919 = vmatprep.subr.mxu0 0.0
    %920 = vmatpush1.msra.mxu0 0.0
    %921 = vmatprep.subr.mxu0 0.0
    %922 = vmatpush1.msra.mxu0 0.0
    %923 = vmatprep.subr.mxu0 0.0
    %924 = vmatpush1.msra.mxu0 0.0
    %925 = vmatprep.subr.mxu0 0.0
    %926 = vmatpush1.msra.mxu0 0.0
    %927 = vmatprep.subr.mxu0 0.0
    %928 = vmatpush1.msra.mxu0 0.0
    %929 = vmatprep.subr.mxu0 0.0
    %930 = vmatpush1.msra.mxu0 0.0
    %931 = vmatprep.mubr.f32.mxu0 0.0
    %932 = vmatmul.mubr.f32.gmra.mrb[0].mxu0 %v865
    %v933 = vpop.f32.mrb[0].mxu0
    %v934 = vadd.f32 0.0, %v933
    %v935 = vpop.f32.mrb[0].mxu0
    %936 = vdwg.mxu0
    %v937 = vadd.f32 %v864, %v934
    %v938 = vmul.f32 %v937, %v295
    %v939 = vtanh.pop %v938
    %v940 = vadd.f32 %v939, 1.0
    %v941 = vmul.f32 %v940, 0.5
    %v942 = vmul.f32 %v941, %v850
    %944 = vrot.lane.b32.xlu0 %v939, 64
    %v945 = vpop.permute.xlu0 %944
    %v947 = vmul.f32 %v941, %v945
    %949 = vrot.lane.b32.xlu0 %v947, 32
    %v950 = vpop.permute.xlu0 %949
    %v952 = vadd.f32 %v942, %v950
    %v953 = vtanh.pop %v952
    %955 = vrot.lane.b32.xlu0 %v953, 64
    %v956 = vpop.permute.xlu0 %955
    %v958 = vmul.f32 %v941, %v956
    %960 = vrot.lane.b32.xlu0 %v958, 32
    %v961 = vpop.permute.xlu0 %960
    %s963 = scalar_lea.vmem [#allocation2], 32
    %964 = vst.msk [vmem:[%s963] sm:$0xff] %vm281, %v961
    %s965 = scalar_lea.vmem [#allocation3], 40
    %v966 = vld [vmem:[%s965] sm:$0xff]
    %v967 = vsel %vm281, %v961, 0
    %969 = vmatprep.subr.mxu0 0.0
    %970 = vmatpush1.msra.mxu0 %v296
    %971 = vmatprep.subr.mxu0 0.0
    %972 = vmatpush1.msra.mxu0 %v297
    %973 = vmatprep.subr.mxu0 0.0
    %974 = vmatpush1.msra.mxu0 %v298
    %975 = vmatprep.subr.mxu0 0.0
    %976 = vmatpush1.msra.mxu0 %v299
    %977 = vmatprep.subr.mxu0 0.0
    %978 = vmatpush1.msra.mxu0 0.0
    %979 = vmatprep.subr.mxu0 0.0
    %980 = vmatpush1.msra.mxu0 0.0
    %981 = vmatprep.subr.mxu0 0.0
    %982 = vmatpush1.msra.mxu0 0.0
    %983 = vmatprep.subr.mxu0 0.0
    %984 = vmatpush1.msra.mxu0 0.0
    %985 = vmatprep.subr.mxu0 0.0
    %986 = vmatpush1.msra.mxu0 0.0
    %987 = vmatprep.subr.mxu0 0.0
    %988 = vmatpush1.msra.mxu0 0.0
    %989 = vmatprep.subr.mxu0 0.0
    %990 = vmatpush1.msra.mxu0 0.0
    %991 = vmatprep.subr.mxu0 0.0
    %992 = vmatpush1.msra.mxu0 0.0
    %993 = vmatprep.subr.mxu0 0.0
    %994 = vmatpush1.msra.mxu0 0.0
    %995 = vmatprep.subr.mxu0 0.0
    %996 = vmatpush1.msra.mxu0 0.0
    %997 = vmatprep.subr.mxu0 0.0
    %998 = vmatpush1.msra.mxu0 0.0
    %999 = vmatprep.subr.mxu0 0.0
    %1000 = vmatpush1.msra.mxu0 0.0
    %1001 = vmatprep.subr.mxu0 0.0
    %1002 = vmatpush1.msra.mxu0 0.0
    %1003 = vmatprep.subr.mxu0 0.0
    %1004 = vmatpush1.msra.mxu0 0.0
    %1005 = vmatprep.subr.mxu0 0.0
    %1006 = vmatpush1.msra.mxu0 0.0
    %1007 = vmatprep.subr.mxu0 0.0
    %1008 = vmatpush1.msra.mxu0 0.0
    %1009 = vmatprep.subr.mxu0 0.0
    %1010 = vmatpush1.msra.mxu0 0.0
    %1011 = vmatprep.subr.mxu0 0.0
    %1012 = vmatpush1.msra.mxu0 0.0
    %1013 = vmatprep.subr.mxu0 0.0
    %1014 = vmatpush1.msra.mxu0 0.0
    %1015 = vmatprep.subr.mxu0 0.0
    %1016 = vmatpush1.msra.mxu0 0.0
    %1017 = vmatprep.subr.mxu0 0.0
    %1018 = vmatpush1.msra.mxu0 0.0
    %1019 = vmatprep.subr.mxu0 0.0
    %1020 = vmatpush1.msra.mxu0 0.0
    %1021 = vmatprep.subr.mxu0 0.0
    %1022 = vmatpush1.msra.mxu0 0.0
    %1023 = vmatprep.subr.mxu0 0.0
    %1024 = vmatpush1.msra.mxu0 0.0
    %1025 = vmatprep.subr.mxu0 0.0
    %1026 = vmatpush1.msra.mxu0 0.0
    %1027 = vmatprep.subr.mxu0 0.0
    %1028 = vmatpush1.msra.mxu0 0.0
    %1029 = vmatprep.subr.mxu0 0.0
    %1030 = vmatpush1.msra.mxu0 0.0
    %1031 = vmatprep.subr.mxu0 0.0
    %1032 = vmatpush1.msra.mxu0 0.0
    %1033 = vmatprep.mubr.f32.mxu0 0.0
    %1034 = vmatmul.mubr.f32.gmra.mrb[0].mxu0 %v967
    %v1035 = vpop.f32.mrb[0].mxu0
    %v1036 = vadd.f32 0.0, %v1035
    %v1037 = vpop.f32.mrb[0].mxu0
    %1038 = vdwg.mxu0
    %v1039 = vadd.f32 %v966, %v1036
    %v1040 = vmul.f32 %v1039, %v295
    %v1041 = vtanh.pop %v1040
    %v1042 = vadd.f32 %v1041, 1.0
    %v1043 = vmul.f32 %v1042, 0.5
    %v1044 = vmul.f32 %v1043, %v952
    %1046 = vrot.lane.b32.xlu0 %v1041, 64
    %v1047 = vpop.permute.xlu0 %1046
    %v1049 = vmul.f32 %v1043, %v1047
    %1051 = vrot.lane.b32.xlu0 %v1049, 32
    %v1052 = vpop.permute.xlu0 %1051
    %v1054 = vadd.f32 %v1044, %v1052
    %v1055 = vtanh.pop %v1054
    %1057 = vrot.lane.b32.xlu0 %v1055, 64
    %v1058 = vpop.permute.xlu0 %1057
    %v1060 = vmul.f32 %v1043, %v1058
    %1062 = vrot.lane.b32.xlu0 %v1060, 32
    %v1063 = vpop.permute.xlu0 %1062
    %s1065 = scalar_lea.vmem [#allocation2], 40
    %1066 = vst.msk [vmem:[%s1065] sm:$0xff] %vm281, %v1063
    %s1067 = scalar_lea.vmem [#allocation3], 48
    %v1068 = vld [vmem:[%s1067] sm:$0xff]
    %v1069 = vsel %vm281, %v1063, 0
    %1071 = vmatprep.subr.mxu0 0.0
    %1072 = vmatpush1.msra.mxu0 %v296
    %1073 = vmatprep.subr.mxu0 0.0
    %1074 = vmatpush1.msra.mxu0 %v297
    %1075 = vmatprep.subr.mxu0 0.0
    %1076 = vmatpush1.msra.mxu0 %v298
    %1077 = vmatprep.subr.mxu0 0.0
    %1078 = vmatpush1.msra.mxu0 %v299
    %1079 = vmatprep.subr.mxu0 0.0
    %1080 = vmatpush1.msra.mxu0 0.0
    %1081 = vmatprep.subr.mxu0 0.0
    %1082 = vmatpush1.msra.mxu0 0.0
    %1083 = vmatprep.subr.mxu0 0.0
    %1084 = vmatpush1.msra.mxu0 0.0
    %1085 = vmatprep.subr.mxu0 0.0
    %1086 = vmatpush1.msra.mxu0 0.0
    %1087 = vmatprep.subr.mxu0 0.0
    %1088 = vmatpush1.msra.mxu0 0.0
    %1089 = vmatprep.subr.mxu0 0.0
    %1090 = vmatpush1.msra.mxu0 0.0
    %1091 = vmatprep.subr.mxu0 0.0
    %1092 = vmatpush1.msra.mxu0 0.0
    %1093 = vmatprep.subr.mxu0 0.0
    %1094 = vmatpush1.msra.mxu0 0.0
    %1095 = vmatprep.subr.mxu0 0.0
    %1096 = vmatpush1.msra.mxu0 0.0
    %1097 = vmatprep.subr.mxu0 0.0
    %1098 = vmatpush1.msra.mxu0 0.0
    %1099 = vmatprep.subr.mxu0 0.0
    %1100 = vmatpush1.msra.mxu0 0.0
    %1101 = vmatprep.subr.mxu0 0.0
    %1102 = vmatpush1.msra.mxu0 0.0
    %1103 = vmatprep.subr.mxu0 0.0
    %1104 = vmatpush1.msra.mxu0 0.0
    %1105 = vmatprep.subr.mxu0 0.0
    %1106 = vmatpush1.msra.mxu0 0.0
    %1107 = vmatprep.subr.mxu0 0.0
    %1108 = vmatpush1.msra.mxu0 0.0
    %1109 = vmatprep.subr.mxu0 0.0
    %1110 = vmatpush1.msra.mxu0 0.0
    %1111 = vmatprep.subr.mxu0 0.0
    %1112 = vmatpush1.msra.mxu0 0.0
    %1113 = vmatprep.subr.mxu0 0.0
    %1114 = vmatpush1.msra.mxu0 0.0
    %1115 = vmatprep.subr.mxu0 0.0
    %1116 = vmatpush1.msra.mxu0 0.0
    %1117 = vmatprep.subr.mxu0 0.0
    %1118 = vmatpush1.msra.mxu0 0.0
    %1119 = vmatprep.subr.mxu0 0.0
    %1120 = vmatpush1.msra.mxu0 0.0
    %1121 = vmatprep.subr.mxu0 0.0
    %1122 = vmatpush1.msra.mxu0 0.0
    %1123 = vmatprep.subr.mxu0 0.0
    %1124 = vmatpush1.msra.mxu0 0.0
    %1125 = vmatprep.subr.mxu0 0.0
    %1126 = vmatpush1.msra.mxu0 0.0
    %1127 = vmatprep.subr.mxu0 0.0
    %1128 = vmatpush1.msra.mxu0 0.0
    %1129 = vmatprep.subr.mxu0 0.0
    %1130 = vmatpush1.msra.mxu0 0.0
    %1131 = vmatprep.subr.mxu0 0.0
    %1132 = vmatpush1.msra.mxu0 0.0
    %1133 = vmatprep.subr.mxu0 0.0
    %1134 = vmatpush1.msra.mxu0 0.0
    %1135 = vmatprep.mubr.f32.mxu0 0.0
    %1136 = vmatmul.mubr.f32.gmra.mrb[0].mxu0 %v1069
    %v1137 = vpop.f32.mrb[0].mxu0
    %v1138 = vadd.f32 0.0, %v1137
    %v1139 = vpop.f32.mrb[0].mxu0
    %1140 = vdwg.mxu0
    %v1141 = vadd.f32 %v1068, %v1138
    %v1142 = vmul.f32 %v1141, %v295
    %v1143 = vtanh.pop %v1142
    %v1144 = vadd.f32 %v1143, 1.0
    %v1145 = vmul.f32 %v1144, 0.5
    %v1146 = vmul.f32 %v1145, %v1054
    %1148 = vrot.lane.b32.xlu0 %v1143, 64
    %v1149 = vpop.permute.xlu0 %1148
    %v1151 = vmul.f32 %v1145, %v1149
    %1153 = vrot.lane.b32.xlu0 %v1151, 32
    %v1154 = vpop.permute.xlu0 %1153
    %v1156 = vadd.f32 %v1146, %v1154
    %v1157 = vtanh.pop %v1156
    %1159 = vrot.lane.b32.xlu0 %v1157, 64
    %v1160 = vpop.permute.xlu0 %1159
    %v1162 = vmul.f32 %v1145, %v1160
    %1164 = vrot.lane.b32.xlu0 %v1162, 32
    %v1165 = vpop.permute.xlu0 %1164
    %s1167 = scalar_lea.vmem [#allocation2], 48
    %1168 = vst.msk [vmem:[%s1167] sm:$0xff] %vm281, %v1165
    %s1169 = scalar_lea.vmem [#allocation3], 56
    %v1170 = vld [vmem:[%s1169] sm:$0xff]
    %v1171 = vsel %vm281, %v1165, 0
    %1173 = vmatprep.subr.mxu0 0.0
    %1174 = vmatpush1.msra.mxu0 %v296
    %1175 = vmatprep.subr.mxu0 0.0
    %1176 = vmatpush1.msra.mxu0 %v297
    %1177 = vmatprep.subr.mxu0 0.0
    %1178 = vmatpush1.msra.mxu0 %v298
    %1179 = vmatprep.subr.mxu0 0.0
    %1180 = vmatpush1.msra.mxu0 %v299
    %1181 = vmatprep.subr.mxu0 0.0
    %1182 = vmatpush1.msra.mxu0 0.0
    %1183 = vmatprep.subr.mxu0 0.0
    %1184 = vmatpush1.msra.mxu0 0.0
    %1185 = vmatprep.subr.mxu0 0.0
    %1186 = vmatpush1.msra.mxu0 0.0
    %1187 = vmatprep.subr.mxu0 0.0
    %1188 = vmatpush1.msra.mxu0 0.0
    %1189 = vmatprep.subr.mxu0 0.0
    %1190 = vmatpush1.msra.mxu0 0.0
    %1191 = vmatprep.subr.mxu0 0.0
    %1192 = vmatpush1.msra.mxu0 0.0
    %1193 = vmatprep.subr.mxu0 0.0
    %1194 = vmatpush1.msra.mxu0 0.0
    %1195 = vmatprep.subr.mxu0 0.0
    %1196 = vmatpush1.msra.mxu0 0.0
    %1197 = vmatprep.subr.mxu0 0.0
    %1198 = vmatpush1.msra.mxu0 0.0
    %1199 = vmatprep.subr.mxu0 0.0
    %1200 = vmatpush1.msra.mxu0 0.0
    %1201 = vmatprep.subr.mxu0 0.0
    %1202 = vmatpush1.msra.mxu0 0.0
    %1203 = vmatprep.subr.mxu0 0.0
    %1204 = vmatpush1.msra.mxu0 0.0
    %1205 = vmatprep.subr.mxu0 0.0
    %1206 = vmatpush1.msra.mxu0 0.0
    %1207 = vmatprep.subr.mxu0 0.0
    %1208 = vmatpush1.msra.mxu0 0.0
    %1209 = vmatprep.subr.mxu0 0.0
    %1210 = vmatpush1.msra.mxu0 0.0
    %1211 = vmatprep.subr.mxu0 0.0
    %1212 = vmatpush1.msra.mxu0 0.0
    %1213 = vmatprep.subr.mxu0 0.0
    %1214 = vmatpush1.msra.mxu0 0.0
    %1215 = vmatprep.subr.mxu0 0.0
    %1216 = vmatpush1.msra.mxu0 0.0
    %1217 = vmatprep.subr.mxu0 0.0
    %1218 = vmatpush1.msra.mxu0 0.0
    %1219 = vmatprep.subr.mxu0 0.0
    %1220 = vmatpush1.msra.mxu0 0.0
    %1221 = vmatprep.subr.mxu0 0.0
    %1222 = vmatpush1.msra.mxu0 0.0
    %1223 = vmatprep.subr.mxu0 0.0
    %1224 = vmatpush1.msra.mxu0 0.0
    %1225 = vmatprep.subr.mxu0 0.0
    %1226 = vmatpush1.msra.mxu0 0.0
    %1227 = vmatprep.subr.mxu0 0.0
    %1228 = vmatpush1.msra.mxu0 0.0
    %1229 = vmatprep.subr.mxu0 0.0
    %1230 = vmatpush1.msra.mxu0 0.0
    %1231 = vmatprep.subr.mxu0 0.0
    %1232 = vmatpush1.msra.mxu0 0.0
    %1233 = vmatprep.subr.mxu0 0.0
    %1234 = vmatpush1.msra.mxu0 0.0
    %1235 = vmatprep.subr.mxu0 0.0
    %1236 = vmatpush1.msra.mxu0 0.0
    %1237 = vmatprep.mubr.f32.mxu0 0.0
    %1238 = vmatmul.mubr.f32.gmra.mrb[0].mxu0 %v1171
    %v1239 = vpop.f32.mrb[0].mxu0
    %v1240 = vadd.f32 0.0, %v1239
    %v1241 = vpop.f32.mrb[0].mxu0
    %1242 = vdwg.mxu0
    %v1243 = vadd.f32 %v1170, %v1240
    %v1244 = vmul.f32 %v1243, %v295
    %v1245 = vtanh.pop %v1244
    %v1246 = vadd.f32 %v1245, 1.0
    %v1247 = vmul.f32 %v1246, 0.5
    %v1248 = vmul.f32 %v1247, %v1156
    %1250 = vrot.lane.b32.xlu0 %v1245, 64
    %v1251 = vpop.permute.xlu0 %1250
    %v1253 = vmul.f32 %v1247, %v1251
    %1255 = vrot.lane.b32.xlu0 %v1253, 32
    %v1256 = vpop.permute.xlu0 %1255
    %v1258 = vadd.f32 %v1248, %v1256
    %v1259 = vtanh.pop %v1258
    %1261 = vrot.lane.b32.xlu0 %v1259, 64
    %v1262 = vpop.permute.xlu0 %1261
    %v1264 = vmul.f32 %v1247, %v1262
    %1266 = vrot.lane.b32.xlu0 %v1264, 32
    %v1267 = vpop.permute.xlu0 %1266
    %s1269 = scalar_lea.vmem [#allocation2], 56
    %1270 = vst.msk [vmem:[%s1269] sm:$0xff] %vm281, %v1267
    %s1271 = scalar_lea.vmem [#allocation4], 32
    %v1272 = vld [vmem:[%s1271] sm:$0xff]
    %v1273 = vld [vmem:[%s1271 + $0x8] sm:$0xff]
    %v1274 = vld [vmem:[%s1271 + $0x10] sm:$0xff]
    %v1275 = vld [vmem:[%s1271 + $0x18] sm:$0xff]
    %v1276 = vld [vmem:[#allocation2] sm:$0xff]
    %v1277 = vld [vmem:[#allocation2 + $0x8] sm:$0xff]
    %v1278 = vld [vmem:[#allocation2 + $0x10] sm:$0xff]
    %v1279 = vld [vmem:[#allocation2 + $0x18] sm:$0xff]
    %v1280 = vld [vmem:[#allocation2 + $0x20] sm:$0xff]
    %v1281 = vld [vmem:[#allocation2 + $0x28] sm:$0xff]
    %v1282 = vld [vmem:[#allocation2 + $0x30] sm:$0xff]
    %v1283 = vld [vmem:[#allocation2 + $0x38] sm:$0xff]
    %s1284 = scalar_lea.vmem %s3, 32
    %v1285 = vld [vmem:[%s1284] sm:$0xff]
    %v1286 = vld [vmem:[%s1284 + $0x8] sm:$0xff]
    %v1287 = vld [vmem:[%s1284 + $0x10] sm:$0xff]
    %v1288 = vld [vmem:[%s1284 + $0x18] sm:$0xff]
    %s1289 = scalar_lea.vmem %s5, 1
    %v1290 = vld [vmem:[%s1289] sm:$0x1]
    %v1292 = vlaneseq
    %v1293 = vshrl.u32 %v1292, 7
    %v1294 = vsub.s32 0, %v1293
    %v1295 = vrot.slane %v1290, %v1294
    %v1298 = vsel %vm281, %v1276, 0
    %v1301 = vsel %vm281, %v1277, 0
    %v1304 = vsel %vm281, %v1278, 0
    %v1307 = vsel %vm281, %v1279, 0
    %v1310 = vsel %vm281, %v1280, 0
    %v1313 = vsel %vm281, %v1281, 0
    %v1316 = vsel %vm281, %v1282, 0
    %v1319 = vsel %vm281, %v1283, 0
    %1321 = vmatprep.subr.mxu0 0.0
    %1322 = vmatpush1.msra.mxu0 %v1285
    %1323 = vmatprep.subr.mxu0 0.0
    %1324 = vmatpush1.msra.mxu0 %v1286
    %1325 = vmatprep.subr.mxu0 0.0
    %1326 = vmatpush1.msra.mxu0 %v1287
    %1327 = vmatprep.subr.mxu0 0.0
    %1328 = vmatpush1.msra.mxu0 %v1288
    %1329 = vmatprep.subr.mxu0 0.0
    %1330 = vmatpush1.msra.mxu0 0.0
    %1331 = vmatprep.subr.mxu0 0.0
    %1332 = vmatpush1.msra.mxu0 0.0
    %1333 = vmatprep.subr.mxu0 0.0
    %1334 = vmatpush1.msra.mxu0 0.0
    %1335 = vmatprep.subr.mxu0 0.0
    %1336 = vmatpush1.msra.mxu0 0.0
    %1337 = vmatprep.subr.mxu0 0.0
    %1338 = vmatpush1.msra.mxu0 0.0
    %1339 = vmatprep.subr.mxu0 0.0
    %1340 = vmatpush1.msra.mxu0 0.0
    %1341 = vmatprep.subr.mxu0 0.0
    %1342 = vmatpush1.msra.mxu0 0.0
    %1343 = vmatprep.subr.mxu0 0.0
    %1344 = vmatpush1.msra.mxu0 0.0
    %1345 = vmatprep.subr.mxu0 0.0
    %1346 = vmatpush1.msra.mxu0 0.0
    %1347 = vmatprep.subr.mxu0 0.0
    %1348 = vmatpush1.msra.mxu0 0.0
    %1349 = vmatprep.subr.mxu0 0.0
    %1350 = vmatpush1.msra.mxu0 0.0
    %1351 = vmatprep.subr.mxu0 0.0
    %1352 = vmatpush1.msra.mxu0 0.0
    %1353 = vmatprep.subr.mxu0 0.0
    %1354 = vmatpush1.msra.mxu0 0.0
    %1355 = vmatprep.subr.mxu0 0.0
    %1356 = vmatpush1.msra.mxu0 0.0
    %1357 = vmatprep.subr.mxu0 0.0
    %1358 = vmatpush1.msra.mxu0 0.0
    %1359 = vmatprep.subr.mxu0 0.0
    %1360 = vmatpush1.msra.mxu0 0.0
    %1361 = vmatprep.subr.mxu0 0.0
    %1362 = vmatpush1.msra.mxu0 0.0
    %1363 = vmatprep.subr.mxu0 0.0
    %1364 = vmatpush1.msra.mxu0 0.0
    %1365 = vmatprep.subr.mxu0 0.0
    %1366 = vmatpush1.msra.mxu0 0.0
    %1367 = vmatprep.subr.mxu0 0.0
    %1368 = vmatpush1.msra.mxu0 0.0
    %1369 = vmatprep.subr.mxu0 0.0
    %1370 = vmatpush1.msra.mxu0 0.0
    %1371 = vmatprep.subr.mxu0 0.0
    %1372 = vmatpush1.msra.mxu0 0.0
    %1373 = vmatprep.subr.mxu0 0.0
    %1374 = vmatpush1.msra.mxu0 0.0
    %1375 = vmatprep.subr.mxu0 0.0
    %1376 = vmatpush1.msra.mxu0 0.0
    %1377 = vmatprep.subr.mxu0 0.0
    %1378 = vmatpush1.msra.mxu0 0.0
    %1379 = vmatprep.subr.mxu0 0.0
    %1380 = vmatpush1.msra.mxu0 0.0
    %1381 = vmatprep.subr.mxu0 0.0
    %1382 = vmatpush1.msra.mxu0 0.0
    %1383 = vmatprep.subr.mxu0 0.0
    %1384 = vmatpush1.msra.mxu0 0.0
    %1385 = vmatprep.mubr.f32.mxu0 0.0
    %1386 = vmatmul.mubr.f32.gmra.mrb[0].mxu0 %v1298
    %v1387 = vpop.f32.mrb[0].mxu0
    %v1388 = vadd.f32 %v1295, %v1387
    %v1389 = vpop.f32.mrb[0].mxu0
    %1390 = vmatprep.mubr.f32.mxu0 0.0
    %1391 = vmatmul.mubr.f32.gmra.mrb[0].mxu0 %v1301
    %v1392 = vpop.f32.mrb[0].mxu0
    %v1393 = vadd.f32 %v1295, %v1392
    %v1394 = vpop.f32.mrb[0].mxu0
    %1395 = vmatprep.mubr.f32.mxu0 0.0
    %1396 = vmatmul.mubr.f32.gmra.mrb[0].mxu0 %v1304
    %v1397 = vpop.f32.mrb[0].mxu0
    %v1398 = vadd.f32 %v1295, %v1397
    %v1399 = vpop.f32.mrb[0].mxu0
    %1400 = vmatprep.mubr.f32.mxu0 0.0
    %1401 = vmatmul.mubr.f32.gmra.mrb[0].mxu0 %v1307
    %v1402 = vpop.f32.mrb[0].mxu0
    %v1403 = vadd.f32 %v1295, %v1402
    %v1404 = vpop.f32.mrb[0].mxu0
    %1405 = vmatprep.mubr.f32.mxu0 0.0
    %1406 = vmatmul.mubr.f32.gmra.mrb[0].mxu0 %v1310
    %v1407 = vpop.f32.mrb[0].mxu0
    %v1408 = vadd.f32 %v1295, %v1407
    %v1409 = vpop.f32.mrb[0].mxu0
    %1410 = vmatprep.mubr.f32.mxu0 0.0
    %1411 = vmatmul.mubr.f32.gmra.mrb[0].mxu0 %v1313
    %v1412 = vpop.f32.mrb[0].mxu0
    %v1413 = vadd.f32 %v1295, %v1412
    %v1414 = vpop.f32.mrb[0].mxu0
    %1415 = vmatprep.mubr.f32.mxu0 0.0
    %1416 = vmatmul.mubr.f32.gmra.mrb[0].mxu0 %v1316
    %v1417 = vpop.f32.mrb[0].mxu0
    %v1418 = vadd.f32 %v1295, %v1417
    %v1419 = vpop.f32.mrb[0].mxu0
    %1420 = vmatprep.mubr.f32.mxu0 0.0
    %1421 = vmatmul.mubr.f32.gmra.mrb[0].mxu0 %v1319
    %v1422 = vpop.f32.mrb[0].mxu0
    %v1423 = vadd.f32 %v1295, %v1422
    %v1424 = vpop.f32.mrb[0].mxu0
    %1425 = vdwg.mxu0
    %1426 = vst [vmem:[#allocation3] sm:$0xff] %v1388
    %1427 = vst [vmem:[#allocation3 + $0x8] sm:$0xff] %v1393
    %1428 = vst [vmem:[#allocation3 + $0x10] sm:$0xff] %v1398
    %1429 = vst [vmem:[#allocation3 + $0x18] sm:$0xff] %v1403
    %1430 = vst [vmem:[#allocation3 + $0x20] sm:$0xff] %v1408
    %1431 = vst [vmem:[#allocation3 + $0x28] sm:$0xff] %v1413
    %1432 = vst [vmem:[#allocation3 + $0x30] sm:$0xff] %v1418
    %1433 = vst [vmem:[#allocation3 + $0x38] sm:$0xff] %v1423
    %v1434 = vld [vmem:[#allocation3] sm:$0xff]
    %1435 = vmatprep.subr.mxu0 0.0
    %1436 = vmatpush1.msra.mxu0 %v1272
    %1437 = vmatprep.subr.mxu0 0.0
    %1438 = vmatpush1.msra.mxu0 %v1273
    %1439 = vmatprep.subr.mxu0 0.0
    %1440 = vmatpush1.msra.mxu0 %v1274
    %1441 = vmatprep.subr.mxu0 0.0
    %1442 = vmatpush1.msra.mxu0 %v1275
    %1443 = vmatprep.subr.mxu0 0.0
    %1444 = vmatpush1.msra.mxu0 0.0
    %1445 = vmatprep.subr.mxu0 0.0
    %1446 = vmatpush1.msra.mxu0 0.0
    %1447 = vmatprep.subr.mxu0 0.0
    %1448 = vmatpush1.msra.mxu0 0.0
    %1449 = vmatprep.subr.mxu0 0.0
    %1450 = vmatpush1.msra.mxu0 0.0
    %1451 = vmatprep.subr.mxu0 0.0
    %1452 = vmatpush1.msra.mxu0 0.0
    %1453 = vmatprep.subr.mxu0 0.0
    %1454 = vmatpush1.msra.mxu0 0.0
    %1455 = vmatprep.subr.mxu0 0.0
    %1456 = vmatpush1.msra.mxu0 0.0
    %1457 = vmatprep.subr.mxu0 0.0
    %1458 = vmatpush1.msra.mxu0 0.0
    %1459 = vmatprep.subr.mxu0 0.0
    %1460 = vmatpush1.msra.mxu0 0.0
    %1461 = vmatprep.subr.mxu0 0.0
    %1462 = vmatpush1.msra.mxu0 0.0
    %1463 = vmatprep.subr.mxu0 0.0
    %1464 = vmatpush1.msra.mxu0 0.0
    %1465 = vmatprep.subr.mxu0 0.0
    %1466 = vmatpush1.msra.mxu0 0.0
    %1467 = vmatprep.subr.mxu0 0.0
    %1468 = vmatpush1.msra.mxu0 0.0
    %1469 = vmatprep.subr.mxu0 0.0
    %1470 = vmatpush1.msra.mxu0 0.0
    %1471 = vmatprep.subr.mxu0 0.0
    %1472 = vmatpush1.msra.mxu0 0.0
    %1473 = vmatprep.subr.mxu0 0.0
    %1474 = vmatpush1.msra.mxu0 0.0
    %1475 = vmatprep.subr.mxu0 0.0
    %1476 = vmatpush1.msra.mxu0 0.0
    %1477 = vmatprep.subr.mxu0 0.0
    %1478 = vmatpush1.msra.mxu0 0.0
    %1479 = vmatprep.subr.mxu0 0.0
    %1480 = vmatpush1.msra.mxu0 0.0
    %1481 = vmatprep.subr.mxu0 0.0
    %1482 = vmatpush1.msra.mxu0 0.0
    %1483 = vmatprep.subr.mxu0 0.0
    %1484 = vmatpush1.msra.mxu0 0.0
    %1485 = vmatprep.subr.mxu0 0.0
    %1486 = vmatpush1.msra.mxu0 0.0
    %1487 = vmatprep.subr.mxu0 0.0
    %1488 = vmatpush1.msra.mxu0 0.0
    %1489 = vmatprep.subr.mxu0 0.0
    %1490 = vmatpush1.msra.mxu0 0.0
    %1491 = vmatprep.subr.mxu0 0.0
    %1492 = vmatpush1.msra.mxu0 0.0
    %1493 = vmatprep.subr.mxu0 0.0
    %1494 = vmatpush1.msra.mxu0 0.0
    %1495 = vmatprep.subr.mxu0 0.0
    %1496 = vmatpush1.msra.mxu0 0.0
    %1497 = vmatprep.subr.mxu0 0.0
    %1498 = vmatpush1.msra.mxu0 0.0
    %1499 = vmatprep.mubr.f32.mxu0 0.0
    %1500 = vmatmul.mubr.f32.gmra.mrb[0].mxu0 %v458
    %v1501 = vpop.f32.mrb[0].mxu0
    %v1502 = vadd.f32 0.0, %v1501
    %v1503 = vpop.f32.mrb[0].mxu0
    %1504 = vdwg.mxu0
    %v1505 = vadd.f32 %v1434, %v1502
    %v1506 = vmul.f32 %v1505, %v295
    %v1507 = vtanh.pop %v1506
    %v1508 = vadd.f32 %v1507, 1.0
    %v1509 = vmul.f32 %v1508, 0.5
    %v1510 = vmul.f32 %v1509, 0.0
    %1512 = vrot.lane.b32.xlu0 %v1507, 64
    %v1513 = vpop.permute.xlu0 %1512
    %v1515 = vmul.f32 %v1509, %v1513
    %1517 = vrot.lane.b32.xlu0 %v1515, 32
    %v1518 = vpop.permute.xlu0 %1517
    %v1520 = vadd.f32 %v1510, %v1518
    %v1521 = vtanh.pop %v1520
    %1523 = vrot.lane.b32.xlu0 %v1521, 64
    %v1524 = vpop.permute.xlu0 %1523
    %v1526 = vmul.f32 %v1509, %v1524
    %1528 = vrot.lane.b32.xlu0 %v1526, 32
    %v1529 = vpop.permute.xlu0 %1528
    %1531 = vst.msk [vmem:[#allocation2] sm:$0xff] %vm281, %v1529
    %v1532 = vld [vmem:[%s557] sm:$0xff]
    %v1533 = vsel %vm281, %v1529, 0
    %1535 = vmatprep.subr.mxu0 0.0
    %1536 = vmatpush1.msra.mxu0 %v1272
    %1537 = vmatprep.subr.mxu0 0.0
    %1538 = vmatpush1.msra.mxu0 %v1273
    %1539 = vmatprep.subr.mxu0 0.0
    %1540 = vmatpush1.msra.mxu0 %v1274
    %1541 = vmatprep.subr.mxu0 0.0
    %1542 = vmatpush1.msra.mxu0 %v1275
    %1543 = vmatprep.subr.mxu0 0.0
    %1544 = vmatpush1.msra.mxu0 0.0
    %1545 = vmatprep.subr.mxu0 0.0
    %1546 = vmatpush1.msra.mxu0 0.0
    %1547 = vmatprep.subr.mxu0 0.0
    %1548 = vmatpush1.msra.mxu0 0.0
    %1549 = vmatprep.subr.mxu0 0.0
    %1550 = vmatpush1.msra.mxu0 0.0
    %1551 = vmatprep.subr.mxu0 0.0
    %1552 = vmatpush1.msra.mxu0 0.0
    %1553 = vmatprep.subr.mxu0 0.0
    %1554 = vmatpush1.msra.mxu0 0.0
    %1555 = vmatprep.subr.mxu0 0.0
    %1556 = vmatpush1.msra.mxu0 0.0
    %1557 = vmatprep.subr.mxu0 0.0
    %1558 = vmatpush1.msra.mxu0 0.0
    %1559 = vmatprep.subr.mxu0 0.0
    %1560 = vmatpush1.msra.mxu0 0.0
    %1561 = vmatprep.subr.mxu0 0.0
    %1562 = vmatpush1.msra.mxu0 0.0
    %1563 = vmatprep.subr.mxu0 0.0
    %1564 = vmatpush1.msra.mxu0 0.0
    %1565 = vmatprep.subr.mxu0 0.0
    %1566 = vmatpush1.msra.mxu0 0.0
    %1567 = vmatprep.subr.mxu0 0.0
    %1568 = vmatpush1.msra.mxu0 0.0
    %1569 = vmatprep.subr.mxu0 0.0
    %1570 = vmatpush1.msra.mxu0 0.0
    %1571 = vmatprep.subr.mxu0 0.0
    %1572 = vmatpush1.msra.mxu0 0.0
    %1573 = vmatprep.subr.mxu0 0.0
    %1574 = vmatpush1.msra.mxu0 0.0
    %1575 = vmatprep.subr.mxu0 0.0
    %1576 = vmatpush1.msra.mxu0 0.0
    %1577 = vmatprep.subr.mxu0 0.0
    %1578 = vmatpush1.msra.mxu0 0.0
    %1579 = vmatprep.subr.mxu0 0.0
    %1580 = vmatpush1.msra.mxu0 0.0
    %1581 = vmatprep.subr.mxu0 0.0
    %1582 = vmatpush1.msra.mxu0 0.0
    %1583 = vmatprep.subr.mxu0 0.0
    %1584 = vmatpush1.msra.mxu0 0.0
    %1585 = vmatprep.subr.mxu0 0.0
    %1586 = vmatpush1.msra.mxu0 0.0
    %1587 = vmatprep.subr.mxu0 0.0
    %1588 = vmatpush1.msra.mxu0 0.0
    %1589 = vmatprep.subr.mxu0 0.0
    %1590 = vmatpush1.msra.mxu0 0.0
    %1591 = vmatprep.subr.mxu0 0.0
    %1592 = vmatpush1.msra.mxu0 0.0
    %1593 = vmatprep.subr.mxu0 0.0
    %1594 = vmatpush1.msra.mxu0 0.0
    %1595 = vmatprep.subr.mxu0 0.0
    %1596 = vmatpush1.msra.mxu0 0.0
    %1597 = vmatprep.subr.mxu0 0.0
    %1598 = vmatpush1.msra.mxu0 0.0
    %1599 = vmatprep.mubr.f32.mxu0 0.0
    %1600 = vmatmul.mubr.f32.gmra.mrb[0].mxu0 %v1533
    %v1601 = vpop.f32.mrb[0].mxu0
    %v1602 = vadd.f32 0.0, %v1601
    %v1603 = vpop.f32.mrb[0].mxu0
    %1604 = vdwg.mxu0
    %v1605 = vadd.f32 %v1532, %v1602
    %v1606 = vmul.f32 %v1605, %v295
    %v1607 = vtanh.pop %v1606
    %v1608 = vadd.f32 %v1607, 1.0
    %v1609 = vmul.f32 %v1608, 0.5
    %v1610 = vmul.f32 %v1609, %v1520
    %1612 = vrot.lane.b32.xlu0 %v1607, 64
    %v1613 = vpop.permute.xlu0 %1612
    %v1615 = vmul.f32 %v1609, %v1613
    %1617 = vrot.lane.b32.xlu0 %v1615, 32
    %v1618 = vpop.permute.xlu0 %1617
    %v1620 = vadd.f32 %v1610, %v1618
    %v1621 = vtanh.pop %v1620
    %1623 = vrot.lane.b32.xlu0 %v1621, 64
    %v1624 = vpop.permute.xlu0 %1623
    %v1626 = vmul.f32 %v1609, %v1624
    %1628 = vrot.lane.b32.xlu0 %v1626, 32
    %v1629 = vpop.permute.xlu0 %1628
    %1631 = vst.msk [vmem:[%s657] sm:$0xff] %vm281, %v1629
    %v1632 = vld [vmem:[%s659] sm:$0xff]
    %v1633 = vsel %vm281, %v1629, 0
    %1635 = vmatprep.subr.mxu0 0.0
    %1636 = vmatpush1.msra.mxu0 %v1272
    %1637 = vmatprep.subr.mxu0 0.0
    %1638 = vmatpush1.msra.mxu0 %v1273
    %1639 = vmatprep.subr.mxu0 0.0
    %1640 = vmatpush1.msra.mxu0 %v1274
    %1641 = vmatprep.subr.mxu0 0.0
    %1642 = vmatpush1.msra.mxu0 %v1275
    %1643 = vmatprep.subr.mxu0 0.0
    %1644 = vmatpush1.msra.mxu0 0.0
    %1645 = vmatprep.subr.mxu0 0.0
    %1646 = vmatpush1.msra.mxu0 0.0
    %1647 = vmatprep.subr.mxu0 0.0
    %1648 = vmatpush1.msra.mxu0 0.0
    %1649 = vmatprep.subr.mxu0 0.0
    %1650 = vmatpush1.msra.mxu0 0.0
    %1651 = vmatprep.subr.mxu0 0.0
    %1652 = vmatpush1.msra.mxu0 0.0
    %1653 = vmatprep.subr.mxu0 0.0
    %1654 = vmatpush1.msra.mxu0 0.0
    %1655 = vmatprep.subr.mxu0 0.0
    %1656 = vmatpush1.msra.mxu0 0.0
    %1657 = vmatprep.subr.mxu0 0.0
    %1658 = vmatpush1.msra.mxu0 0.0
    %1659 = vmatprep.subr.mxu0 0.0
    %1660 = vmatpush1.msra.mxu0 0.0
    %1661 = vmatprep.subr.mxu0 0.0
    %1662 = vmatpush1.msra.mxu0 0.0
    %1663 = vmatprep.subr.mxu0 0.0
    %1664 = vmatpush1.msra.mxu0 0.0
    %1665 = vmatprep.subr.mxu0 0.0
    %1666 = vmatpush1.msra.mxu0 0.0
    %1667 = vmatprep.subr.mxu0 0.0
    %1668 = vmatpush1.msra.mxu0 0.0
    %1669 = vmatprep.subr.mxu0 0.0
    %1670 = vmatpush1.msra.mxu0 0.0
    %1671 = vmatprep.subr.mxu0 0.0
    %1672 = vmatpush1.msra.mxu0 0.0
    %1673 = vmatprep.subr.mxu0 0.0
    %1674 = vmatpush1.msra.mxu0 0.0
    %1675 = vmatprep.subr.mxu0 0.0
    %1676 = vmatpush1.msra.mxu0 0.0
    %1677 = vmatprep.subr.mxu0 0.0
    %1678 = vmatpush1.msra.mxu0 0.0
    %1679 = vmatprep.subr.mxu0 0.0
    %1680 = vmatpush1.msra.mxu0 0.0
    %1681 = vmatprep.subr.mxu0 0.0
    %1682 = vmatpush1.msra.mxu0 0.0
    %1683 = vmatprep.subr.mxu0 0.0
    %1684 = vmatpush1.msra.mxu0 0.0
    %1685 = vmatprep.subr.mxu0 0.0
    %1686 = vmatpush1.msra.mxu0 0.0
    %1687 = vmatprep.subr.mxu0 0.0
    %1688 = vmatpush1.msra.mxu0 0.0
    %1689 = vmatprep.subr.mxu0 0.0
    %1690 = vmatpush1.msra.mxu0 0.0
    %1691 = vmatprep.subr.mxu0 0.0
    %1692 = vmatpush1.msra.mxu0 0.0
    %1693 = vmatprep.subr.mxu0 0.0
    %1694 = vmatpush1.msra.mxu0 0.0
    %1695 = vmatprep.subr.mxu0 0.0
    %1696 = vmatpush1.msra.mxu0 0.0
    %1697 = vmatprep.subr.mxu0 0.0
    %1698 = vmatpush1.msra.mxu0 0.0
    %1699 = vmatprep.mubr.f32.mxu0 0.0
    %1700 = vmatmul.mubr.f32.gmra.mrb[0].mxu0 %v1633
    %v1701 = vpop.f32.mrb[0].mxu0
    %v1702 = vadd.f32 0.0, %v1701
    %v1703 = vpop.f32.mrb[0].mxu0
    %1704 = vdwg.mxu0
    %v1705 = vadd.f32 %v1632, %v1702
    %v1706 = vmul.f32 %v1705, %v295
    %v1707 = vtanh.pop %v1706
    %v1708 = vadd.f32 %v1707, 1.0
    %v1709 = vmul.f32 %v1708, 0.5
    %v1710 = vmul.f32 %v1709, %v1620
    %1712 = vrot.lane.b32.xlu0 %v1707, 64
    %v1713 = vpop.permute.xlu0 %1712
    %v1715 = vmul.f32 %v1709, %v1713
    %1717 = vrot.lane.b32.xlu0 %v1715, 32
    %v1718 = vpop.permute.xlu0 %1717
    %v1720 = vadd.f32 %v1710, %v1718
    %v1721 = vtanh.pop %v1720
    %1723 = vrot.lane.b32.xlu0 %v1721, 64
    %v1724 = vpop.permute.xlu0 %1723
    %v1726 = vmul.f32 %v1709, %v1724
    %1728 = vrot.lane.b32.xlu0 %v1726, 32
    %v1729 = vpop.permute.xlu0 %1728
    %1731 = vst.msk [vmem:[%s759] sm:$0xff] %vm281, %v1729
    %v1732 = vld [vmem:[%s761] sm:$0xff]
    %v1733 = vsel %vm281, %v1729, 0
    %1735 = vmatprep.subr.mxu0 0.0
    %1736 = vmatpush1.msra.mxu0 %v1272
    %1737 = vmatprep.subr.mxu0 0.0
    %1738 = vmatpush1.msra.mxu0 %v1273
    %1739 = vmatprep.subr.mxu0 0.0
    %1740 = vmatpush1.msra.mxu0 %v1274
    %1741 = vmatprep.subr.mxu0 0.0
    %1742 = vmatpush1.msra.mxu0 %v1275
    %1743 = vmatprep.subr.mxu0 0.0
    %1744 = vmatpush1.msra.mxu0 0.0
    %1745 = vmatprep.subr.mxu0 0.0
    %1746 = vmatpush1.msra.mxu0 0.0
    %1747 = vmatprep.subr.mxu0 0.0
    %1748 = vmatpush1.msra.mxu0 0.0
    %1749 = vmatprep.subr.mxu0 0.0
    %1750 = vmatpush1.msra.mxu0 0.0
    %1751 = vmatprep.subr.mxu0 0.0
    %1752 = vmatpush1.msra.mxu0 0.0
    %1753 = vmatprep.subr.mxu0 0.0
    %1754 = vmatpush1.msra.mxu0 0.0
    %1755 = vmatprep.subr.mxu0 0.0
    %1756 = vmatpush1.msra.mxu0 0.0
    %1757 = vmatprep.subr.mxu0 0.0
    %1758 = vmatpush1.msra.mxu0 0.0
    %1759 = vmatprep.subr.mxu0 0.0
    %1760 = vmatpush1.msra.mxu0 0.0
    %1761 = vmatprep.subr.mxu0 0.0
    %1762 = vmatpush1.msra.mxu0 0.0
    %1763 = vmatprep.subr.mxu0 0.0
    %1764 = vmatpush1.msra.mxu0 0.0
    %1765 = vmatprep.subr.mxu0 0.0
    %1766 = vmatpush1.msra.mxu0 0.0
    %1767 = vmatprep.subr.mxu0 0.0
    %1768 = vmatpush1.msra.mxu0 0.0
    %1769 = vmatprep.subr.mxu0 0.0
    %1770 = vmatpush1.msra.mxu0 0.0
    %1771 = vmatprep.subr.mxu0 0.0
    %1772 = vmatpush1.msra.mxu0 0.0
    %1773 = vmatprep.subr.mxu0 0.0
    %1774 = vmatpush1.msra.mxu0 0.0
    %1775 = vmatprep.subr.mxu0 0.0
    %1776 = vmatpush1.msra.mxu0 0.0
    %1777 = vmatprep.subr.mxu0 0.0
    %1778 = vmatpush1.msra.mxu0 0.0
    %1779 = vmatprep.subr.mxu0 0.0
    %1780 = vmatpush1.msra.mxu0 0.0
    %1781 = vmatprep.subr.mxu0 0.0
    %1782 = vmatpush1.msra.mxu0 0.0
    %1783 = vmatprep.subr.mxu0 0.0
    %1784 = vmatpush1.msra.mxu0 0.0
    %1785 = vmatprep.subr.mxu0 0.0
    %1786 = vmatpush1.msra.mxu0 0.0
    %1787 = vmatprep.subr.mxu0 0.0
    %1788 = vmatpush1.msra.mxu0 0.0
    %1789 = vmatprep.subr.mxu0 0.0
    %1790 = vmatpush1.msra.mxu0 0.0
    %1791 = vmatprep.subr.mxu0 0.0
    %1792 = vmatpush1.msra.mxu0 0.0
    %1793 = vmatprep.subr.mxu0 0.0
    %1794 = vmatpush1.msra.mxu0 0.0
    %1795 = vmatprep.subr.mxu0 0.0
    %1796 = vmatpush1.msra.mxu0 0.0
    %1797 = vmatprep.subr.mxu0 0.0
    %1798 = vmatpush1.msra.mxu0 0.0
    %1799 = vmatprep.mubr.f32.mxu0 0.0
    %1800 = vmatmul.mubr.f32.gmra.mrb[0].mxu0 %v1733
    %v1801 = vpop.f32.mrb[0].mxu0
    %v1802 = vadd.f32 0.0, %v1801
    %v1803 = vpop.f32.mrb[0].mxu0
    %1804 = vdwg.mxu0
    %v1805 = vadd.f32 %v1732, %v1802
    %v1806 = vmul.f32 %v1805, %v295
    %v1807 = vtanh.pop %v1806
    %v1808 = vadd.f32 %v1807, 1.0
    %v1809 = vmul.f32 %v1808, 0.5
    %v1810 = vmul.f32 %v1809, %v1720
    %1812 = vrot.lane.b32.xlu0 %v1807, 64
    %v1813 = vpop.permute.xlu0 %1812
    %v1815 = vmul.f32 %v1809, %v1813
    %1817 = vrot.lane.b32.xlu0 %v1815, 32
    %v1818 = vpop.permute.xlu0 %1817
    %v1820 = vadd.f32 %v1810, %v1818
    %v1821 = vtanh.pop %v1820
    %1823 = vrot.lane.b32.xlu0 %v1821, 64
    %v1824 = vpop.permute.xlu0 %1823
    %v1826 = vmul.f32 %v1809, %v1824
    %1828 = vrot.lane.b32.xlu0 %v1826, 32
    %v1829 = vpop.permute.xlu0 %1828
    %1831 = vst.msk [vmem:[%s861] sm:$0xff] %vm281, %v1829
    %v1832 = vld [vmem:[%s863] sm:$0xff]
    %v1833 = vsel %vm281, %v1829, 0
    %1835 = vmatprep.subr.mxu0 0.0
    %1836 = vmatpush1.msra.mxu0 %v1272
    %1837 = vmatprep.subr.mxu0 0.0
    %1838 = vmatpush1.msra.mxu0 %v1273
    %1839 = vmatprep.subr.mxu0 0.0
    %1840 = vmatpush1.msra.mxu0 %v1274
    %1841 = vmatprep.subr.mxu0 0.0
    %1842 = vmatpush1.msra.mxu0 %v1275
    %1843 = vmatprep.subr.mxu0 0.0
    %1844 = vmatpush1.msra.mxu0 0.0
    %1845 = vmatprep.subr.mxu0 0.0
    %1846 = vmatpush1.msra.mxu0 0.0
    %1847 = vmatprep.subr.mxu0 0.0
    %1848 = vmatpush1.msra.mxu0 0.0
    %1849 = vmatprep.subr.mxu0 0.0
    %1850 = vmatpush1.msra.mxu0 0.0
    %1851 = vmatprep.subr.mxu0 0.0
    %1852 = vmatpush1.msra.mxu0 0.0
    %1853 = vmatprep.subr.mxu0 0.0
    %1854 = vmatpush1.msra.mxu0 0.0
    %1855 = vmatprep.subr.mxu0 0.0
    %1856 = vmatpush1.msra.mxu0 0.0
    %1857 = vmatprep.subr.mxu0 0.0
    %1858 = vmatpush1.msra.mxu0 0.0
    %1859 = vmatprep.subr.mxu0 0.0
    %1860 = vmatpush1.msra.mxu0 0.0
    %1861 = vmatprep.subr.mxu0 0.0
    %1862 = vmatpush1.msra.mxu0 0.0
    %1863 = vmatprep.subr.mxu0 0.0
    %1864 = vmatpush1.msra.mxu0 0.0
    %1865 = vmatprep.subr.mxu0 0.0
    %1866 = vmatpush1.msra.mxu0 0.0
    %1867 = vmatprep.subr.mxu0 0.0
    %1868 = vmatpush1.msra.mxu0 0.0
    %1869 = vmatprep.subr.mxu0 0.0
    %1870 = vmatpush1.msra.mxu0 0.0
    %1871 = vmatprep.subr.mxu0 0.0
    %1872 = vmatpush1.msra.mxu0 0.0
    %1873 = vmatprep.subr.mxu0 0.0
    %1874 = vmatpush1.msra.mxu0 0.0
    %1875 = vmatprep.subr.mxu0 0.0
    %1876 = vmatpush1.msra.mxu0 0.0
    %1877 = vmatprep.subr.mxu0 0.0
    %1878 = vmatpush1.msra.mxu0 0.0
    %1879 = vmatprep.subr.mxu0 0.0
    %1880 = vmatpush1.msra.mxu0 0.0
    %1881 = vmatprep.subr.mxu0 0.0
    %1882 = vmatpush1.msra.mxu0 0.0
    %1883 = vmatprep.subr.mxu0 0.0
    %1884 = vmatpush1.msra.mxu0 0.0
    %1885 = vmatprep.subr.mxu0 0.0
    %1886 = vmatpush1.msra.mxu0 0.0
    %1887 = vmatprep.subr.mxu0 0.0
    %1888 = vmatpush1.msra.mxu0 0.0
    %1889 = vmatprep.subr.mxu0 0.0
    %1890 = vmatpush1.msra.mxu0 0.0
    %1891 = vmatprep.subr.mxu0 0.0
    %1892 = vmatpush1.msra.mxu0 0.0
    %1893 = vmatprep.subr.mxu0 0.0
    %1894 = vmatpush1.msra.mxu0 0.0
    %1895 = vmatprep.subr.mxu0 0.0
    %1896 = vmatpush1.msra.mxu0 0.0
    %1897 = vmatprep.subr.mxu0 0.0
    %1898 = vmatpush1.msra.mxu0 0.0
    %1899 = vmatprep.mubr.f32.mxu0 0.0
    %1900 = vmatmul.mubr.f32.gmra.mrb[0].mxu0 %v1833
    %v1901 = vpop.f32.mrb[0].mxu0
    %v1902 = vadd.f32 0.0, %v1901
    %v1903 = vpop.f32.mrb[0].mxu0
    %1904 = vdwg.mxu0
    %v1905 = vadd.f32 %v1832, %v1902
    %v1906 = vmul.f32 %v1905, %v295
    %v1907 = vtanh.pop %v1906
    %v1908 = vadd.f32 %v1907, 1.0
    %v1909 = vmul.f32 %v1908, 0.5
    %v1910 = vmul.f32 %v1909, %v1820
    %1912 = vrot.lane.b32.xlu0 %v1907, 64
    %v1913 = vpop.permute.xlu0 %1912
    %v1915 = vmul.f32 %v1909, %v1913
    %1917 = vrot.lane.b32.xlu0 %v1915, 32
    %v1918 = vpop.permute.xlu0 %1917
    %v1920 = vadd.f32 %v1910, %v1918
    %v1921 = vtanh.pop %v1920
    %1923 = vrot.lane.b32.xlu0 %v1921, 64
    %v1924 = vpop.permute.xlu0 %1923
    %v1926 = vmul.f32 %v1909, %v1924
    %1928 = vrot.lane.b32.xlu0 %v1926, 32
    %v1929 = vpop.permute.xlu0 %1928
    %1931 = vst.msk [vmem:[%s963] sm:$0xff] %vm281, %v1929
    %v1932 = vld [vmem:[%s965] sm:$0xff]
    %v1933 = vsel %vm281, %v1929, 0
    %1935 = vmatprep.subr.mxu0 0.0
    %1936 = vmatpush1.msra.mxu0 %v1272
    %1937 = vmatprep.subr.mxu0 0.0
    %1938 = vmatpush1.msra.mxu0 %v1273
    %1939 = vmatprep.subr.mxu0 0.0
    %1940 = vmatpush1.msra.mxu0 %v1274
    %1941 = vmatprep.subr.mxu0 0.0
    %1942 = vmatpush1.msra.mxu0 %v1275
    %1943 = vmatprep.subr.mxu0 0.0
    %1944 = vmatpush1.msra.mxu0 0.0
    %1945 = vmatprep.subr.mxu0 0.0
    %1946 = vmatpush1.msra.mxu0 0.0
    %1947 = vmatprep.subr.mxu0 0.0
    %1948 = vmatpush1.msra.mxu0 0.0
    %1949 = vmatprep.subr.mxu0 0.0
    %1950 = vmatpush1.msra.mxu0 0.0
    %1951 = vmatprep.subr.mxu0 0.0
    %1952 = vmatpush1.msra.mxu0 0.0
    %1953 = vmatprep.subr.mxu0 0.0
    %1954 = vmatpush1.msra.mxu0 0.0
    %1955 = vmatprep.subr.mxu0 0.0
    %1956 = vmatpush1.msra.mxu0 0.0
    %1957 = vmatprep.subr.mxu0 0.0
    %1958 = vmatpush1.msra.mxu0 0.0
    %1959 = vmatprep.subr.mxu0 0.0
    %1960 = vmatpush1.msra.mxu0 0.0
    %1961 = vmatprep.subr.mxu0 0.0
    %1962 = vmatpush1.msra.mxu0 0.0
    %1963 = vmatprep.subr.mxu0 0.0
    %1964 = vmatpush1.msra.mxu0 0.0
    %1965 = vmatprep.subr.mxu0 0.0
    %1966 = vmatpush1.msra.mxu0 0.0
    %1967 = vmatprep.subr.mxu0 0.0
    %1968 = vmatpush1.msra.mxu0 0.0
    %1969 = vmatprep.subr.mxu0 0.0
    %1970 = vmatpush1.msra.mxu0 0.0
    %1971 = vmatprep.subr.mxu0 0.0
    %1972 = vmatpush1.msra.mxu0 0.0
    %1973 = vmatprep.subr.mxu0 0.0
    %1974 = vmatpush1.msra.mxu0 0.0
    %1975 = vmatprep.subr.mxu0 0.0
    %1976 = vmatpush1.msra.mxu0 0.0
    %1977 = vmatprep.subr.mxu0 0.0
    %1978 = vmatpush1.msra.mxu0 0.0
    %1979 = vmatprep.subr.mxu0 0.0
    %1980 = vmatpush1.msra.mxu0 0.0
    %1981 = vmatprep.subr.mxu0 0.0
    %1982 = vmatpush1.msra.mxu0 0.0
    %1983 = vmatprep.subr.mxu0 0.0
    %1984 = vmatpush1.msra.mxu0 0.0
    %1985 = vmatprep.subr.mxu0 0.0
    %1986 = vmatpush1.msra.mxu0 0.0
    %1987 = vmatprep.subr.mxu0 0.0
    %1988 = vmatpush1.msra.mxu0 0.0
    %1989 = vmatprep.subr.mxu0 0.0
    %1990 = vmatpush1.msra.mxu0 0.0
    %1991 = vmatprep.subr.mxu0 0.0
    %1992 = vmatpush1.msra.mxu0 0.0
    %1993 = vmatprep.subr.mxu0 0.0
    %1994 = vmatpush1.msra.mxu0 0.0
    %1995 = vmatprep.subr.mxu0 0.0
    %1996 = vmatpush1.msra.mxu0 0.0
    %1997 = vmatprep.subr.mxu0 0.0
    %1998 = vmatpush1.msra.mxu0 0.0
    %1999 = vmatprep.mubr.f32.mxu0 0.0
    %2000 = vmatmul.mubr.f32.gmra.mrb[0].mxu0 %v1933
    %v2001 = vpop.f32.mrb[0].mxu0
    %v2002 = vadd.f32 0.0, %v2001
    %v2003 = vpop.f32.mrb[0].mxu0
    %2004 = vdwg.mxu0
    %v2005 = vadd.f32 %v1932, %v2002
    %v2006 = vmul.f32 %v2005, %v295
    %v2007 = vtanh.pop %v2006
    %v2008 = vadd.f32 %v2007, 1.0
    %v2009 = vmul.f32 %v2008, 0.5
    %v2010 = vmul.f32 %v2009, %v1920
    %2012 = vrot.lane.b32.xlu0 %v2007, 64
    %v2013 = vpop.permute.xlu0 %2012
    %v2015 = vmul.f32 %v2009, %v2013
    %2017 = vrot.lane.b32.xlu0 %v2015, 32
    %v2018 = vpop.permute.xlu0 %2017
    %v2020 = vadd.f32 %v2010, %v2018
    %v2021 = vtanh.pop %v2020
    %2023 = vrot.lane.b32.xlu0 %v2021, 64
    %v2024 = vpop.permute.xlu0 %2023
    %v2026 = vmul.f32 %v2009, %v2024
    %2028 = vrot.lane.b32.xlu0 %v2026, 32
    %v2029 = vpop.permute.xlu0 %2028
    %2031 = vst.msk [vmem:[%s1065] sm:$0xff] %vm281, %v2029
    %v2032 = vld [vmem:[%s1067] sm:$0xff]
    %v2033 = vsel %vm281, %v2029, 0
    %2035 = vmatprep.subr.mxu0 0.0
    %2036 = vmatpush1.msra.mxu0 %v1272
    %2037 = vmatprep.subr.mxu0 0.0
    %2038 = vmatpush1.msra.mxu0 %v1273
    %2039 = vmatprep.subr.mxu0 0.0
    %2040 = vmatpush1.msra.mxu0 %v1274
    %2041 = vmatprep.subr.mxu0 0.0
    %2042 = vmatpush1.msra.mxu0 %v1275
    %2043 = vmatprep.subr.mxu0 0.0
    %2044 = vmatpush1.msra.mxu0 0.0
    %2045 = vmatprep.subr.mxu0 0.0
    %2046 = vmatpush1.msra.mxu0 0.0
    %2047 = vmatprep.subr.mxu0 0.0
    %2048 = vmatpush1.msra.mxu0 0.0
    %2049 = vmatprep.subr.mxu0 0.0
    %2050 = vmatpush1.msra.mxu0 0.0
    %2051 = vmatprep.subr.mxu0 0.0
    %2052 = vmatpush1.msra.mxu0 0.0
    %2053 = vmatprep.subr.mxu0 0.0
    %2054 = vmatpush1.msra.mxu0 0.0
    %2055 = vmatprep.subr.mxu0 0.0
    %2056 = vmatpush1.msra.mxu0 0.0
    %2057 = vmatprep.subr.mxu0 0.0
    %2058 = vmatpush1.msra.mxu0 0.0
    %2059 = vmatprep.subr.mxu0 0.0
    %2060 = vmatpush1.msra.mxu0 0.0
    %2061 = vmatprep.subr.mxu0 0.0
    %2062 = vmatpush1.msra.mxu0 0.0
    %2063 = vmatprep.subr.mxu0 0.0
    %2064 = vmatpush1.msra.mxu0 0.0
    %2065 = vmatprep.subr.mxu0 0.0
    %2066 = vmatpush1.msra.mxu0 0.0
    %2067 = vmatprep.subr.mxu0 0.0
    %2068 = vmatpush1.msra.mxu0 0.0
    %2069 = vmatprep.subr.mxu0 0.0
    %2070 = vmatpush1.msra.mxu0 0.0
    %2071 = vmatprep.subr.mxu0 0.0
    %2072 = vmatpush1.msra.mxu0 0.0
    %2073 = vmatprep.subr.mxu0 0.0
    %2074 = vmatpush1.msra.mxu0 0.0
    %2075 = vmatprep.subr.mxu0 0.0
    %2076 = vmatpush1.msra.mxu0 0.0
    %2077 = vmatprep.subr.mxu0 0.0
    %2078 = vmatpush1.msra.mxu0 0.0
    %2079 = vmatprep.subr.mxu0 0.0
    %2080 = vmatpush1.msra.mxu0 0.0
    %2081 = vmatprep.subr.mxu0 0.0
    %2082 = vmatpush1.msra.mxu0 0.0
    %2083 = vmatprep.subr.mxu0 0.0
    %2084 = vmatpush1.msra.mxu0 0.0
    %2085 = vmatprep.subr.mxu0 0.0
    %2086 = vmatpush1.msra.mxu0 0.0
    %2087 = vmatprep.subr.mxu0 0.0
    %2088 = vmatpush1.msra.mxu0 0.0
    %2089 = vmatprep.subr.mxu0 0.0
    %2090 = vmatpush1.msra.mxu0 0.0
    %2091 = vmatprep.subr.mxu0 0.0
    %2092 = vmatpush1.msra.mxu0 0.0
    %2093 = vmatprep.subr.mxu0 0.0
    %2094 = vmatpush1.msra.mxu0 0.0
    %2095 = vmatprep.subr.mxu0 0.0
    %2096 = vmatpush1.msra.mxu0 0.0
    %2097 = vmatprep.subr.mxu0 0.0
    %2098 = vmatpush1.msra.mxu0 0.0
    %2099 = vmatprep.mubr.f32.mxu0 0.0
    %2100 = vmatmul.mubr.f32.gmra.mrb[0].mxu0 %v2033
    %v2101 = vpop.f32.mrb[0].mxu0
    %v2102 = vadd.f32 0.0, %v2101
    %v2103 = vpop.f32.mrb[0].mxu0
    %2104 = vdwg.mxu0
    %v2105 = vadd.f32 %v2032, %v2102
    %v2106 = vmul.f32 %v2105, %v295
    %v2107 = vtanh.pop %v2106
    %v2108 = vadd.f32 %v2107, 1.0
    %v2109 = vmul.f32 %v2108, 0.5
    %v2110 = vmul.f32 %v2109, %v2020
    %2112 = vrot.lane.b32.xlu0 %v2107, 64
    %v2113 = vpop.permute.xlu0 %2112
    %v2115 = vmul.f32 %v2109, %v2113
    %2117 = vrot.lane.b32.xlu0 %v2115, 32
    %v2118 = vpop.permute.xlu0 %2117
    %v2120 = vadd.f32 %v2110, %v2118
    %v2121 = vtanh.pop %v2120
    %2123 = vrot.lane.b32.xlu0 %v2121, 64
    %v2124 = vpop.permute.xlu0 %2123
    %v2126 = vmul.f32 %v2109, %v2124
    %2128 = vrot.lane.b32.xlu0 %v2126, 32
    %v2129 = vpop.permute.xlu0 %2128
    %2131 = vst.msk [vmem:[%s1167] sm:$0xff] %vm281, %v2129
    %v2132 = vld [vmem:[%s1169] sm:$0xff]
    %v2133 = vsel %vm281, %v2129, 0
    %2135 = vmatprep.subr.mxu0 0.0
    %2136 = vmatpush1.msra.mxu0 %v1272
    %2137 = vmatprep.subr.mxu0 0.0
    %2138 = vmatpush1.msra.mxu0 %v1273
    %2139 = vmatprep.subr.mxu0 0.0
    %2140 = vmatpush1.msra.mxu0 %v1274
    %2141 = vmatprep.subr.mxu0 0.0
    %2142 = vmatpush1.msra.mxu0 %v1275
    %2143 = vmatprep.subr.mxu0 0.0
    %2144 = vmatpush1.msra.mxu0 0.0
    %2145 = vmatprep.subr.mxu0 0.0
    %2146 = vmatpush1.msra.mxu0 0.0
    %2147 = vmatprep.subr.mxu0 0.0
    %2148 = vmatpush1.msra.mxu0 0.0
    %2149 = vmatprep.subr.mxu0 0.0
    %2150 = vmatpush1.msra.mxu0 0.0
    %2151 = vmatprep.subr.mxu0 0.0
    %2152 = vmatpush1.msra.mxu0 0.0
    %2153 = vmatprep.subr.mxu0 0.0
    %2154 = vmatpush1.msra.mxu0 0.0
    %2155 = vmatprep.subr.mxu0 0.0
    %2156 = vmatpush1.msra.mxu0 0.0
    %2157 = vmatprep.subr.mxu0 0.0
    %2158 = vmatpush1.msra.mxu0 0.0
    %2159 = vmatprep.subr.mxu0 0.0
    %2160 = vmatpush1.msra.mxu0 0.0
    %2161 = vmatprep.subr.mxu0 0.0
    %2162 = vmatpush1.msra.mxu0 0.0
    %2163 = vmatprep.subr.mxu0 0.0
    %2164 = vmatpush1.msra.mxu0 0.0
    %2165 = vmatprep.subr.mxu0 0.0
    %2166 = vmatpush1.msra.mxu0 0.0
    %2167 = vmatprep.subr.mxu0 0.0
    %2168 = vmatpush1.msra.mxu0 0.0
    %2169 = vmatprep.subr.mxu0 0.0
    %2170 = vmatpush1.msra.mxu0 0.0
    %2171 = vmatprep.subr.mxu0 0.0
    %2172 = vmatpush1.msra.mxu0 0.0
    %2173 = vmatprep.subr.mxu0 0.0
    %2174 = vmatpush1.msra.mxu0 0.0
    %2175 = vmatprep.subr.mxu0 0.0
    %2176 = vmatpush1.msra.mxu0 0.0
    %2177 = vmatprep.subr.mxu0 0.0
    %2178 = vmatpush1.msra.mxu0 0.0
    %2179 = vmatprep.subr.mxu0 0.0
    %2180 = vmatpush1.msra.mxu0 0.0
    %2181 = vmatprep.subr.mxu0 0.0
    %2182 = vmatpush1.msra.mxu0 0.0
    %2183 = vmatprep.subr.mxu0 0.0
    %2184 = vmatpush1.msra.mxu0 0.0
    %2185 = vmatprep.subr.mxu0 0.0
    %2186 = vmatpush1.msra.mxu0 0.0
    %2187 = vmatprep.subr.mxu0 0.0
    %2188 = vmatpush1.msra.mxu0 0.0
    %2189 = vmatprep.subr.mxu0 0.0
    %2190 = vmatpush1.msra.mxu0 0.0
    %2191 = vmatprep.subr.mxu0 0.0
    %2192 = vmatpush1.msra.mxu0 0.0
    %2193 = vmatprep.subr.mxu0 0.0
    %2194 = vmatpush1.msra.mxu0 0.0
    %2195 = vmatprep.subr.mxu0 0.0
    %2196 = vmatpush1.msra.mxu0 0.0
    %2197 = vmatprep.subr.mxu0 0.0
    %2198 = vmatpush1.msra.mxu0 0.0
    %2199 = vmatprep.mubr.f32.mxu0 0.0
    %2200 = vmatmul.mubr.f32.gmra.mrb[0].mxu0 %v2133
    %v2201 = vpop.f32.mrb[0].mxu0
    %v2202 = vadd.f32 0.0, %v2201
    %v2203 = vpop.f32.mrb[0].mxu0
    %2204 = vdwg.mxu0
    %v2205 = vadd.f32 %v2132, %v2202
    %v2206 = vmul.f32 %v2205, %v295
    %v2207 = vtanh.pop %v2206
    %v2208 = vadd.f32 %v2207, 1.0
    %v2209 = vmul.f32 %v2208, 0.5
    %v2210 = vmul.f32 %v2209, %v2120
    %2212 = vrot.lane.b32.xlu0 %v2207, 64
    %v2213 = vpop.permute.xlu0 %2212
    %v2215 = vmul.f32 %v2209, %v2213
    %2217 = vrot.lane.b32.xlu0 %v2215, 32
    %v2218 = vpop.permute.xlu0 %2217
    %v2220 = vadd.f32 %v2210, %v2218
    %v2221 = vtanh.pop %v2220
    %2223 = vrot.lane.b32.xlu0 %v2221, 64
    %v2224 = vpop.permute.xlu0 %2223
    %v2226 = vmul.f32 %v2209, %v2224
    %2228 = vrot.lane.b32.xlu0 %v2226, 32
    %v2229 = vpop.permute.xlu0 %2228
    %2231 = vst.msk [vmem:[%s1269] sm:$0xff] %vm281, %v2229
    %s2232 = scalar_lea.vmem [#allocation4], 64
    %v2233 = vld [vmem:[%s2232] sm:$0xff]
    %v2234 = vld [vmem:[%s2232 + $0x8] sm:$0xff]
    %v2235 = vld [vmem:[%s2232 + $0x10] sm:$0xff]
    %v2236 = vld [vmem:[%s2232 + $0x18] sm:$0xff]
    %v2237 = vld [vmem:[#allocation2] sm:$0xff]
    %v2238 = vld [vmem:[#allocation2 + $0x8] sm:$0xff]
    %v2239 = vld [vmem:[#allocation2 + $0x10] sm:$0xff]
    %v2240 = vld [vmem:[#allocation2 + $0x18] sm:$0xff]
    %v2241 = vld [vmem:[#allocation2 + $0x20] sm:$0xff]
    %v2242 = vld [vmem:[#allocation2 + $0x28] sm:$0xff]
    %v2243 = vld [vmem:[#allocation2 + $0x30] sm:$0xff]
    %v2244 = vld [vmem:[#allocation2 + $0x38] sm:$0xff]
    %s2245 = scalar_lea.vmem %s3, 64
    %v2246 = vld [vmem:[%s2245] sm:$0xff]
    %v2247 = vld [vmem:[%s2245 + $0x8] sm:$0xff]
    %v2248 = vld [vmem:[%s2245 + $0x10] sm:$0xff]
    %v2249 = vld [vmem:[%s2245 + $0x18] sm:$0xff]
    %s2250 = scalar_lea.vmem %s5, 2
    %v2251 = vld [vmem:[%s2250] sm:$0x1]
    %v2253 = vlaneseq
    %v2254 = vshrl.u32 %v2253, 7
    %v2255 = vsub.s32 0, %v2254
    %v2256 = vrot.slane %v2251, %v2255
    %v2259 = vsel %vm281, %v2237, 0
    %v2262 = vsel %vm281, %v2238, 0
    %v2265 = vsel %vm281, %v2239, 0
    %v2268 = vsel %vm281, %v2240, 0
    %v2271 = vsel %vm281, %v2241, 0
    %v2274 = vsel %vm281, %v2242, 0
    %v2277 = vsel %vm281, %v2243, 0
    %v2280 = vsel %vm281, %v2244, 0
    %2282 = vmatprep.subr.mxu0 0.0
    %2283 = vmatpush1.msra.mxu0 %v2246
    %2284 = vmatprep.subr.mxu0 0.0
    %2285 = vmatpush1.msra.mxu0 %v2247
    %2286 = vmatprep.subr.mxu0 0.0
    %2287 = vmatpush1.msra.mxu0 %v2248
    %2288 = vmatprep.subr.mxu0 0.0
    %2289 = vmatpush1.msra.mxu0 %v2249
    %2290 = vmatprep.subr.mxu0 0.0
    %2291 = vmatpush1.msra.mxu0 0.0
    %2292 = vmatprep.subr.mxu0 0.0
    %2293 = vmatpush1.msra.mxu0 0.0
    %2294 = vmatprep.subr.mxu0 0.0
    %2295 = vmatpush1.msra.mxu0 0.0
    %2296 = vmatprep.subr.mxu0 0.0
    %2297 = vmatpush1.msra.mxu0 0.0
    %2298 = vmatprep.subr.mxu0 0.0
    %2299 = vmatpush1.msra.mxu0 0.0
    %2300 = vmatprep.subr.mxu0 0.0
    %2301 = vmatpush1.msra.mxu0 0.0
    %2302 = vmatprep.subr.mxu0 0.0
    %2303 = vmatpush1.msra.mxu0 0.0
    %2304 = vmatprep.subr.mxu0 0.0
    %2305 = vmatpush1.msra.mxu0 0.0
    %2306 = vmatprep.subr.mxu0 0.0
    %2307 = vmatpush1.msra.mxu0 0.0
    %2308 = vmatprep.subr.mxu0 0.0
    %2309 = vmatpush1.msra.mxu0 0.0
    %2310 = vmatprep.subr.mxu0 0.0
    %2311 = vmatpush1.msra.mxu0 0.0
    %2312 = vmatprep.subr.mxu0 0.0
    %2313 = vmatpush1.msra.mxu0 0.0
    %2314 = vmatprep.subr.mxu0 0.0
    %2315 = vmatpush1.msra.mxu0 0.0
    %2316 = vmatprep.subr.mxu0 0.0
    %2317 = vmatpush1.msra.mxu0 0.0
    %2318 = vmatprep.subr.mxu0 0.0
    %2319 = vmatpush1.msra.mxu0 0.0
    %2320 = vmatprep.subr.mxu0 0.0
    %2321 = vmatpush1.msra.mxu0 0.0
    %2322 = vmatprep.subr.mxu0 0.0
    %2323 = vmatpush1.msra.mxu0 0.0
    %2324 = vmatprep.subr.mxu0 0.0
    %2325 = vmatpush1.msra.mxu0 0.0
    %2326 = vmatprep.subr.mxu0 0.0
    %2327 = vmatpush1.msra.mxu0 0.0
    %2328 = vmatprep.subr.mxu0 0.0
    %2329 = vmatpush1.msra.mxu0 0.0
    %2330 = vmatprep.subr.mxu0 0.0
    %2331 = vmatpush1.msra.mxu0 0.0
    %2332 = vmatprep.subr.mxu0 0.0
    %2333 = vmatpush1.msra.mxu0 0.0
    %2334 = vmatprep.subr.mxu0 0.0
    %2335 = vmatpush1.msra.mxu0 0.0
    %2336 = vmatprep.subr.mxu0 0.0
    %2337 = vmatpush1.msra.mxu0 0.0
    %2338 = vmatprep.subr.mxu0 0.0
    %2339 = vmatpush1.msra.mxu0 0.0
    %2340 = vmatprep.subr.mxu0 0.0
    %2341 = vmatpush1.msra.mxu0 0.0
    %2342 = vmatprep.subr.mxu0 0.0
    %2343 = vmatpush1.msra.mxu0 0.0
    %2344 = vmatprep.subr.mxu0 0.0
    %2345 = vmatpush1.msra.mxu0 0.0
    %2346 = vmatprep.mubr.f32.mxu0 0.0
    %2347 = vmatmul.mubr.f32.gmra.mrb[0].mxu0 %v2259
    %v2348 = vpop.f32.mrb[0].mxu0
    %v2349 = vadd.f32 %v2256, %v2348
    %v2350 = vpop.f32.mrb[0].mxu0
    %2351 = vmatprep.mubr.f32.mxu0 0.0
    %2352 = vmatmul.mubr.f32.gmra.mrb[0].mxu0 %v2262
    %v2353 = vpop.f32.mrb[0].mxu0
    %v2354 = vadd.f32 %v2256, %v2353
    %v2355 = vpop.f32.mrb[0].mxu0
    %2356 = vmatprep.mubr.f32.mxu0 0.0
    %2357 = vmatmul.mubr.f32.gmra.mrb[0].mxu0 %v2265
    %v2358 = vpop.f32.mrb[0].mxu0
    %v2359 = vadd.f32 %v2256, %v2358
    %v2360 = vpop.f32.mrb[0].mxu0
    %2361 = vmatprep.mubr.f32.mxu0 0.0
    %2362 = vmatmul.mubr.f32.gmra.mrb[0].mxu0 %v2268
    %v2363 = vpop.f32.mrb[0].mxu0
    %v2364 = vadd.f32 %v2256, %v2363
    %v2365 = vpop.f32.mrb[0].mxu0
    %2366 = vmatprep.mubr.f32.mxu0 0.0
    %2367 = vmatmul.mubr.f32.gmra.mrb[0].mxu0 %v2271
    %v2368 = vpop.f32.mrb[0].mxu0
    %v2369 = vadd.f32 %v2256, %v2368
    %v2370 = vpop.f32.mrb[0].mxu0
    %2371 = vmatprep.mubr.f32.mxu0 0.0
    %2372 = vmatmul.mubr.f32.gmra.mrb[0].mxu0 %v2274
    %v2373 = vpop.f32.mrb[0].mxu0
    %v2374 = vadd.f32 %v2256, %v2373
    %v2375 = vpop.f32.mrb[0].mxu0
    %2376 = vmatprep.mubr.f32.mxu0 0.0
    %2377 = vmatmul.mubr.f32.gmra.mrb[0].mxu0 %v2277
    %v2378 = vpop.f32.mrb[0].mxu0
    %v2379 = vadd.f32 %v2256, %v2378
    %v2380 = vpop.f32.mrb[0].mxu0
    %2381 = vmatprep.mubr.f32.mxu0 0.0
    %2382 = vmatmul.mubr.f32.gmra.mrb[0].mxu0 %v2280
    %v2383 = vpop.f32.mrb[0].mxu0
    %v2384 = vadd.f32 %v2256, %v2383
    %v2385 = vpop.f32.mrb[0].mxu0
    %2386 = vdwg.mxu0
    %2387 = vst [vmem:[#allocation3] sm:$0xff] %v2349
    %2388 = vst [vmem:[#allocation3 + $0x8] sm:$0xff] %v2354
    %2389 = vst [vmem:[#allocation3 + $0x10] sm:$0xff] %v2359
    %2390 = vst [vmem:[#allocation3 + $0x18] sm:$0xff] %v2364
    %2391 = vst [vmem:[#allocation3 + $0x20] sm:$0xff] %v2369
    %2392 = vst [vmem:[#allocation3 + $0x28] sm:$0xff] %v2374
    %2393 = vst [vmem:[#allocation3 + $0x30] sm:$0xff] %v2379
    %2394 = vst [vmem:[#allocation3 + $0x38] sm:$0xff] %v2384
    %v2395 = vld [vmem:[#allocation3] sm:$0xff]
    %2396 = vmatprep.subr.mxu0 0.0
    %2397 = vmatpush1.msra.mxu0 %v2233
    %2398 = vmatprep.subr.mxu0 0.0
    %2399 = vmatpush1.msra.mxu0 %v2234
    %2400 = vmatprep.subr.mxu0 0.0
    %2401 = vmatpush1.msra.mxu0 %v2235
    %2402 = vmatprep.subr.mxu0 0.0
    %2403 = vmatpush1.msra.mxu0 %v2236
    %2404 = vmatprep.subr.mxu0 0.0
    %2405 = vmatpush1.msra.mxu0 0.0
    %2406 = vmatprep.subr.mxu0 0.0
    %2407 = vmatpush1.msra.mxu0 0.0
    %2408 = vmatprep.subr.mxu0 0.0
    %2409 = vmatpush1.msra.mxu0 0.0
    %2410 = vmatprep.subr.mxu0 0.0
    %2411 = vmatpush1.msra.mxu0 0.0
    %2412 = vmatprep.subr.mxu0 0.0
    %2413 = vmatpush1.msra.mxu0 0.0
    %2414 = vmatprep.subr.mxu0 0.0
    %2415 = vmatpush1.msra.mxu0 0.0
    %2416 = vmatprep.subr.mxu0 0.0
    %2417 = vmatpush1.msra.mxu0 0.0
    %2418 = vmatprep.subr.mxu0 0.0
    %2419 = vmatpush1.msra.mxu0 0.0
    %2420 = vmatprep.subr.mxu0 0.0
    %2421 = vmatpush1.msra.mxu0 0.0
    %2422 = vmatprep.subr.mxu0 0.0
    %2423 = vmatpush1.msra.mxu0 0.0
    %2424 = vmatprep.subr.mxu0 0.0
    %2425 = vmatpush1.msra.mxu0 0.0
    %2426 = vmatprep.subr.mxu0 0.0
    %2427 = vmatpush1.msra.mxu0 0.0
    %2428 = vmatprep.subr.mxu0 0.0
    %2429 = vmatpush1.msra.mxu0 0.0
    %2430 = vmatprep.subr.mxu0 0.0
    %2431 = vmatpush1.msra.mxu0 0.0
    %2432 = vmatprep.subr.mxu0 0.0
    %2433 = vmatpush1.msra.mxu0 0.0
    %2434 = vmatprep.subr.mxu0 0.0
    %2435 = vmatpush1.msra.mxu0 0.0
    %2436 = vmatprep.subr.mxu0 0.0
    %2437 = vmatpush1.msra.mxu0 0.0
    %2438 = vmatprep.subr.mxu0 0.0
    %2439 = vmatpush1.msra.mxu0 0.0
    %2440 = vmatprep.subr.mxu0 0.0
    %2441 = vmatpush1.msra.mxu0 0.0
    %2442 = vmatprep.subr.mxu0 0.0
    %2443 = vmatpush1.msra.mxu0 0.0
    %2444 = vmatprep.subr.mxu0 0.0
    %2445 = vmatpush1.msra.mxu0 0.0
    %2446 = vmatprep.subr.mxu0 0.0
    %2447 = vmatpush1.msra.mxu0 0.0
    %2448 = vmatprep.subr.mxu0 0.0
    %2449 = vmatpush1.msra.mxu0 0.0
    %2450 = vmatprep.subr.mxu0 0.0
    %2451 = vmatpush1.msra.mxu0 0.0
    %2452 = vmatprep.subr.mxu0 0.0
    %2453 = vmatpush1.msra.mxu0 0.0
    %2454 = vmatprep.subr.mxu0 0.0
    %2455 = vmatpush1.msra.mxu0 0.0
    %2456 = vmatprep.subr.mxu0 0.0
    %2457 = vmatpush1.msra.mxu0 0.0
    %2458 = vmatprep.subr.mxu0 0.0
    %2459 = vmatpush1.msra.mxu0 0.0
    %2460 = vmatprep.mubr.f32.mxu0 0.0
    %2461 = vmatmul.mubr.f32.gmra.mrb[0].mxu0 %v458
    %v2462 = vpop.f32.mrb[0].mxu0
    %v2463 = vadd.f32 0.0, %v2462
    %v2464 = vpop.f32.mrb[0].mxu0
    %2465 = vdwg.mxu0
    %v2466 = vadd.f32 %v2395, %v2463
    %v2467 = vmul.f32 %v2466, %v295
    %v2468 = vtanh.pop %v2467
    %v2469 = vadd.f32 %v2468, 1.0
    %v2470 = vmul.f32 %v2469, 0.5
    %v2471 = vmul.f32 %v2470, 0.0
    %2473 = vrot.lane.b32.xlu0 %v2468, 64
    %v2474 = vpop.permute.xlu0 %2473
    %v2476 = vmul.f32 %v2470, %v2474
    %2478 = vrot.lane.b32.xlu0 %v2476, 32
    %v2479 = vpop.permute.xlu0 %2478
    %v2481 = vadd.f32 %v2471, %v2479
    %v2482 = vtanh.pop %v2481
    %2484 = vrot.lane.b32.xlu0 %v2482, 64
    %v2485 = vpop.permute.xlu0 %2484
    %v2487 = vmul.f32 %v2470, %v2485
    %2489 = vrot.lane.b32.xlu0 %v2487, 32
    %v2490 = vpop.permute.xlu0 %2489
    %2492 = vst.msk [vmem:[#allocation2] sm:$0xff] %vm281, %v2490
    %v2493 = vld [vmem:[%s557] sm:$0xff]
    %v2494 = vsel %vm281, %v2490, 0
    %2496 = vmatprep.subr.mxu0 0.0
    %2497 = vmatpush1.msra.mxu0 %v2233
    %2498 = vmatprep.subr.mxu0 0.0
    %2499 = vmatpush1.msra.mxu0 %v2234
    %2500 = vmatprep.subr.mxu0 0.0
    %2501 = vmatpush1.msra.mxu0 %v2235
    %2502 = vmatprep.subr.mxu0 0.0
    %2503 = vmatpush1.msra.mxu0 %v2236
    %2504 = vmatprep.subr.mxu0 0.0
    %2505 = vmatpush1.msra.mxu0 0.0
    %2506 = vmatprep.subr.mxu0 0.0
    %2507 = vmatpush1.msra.mxu0 0.0
    %2508 = vmatprep.subr.mxu0 0.0
    %2509 = vmatpush1.msra.mxu0 0.0
    %2510 = vmatprep.subr.mxu0 0.0
    %2511 = vmatpush1.msra.mxu0 0.0
    %2512 = vmatprep.subr.mxu0 0.0
    %2513 = vmatpush1.msra.mxu0 0.0
    %2514 = vmatprep.subr.mxu0 0.0
    %2515 = vmatpush1.msra.mxu0 0.0
    %2516 = vmatprep.subr.mxu0 0.0
    %2517 = vmatpush1.msra.mxu0 0.0
    %2518 = vmatprep.subr.mxu0 0.0
    %2519 = vmatpush1.msra.mxu0 0.0
    %2520 = vmatprep.subr.mxu0 0.0
    %2521 = vmatpush1.msra.mxu0 0.0
    %2522 = vmatprep.subr.mxu0 0.0
    %2523 = vmatpush1.msra.mxu0 0.0
    %2524 = vmatprep.subr.mxu0 0.0
    %2525 = vmatpush1.msra.mxu0 0.0
    %2526 = vmatprep.subr.mxu0 0.0
    %2527 = vmatpush1.msra.mxu0 0.0
    %2528 = vmatprep.subr.mxu0 0.0
    %2529 = vmatpush1.msra.mxu0 0.0
    %2530 = vmatprep.subr.mxu0 0.0
    %2531 = vmatpush1.msra.mxu0 0.0
    %2532 = vmatprep.subr.mxu0 0.0
    %2533 = vmatpush1.msra.mxu0 0.0
    %2534 = vmatprep.subr.mxu0 0.0
    %2535 = vmatpush1.msra.mxu0 0.0
    %2536 = vmatprep.subr.mxu0 0.0
    %2537 = vmatpush1.msra.mxu0 0.0
    %2538 = vmatprep.subr.mxu0 0.0
    %2539 = vmatpush1.msra.mxu0 0.0
    %2540 = vmatprep.subr.mxu0 0.0
    %2541 = vmatpush1.msra.mxu0 0.0
    %2542 = vmatprep.subr.mxu0 0.0
    %2543 = vmatpush1.msra.mxu0 0.0
    %2544 = vmatprep.subr.mxu0 0.0
    %2545 = vmatpush1.msra.mxu0 0.0
    %2546 = vmatprep.subr.mxu0 0.0
    %2547 = vmatpush1.msra.mxu0 0.0
    %2548 = vmatprep.subr.mxu0 0.0
    %2549 = vmatpush1.msra.mxu0 0.0
    %2550 = vmatprep.subr.mxu0 0.0
    %2551 = vmatpush1.msra.mxu0 0.0
    %2552 = vmatprep.subr.mxu0 0.0
    %2553 = vmatpush1.msra.mxu0 0.0
    %2554 = vmatprep.subr.mxu0 0.0
    %2555 = vmatpush1.msra.mxu0 0.0
    %2556 = vmatprep.subr.mxu0 0.0
    %2557 = vmatpush1.msra.mxu0 0.0
    %2558 = vmatprep.subr.mxu0 0.0
    %2559 = vmatpush1.msra.mxu0 0.0
    %2560 = vmatprep.mubr.f32.mxu0 0.0
    %2561 = vmatmul.mubr.f32.gmra.mrb[0].mxu0 %v2494
    %v2562 = vpop.f32.mrb[0].mxu0
    %v2563 = vadd.f32 0.0, %v2562
    %v2564 = vpop.f32.mrb[0].mxu0
    %2565 = vdwg.mxu0
    %v2566 = vadd.f32 %v2493, %v2563
    %v2567 = vmul.f32 %v2566, %v295
    %v2568 = vtanh.pop %v2567
    %v2569 = vadd.f32 %v2568, 1.0
    %v2570 = vmul.f32 %v2569, 0.5
    %v2571 = vmul.f32 %v2570, %v2481
    %2573 = vrot.lane.b32.xlu0 %v2568, 64
    %v2574 = vpop.permute.xlu0 %2573
    %v2576 = vmul.f32 %v2570, %v2574
    %2578 = vrot.lane.b32.xlu0 %v2576, 32
    %v2579 = vpop.permute.xlu0 %2578
    %v2581 = vadd.f32 %v2571, %v2579
    %v2582 = vtanh.pop %v2581
    %2584 = vrot.lane.b32.xlu0 %v2582, 64
    %v2585 = vpop.permute.xlu0 %2584
    %v2587 = vmul.f32 %v2570, %v2585
    %2589 = vrot.lane.b32.xlu0 %v2587, 32
    %v2590 = vpop.permute.xlu0 %2589
    %2592 = vst.msk [vmem:[%s657] sm:$0xff] %vm281, %v2590
    %v2593 = vld [vmem:[%s659] sm:$0xff]
    %v2594 = vsel %vm281, %v2590, 0
    %2596 = vmatprep.subr.mxu0 0.0
    %2597 = vmatpush1.msra.mxu0 %v2233
    %2598 = vmatprep.subr.mxu0 0.0
    %2599 = vmatpush1.msra.mxu0 %v2234
    %2600 = vmatprep.subr.mxu0 0.0
    %2601 = vmatpush1.msra.mxu0 %v2235
    %2602 = vmatprep.subr.mxu0 0.0
    %2603 = vmatpush1.msra.mxu0 %v2236
    %2604 = vmatprep.subr.mxu0 0.0
    %2605 = vmatpush1.msra.mxu0 0.0
    %2606 = vmatprep.subr.mxu0 0.0
    %2607 = vmatpush1.msra.mxu0 0.0
    %2608 = vmatprep.subr.mxu0 0.0
    %2609 = vmatpush1.msra.mxu0 0.0
    %2610 = vmatprep.subr.mxu0 0.0
    %2611 = vmatpush1.msra.mxu0 0.0
    %2612 = vmatprep.subr.mxu0 0.0
    %2613 = vmatpush1.msra.mxu0 0.0
    %2614 = vmatprep.subr.mxu0 0.0
    %2615 = vmatpush1.msra.mxu0 0.0
    %2616 = vmatprep.subr.mxu0 0.0
    %2617 = vmatpush1.msra.mxu0 0.0
    %2618 = vmatprep.subr.mxu0 0.0
    %2619 = vmatpush1.msra.mxu0 0.0
    %2620 = vmatprep.subr.mxu0 0.0
    %2621 = vmatpush1.msra.mxu0 0.0
    %2622 = vmatprep.subr.mxu0 0.0
    %2623 = vmatpush1.msra.mxu0 0.0
    %2624 = vmatprep.subr.mxu0 0.0
    %2625 = vmatpush1.msra.mxu0 0.0
    %2626 = vmatprep.subr.mxu0 0.0
    %2627 = vmatpush1.msra.mxu0 0.0
    %2628 = vmatprep.subr.mxu0 0.0
    %2629 = vmatpush1.msra.mxu0 0.0
    %2630 = vmatprep.subr.mxu0 0.0
    %2631 = vmatpush1.msra.mxu0 0.0
    %2632 = vmatprep.subr.mxu0 0.0
    %2633 = vmatpush1.msra.mxu0 0.0
    %2634 = vmatprep.subr.mxu0 0.0
    %2635 = vmatpush1.msra.mxu0 0.0
    %2636 = vmatprep.subr.mxu0 0.0
    %2637 = vmatpush1.msra.mxu0 0.0
    %2638 = vmatprep.subr.mxu0 0.0
    %2639 = vmatpush1.msra.mxu0 0.0
    %2640 = vmatprep.subr.mxu0 0.0
    %2641 = vmatpush1.msra.mxu0 0.0
    %2642 = vmatprep.subr.mxu0 0.0
    %2643 = vmatpush1.msra.mxu0 0.0
    %2644 = vmatprep.subr.mxu0 0.0
    %2645 = vmatpush1.msra.mxu0 0.0
    %2646 = vmatprep.subr.mxu0 0.0
    %2647 = vmatpush1.msra.mxu0 0.0
    %2648 = vmatprep.subr.mxu0 0.0
    %2649 = vmatpush1.msra.mxu0 0.0
    %2650 = vmatprep.subr.mxu0 0.0
    %2651 = vmatpush1.msra.mxu0 0.0
    %2652 = vmatprep.subr.mxu0 0.0
    %2653 = vmatpush1.msra.mxu0 0.0
    %2654 = vmatprep.subr.mxu0 0.0
    %2655 = vmatpush1.msra.mxu0 0.0
    %2656 = vmatprep.subr.mxu0 0.0
    %2657 = vmatpush1.msra.mxu0 0.0
    %2658 = vmatprep.subr.mxu0 0.0
    %2659 = vmatpush1.msra.mxu0 0.0
    %2660 = vmatprep.mubr.f32.mxu0 0.0
    %2661 = vmatmul.mubr.f32.gmra.mrb[0].mxu0 %v2594
    %v2662 = vpop.f32.mrb[0].mxu0
    %v2663 = vadd.f32 0.0, %v2662
    %v2664 = vpop.f32.mrb[0].mxu0
    %2665 = vdwg.mxu0
    %v2666 = vadd.f32 %v2593, %v2663
    %v2667 = vmul.f32 %v2666, %v295
    %v2668 = vtanh.pop %v2667
    %v2669 = vadd.f32 %v2668, 1.0
    %v2670 = vmul.f32 %v2669, 0.5
    %v2671 = vmul.f32 %v2670, %v2581
    %2673 = vrot.lane.b32.xlu0 %v2668, 64
    %v2674 = vpop.permute.xlu0 %2673
    %v2676 = vmul.f32 %v2670, %v2674
    %2678 = vrot.lane.b32.xlu0 %v2676, 32
    %v2679 = vpop.permute.xlu0 %2678
    %v2681 = vadd.f32 %v2671, %v2679
    %v2682 = vtanh.pop %v2681
    %2684 = vrot.lane.b32.xlu0 %v2682, 64
    %v2685 = vpop.permute.xlu0 %2684
    %v2687 = vmul.f32 %v2670, %v2685
    %2689 = vrot.lane.b32.xlu0 %v2687, 32
    %v2690 = vpop.permute.xlu0 %2689
    %2692 = vst.msk [vmem:[%s759] sm:$0xff] %vm281, %v2690
    %v2693 = vld [vmem:[%s761] sm:$0xff]
    %v2694 = vsel %vm281, %v2690, 0
    %2696 = vmatprep.subr.mxu0 0.0
    %2697 = vmatpush1.msra.mxu0 %v2233
    %2698 = vmatprep.subr.mxu0 0.0
    %2699 = vmatpush1.msra.mxu0 %v2234
    %2700 = vmatprep.subr.mxu0 0.0
    %2701 = vmatpush1.msra.mxu0 %v2235
    %2702 = vmatprep.subr.mxu0 0.0
    %2703 = vmatpush1.msra.mxu0 %v2236
    %2704 = vmatprep.subr.mxu0 0.0
    %2705 = vmatpush1.msra.mxu0 0.0
    %2706 = vmatprep.subr.mxu0 0.0
    %2707 = vmatpush1.msra.mxu0 0.0
    %2708 = vmatprep.subr.mxu0 0.0
    %2709 = vmatpush1.msra.mxu0 0.0
    %2710 = vmatprep.subr.mxu0 0.0
    %2711 = vmatpush1.msra.mxu0 0.0
    %2712 = vmatprep.subr.mxu0 0.0
    %2713 = vmatpush1.msra.mxu0 0.0
    %2714 = vmatprep.subr.mxu0 0.0
    %2715 = vmatpush1.msra.mxu0 0.0
    %2716 = vmatprep.subr.mxu0 0.0
    %2717 = vmatpush1.msra.mxu0 0.0
    %2718 = vmatprep.subr.mxu0 0.0
    %2719 = vmatpush1.msra.mxu0 0.0
    %2720 = vmatprep.subr.mxu0 0.0
    %2721 = vmatpush1.msra.mxu0 0.0
    %2722 = vmatprep.subr.mxu0 0.0
    %2723 = vmatpush1.msra.mxu0 0.0
    %2724 = vmatprep.subr.mxu0 0.0
    %2725 = vmatpush1.msra.mxu0 0.0
    %2726 = vmatprep.subr.mxu0 0.0
    %2727 = vmatpush1.msra.mxu0 0.0
    %2728 = vmatprep.subr.mxu0 0.0
    %2729 = vmatpush1.msra.mxu0 0.0
    %2730 = vmatprep.subr.mxu0 0.0
    %2731 = vmatpush1.msra.mxu0 0.0
    %2732 = vmatprep.subr.mxu0 0.0
    %2733 = vmatpush1.msra.mxu0 0.0
    %2734 = vmatprep.subr.mxu0 0.0
    %2735 = vmatpush1.msra.mxu0 0.0
    %2736 = vmatprep.subr.mxu0 0.0
    %2737 = vmatpush1.msra.mxu0 0.0
    %2738 = vmatprep.subr.mxu0 0.0
    %2739 = vmatpush1.msra.mxu0 0.0
    %2740 = vmatprep.subr.mxu0 0.0
    %2741 = vmatpush1.msra.mxu0 0.0
    %2742 = vmatprep.subr.mxu0 0.0
    %2743 = vmatpush1.msra.mxu0 0.0
    %2744 = vmatprep.subr.mxu0 0.0
    %2745 = vmatpush1.msra.mxu0 0.0
    %2746 = vmatprep.subr.mxu0 0.0
    %2747 = vmatpush1.msra.mxu0 0.0
    %2748 = vmatprep.subr.mxu0 0.0
    %2749 = vmatpush1.msra.mxu0 0.0
    %2750 = vmatprep.subr.mxu0 0.0
    %2751 = vmatpush1.msra.mxu0 0.0
    %2752 = vmatprep.subr.mxu0 0.0
    %2753 = vmatpush1.msra.mxu0 0.0
    %2754 = vmatprep.subr.mxu0 0.0
    %2755 = vmatpush1.msra.mxu0 0.0
    %2756 = vmatprep.subr.mxu0 0.0
    %2757 = vmatpush1.msra.mxu0 0.0
    %2758 = vmatprep.subr.mxu0 0.0
    %2759 = vmatpush1.msra.mxu0 0.0
    %2760 = vmatprep.mubr.f32.mxu0 0.0
    %2761 = vmatmul.mubr.f32.gmra.mrb[0].mxu0 %v2694
    %v2762 = vpop.f32.mrb[0].mxu0
    %v2763 = vadd.f32 0.0, %v2762
    %v2764 = vpop.f32.mrb[0].mxu0
    %2765 = vdwg.mxu0
    %v2766 = vadd.f32 %v2693, %v2763
    %v2767 = vmul.f32 %v2766, %v295
    %v2768 = vtanh.pop %v2767
    %v2769 = vadd.f32 %v2768, 1.0
    %v2770 = vmul.f32 %v2769, 0.5
    %v2771 = vmul.f32 %v2770, %v2681
    %2773 = vrot.lane.b32.xlu0 %v2768, 64
    %v2774 = vpop.permute.xlu0 %2773
    %v2776 = vmul.f32 %v2770, %v2774
    %2778 = vrot.lane.b32.xlu0 %v2776, 32
    %v2779 = vpop.permute.xlu0 %2778
    %v2781 = vadd.f32 %v2771, %v2779
    %v2782 = vtanh.pop %v2781
    %2784 = vrot.lane.b32.xlu0 %v2782, 64
    %v2785 = vpop.permute.xlu0 %2784
    %v2787 = vmul.f32 %v2770, %v2785
    %2789 = vrot.lane.b32.xlu0 %v2787, 32
    %v2790 = vpop.permute.xlu0 %2789
    %2792 = vst.msk [vmem:[%s861] sm:$0xff] %vm281, %v2790
    %v2793 = vld [vmem:[%s863] sm:$0xff]
    %v2794 = vsel %vm281, %v2790, 0
    %2796 = vmatprep.subr.mxu0 0.0
    %2797 = vmatpush1.msra.mxu0 %v2233
    %2798 = vmatprep.subr.mxu0 0.0
    %2799 = vmatpush1.msra.mxu0 %v2234
    %2800 = vmatprep.subr.mxu0 0.0
    %2801 = vmatpush1.msra.mxu0 %v2235
    %2802 = vmatprep.subr.mxu0 0.0
    %2803 = vmatpush1.msra.mxu0 %v2236
    %2804 = vmatprep.subr.mxu0 0.0
    %2805 = vmatpush1.msra.mxu0 0.0
    %2806 = vmatprep.subr.mxu0 0.0
    %2807 = vmatpush1.msra.mxu0 0.0
    %2808 = vmatprep.subr.mxu0 0.0
    %2809 = vmatpush1.msra.mxu0 0.0
    %2810 = vmatprep.subr.mxu0 0.0
    %2811 = vmatpush1.msra.mxu0 0.0
    %2812 = vmatprep.subr.mxu0 0.0
    %2813 = vmatpush1.msra.mxu0 0.0
    %2814 = vmatprep.subr.mxu0 0.0
    %2815 = vmatpush1.msra.mxu0 0.0
    %2816 = vmatprep.subr.mxu0 0.0
    %2817 = vmatpush1.msra.mxu0 0.0
    %2818 = vmatprep.subr.mxu0 0.0
    %2819 = vmatpush1.msra.mxu0 0.0
    %2820 = vmatprep.subr.mxu0 0.0
    %2821 = vmatpush1.msra.mxu0 0.0
    %2822 = vmatprep.subr.mxu0 0.0
    %2823 = vmatpush1.msra.mxu0 0.0
    %2824 = vmatprep.subr.mxu0 0.0
    %2825 = vmatpush1.msra.mxu0 0.0
    %2826 = vmatprep.subr.mxu0 0.0
    %2827 = vmatpush1.msra.mxu0 0.0
    %2828 = vmatprep.subr.mxu0 0.0
    %2829 = vmatpush1.msra.mxu0 0.0
    %2830 = vmatprep.subr.mxu0 0.0
    %2831 = vmatpush1.msra.mxu0 0.0
    %2832 = vmatprep.subr.mxu0 0.0
    %2833 = vmatpush1.msra.mxu0 0.0
    %2834 = vmatprep.subr.mxu0 0.0
    %2835 = vmatpush1.msra.mxu0 0.0
    %2836 = vmatprep.subr.mxu0 0.0
    %2837 = vmatpush1.msra.mxu0 0.0
    %2838 = vmatprep.subr.mxu0 0.0
    %2839 = vmatpush1.msra.mxu0 0.0
    %2840 = vmatprep.subr.mxu0 0.0
    %2841 = vmatpush1.msra.mxu0 0.0
    %2842 = vmatprep.subr.mxu0 0.0
    %2843 = vmatpush1.msra.mxu0 0.0
    %2844 = vmatprep.subr.mxu0 0.0
    %2845 = vmatpush1.msra.mxu0 0.0
    %2846 = vmatprep.subr.mxu0 0.0
    %2847 = vmatpush1.msra.mxu0 0.0
    %2848 = vmatprep.subr.mxu0 0.0
    %2849 = vmatpush1.msra.mxu0 0.0
    %2850 = vmatprep.subr.mxu0 0.0
    %2851 = vmatpush1.msra.mxu0 0.0
    %2852 = vmatprep.subr.mxu0 0.0
    %2853 = vmatpush1.msra.mxu0 0.0
    %2854 = vmatprep.subr.mxu0 0.0
    %2855 = vmatpush1.msra.mxu0 0.0
    %2856 = vmatprep.subr.mxu0 0.0
    %2857 = vmatpush1.msra.mxu0 0.0
    %2858 = vmatprep.subr.mxu0 0.0
    %2859 = vmatpush1.msra.mxu0 0.0
    %2860 = vmatprep.mubr.f32.mxu0 0.0
    %2861 = vmatmul.mubr.f32.gmra.mrb[0].mxu0 %v2794
    %v2862 = vpop.f32.mrb[0].mxu0
    %v2863 = vadd.f32 0.0, %v2862
    %v2864 = vpop.f32.mrb[0].mxu0
    %2865 = vdwg.mxu0
    %v2866 = vadd.f32 %v2793, %v2863
    %v2867 = vmul.f32 %v2866, %v295
    %v2868 = vtanh.pop %v2867
    %v2869 = vadd.f32 %v2868, 1.0
    %v2870 = vmul.f32 %v2869, 0.5
    %v2871 = vmul.f32 %v2870, %v2781
    %2873 = vrot.lane.b32.xlu0 %v2868, 64
    %v2874 = vpop.permute.xlu0 %2873
    %v2876 = vmul.f32 %v2870, %v2874
    %2878 = vrot.lane.b32.xlu0 %v2876, 32
    %v2879 = vpop.permute.xlu0 %2878
    %v2881 = vadd.f32 %v2871, %v2879
    %v2882 = vtanh.pop %v2881
    %2884 = vrot.lane.b32.xlu0 %v2882, 64
    %v2885 = vpop.permute.xlu0 %2884
    %v2887 = vmul.f32 %v2870, %v2885
    %2889 = vrot.lane.b32.xlu0 %v2887, 32
    %v2890 = vpop.permute.xlu0 %2889
    %2892 = vst.msk [vmem:[%s963] sm:$0xff] %vm281, %v2890
    %v2893 = vld [vmem:[%s965] sm:$0xff]
    %v2894 = vsel %vm281, %v2890, 0
    %2896 = vmatprep.subr.mxu0 0.0
    %2897 = vmatpush1.msra.mxu0 %v2233
    %2898 = vmatprep.subr.mxu0 0.0
    %2899 = vmatpush1.msra.mxu0 %v2234
    %2900 = vmatprep.subr.mxu0 0.0
    %2901 = vmatpush1.msra.mxu0 %v2235
    %2902 = vmatprep.subr.mxu0 0.0
    %2903 = vmatpush1.msra.mxu0 %v2236
    %2904 = vmatprep.subr.mxu0 0.0
    %2905 = vmatpush1.msra.mxu0 0.0
    %2906 = vmatprep.subr.mxu0 0.0
    %2907 = vmatpush1.msra.mxu0 0.0
    %2908 = vmatprep.subr.mxu0 0.0
    %2909 = vmatpush1.msra.mxu0 0.0
    %2910 = vmatprep.subr.mxu0 0.0
    %2911 = vmatpush1.msra.mxu0 0.0
    %2912 = vmatprep.subr.mxu0 0.0
    %2913 = vmatpush1.msra.mxu0 0.0
    %2914 = vmatprep.subr.mxu0 0.0
    %2915 = vmatpush1.msra.mxu0 0.0
    %2916 = vmatprep.subr.mxu0 0.0
    %2917 = vmatpush1.msra.mxu0 0.0
    %2918 = vmatprep.subr.mxu0 0.0
    %2919 = vmatpush1.msra.mxu0 0.0
    %2920 = vmatprep.subr.mxu0 0.0
    %2921 = vmatpush1.msra.mxu0 0.0
    %2922 = vmatprep.subr.mxu0 0.0
    %2923 = vmatpush1.msra.mxu0 0.0
    %2924 = vmatprep.subr.mxu0 0.0
    %2925 = vmatpush1.msra.mxu0 0.0
    %2926 = vmatprep.subr.mxu0 0.0
    %2927 = vmatpush1.msra.mxu0 0.0
    %2928 = vmatprep.subr.mxu0 0.0
    %2929 = vmatpush1.msra.mxu0 0.0
    %2930 = vmatprep.subr.mxu0 0.0
    %2931 = vmatpush1.msra.mxu0 0.0
    %2932 = vmatprep.subr.mxu0 0.0
    %2933 = vmatpush1.msra.mxu0 0.0
    %2934 = vmatprep.subr.mxu0 0.0
    %2935 = vmatpush1.msra.mxu0 0.0
    %2936 = vmatprep.subr.mxu0 0.0
    %2937 = vmatpush1.msra.mxu0 0.0
    %2938 = vmatprep.subr.mxu0 0.0
    %2939 = vmatpush1.msra.mxu0 0.0
    %2940 = vmatprep.subr.mxu0 0.0
    %2941 = vmatpush1.msra.mxu0 0.0
    %2942 = vmatprep.subr.mxu0 0.0
    %2943 = vmatpush1.msra.mxu0 0.0
    %2944 = vmatprep.subr.mxu0 0.0
    %2945 = vmatpush1.msra.mxu0 0.0
    %2946 = vmatprep.subr.mxu0 0.0
    %2947 = vmatpush1.msra.mxu0 0.0
    %2948 = vmatprep.subr.mxu0 0.0
    %2949 = vmatpush1.msra.mxu0 0.0
    %2950 = vmatprep.subr.mxu0 0.0
    %2951 = vmatpush1.msra.mxu0 0.0
    %2952 = vmatprep.subr.mxu0 0.0
    %2953 = vmatpush1.msra.mxu0 0.0
    %2954 = vmatprep.subr.mxu0 0.0
    %2955 = vmatpush1.msra.mxu0 0.0
    %2956 = vmatprep.subr.mxu0 0.0
    %2957 = vmatpush1.msra.mxu0 0.0
    %2958 = vmatprep.subr.mxu0 0.0
    %2959 = vmatpush1.msra.mxu0 0.0
    %2960 = vmatprep.mubr.f32.mxu0 0.0
    %2961 = vmatmul.mubr.f32.gmra.mrb[0].mxu0 %v2894
    %v2962 = vpop.f32.mrb[0].mxu0
    %v2963 = vadd.f32 0.0, %v2962
    %v2964 = vpop.f32.mrb[0].mxu0
    %2965 = vdwg.mxu0
    %v2966 = vadd.f32 %v2893, %v2963
    %v2967 = vmul.f32 %v2966, %v295
    %v2968 = vtanh.pop %v2967
    %v2969 = vadd.f32 %v2968, 1.0
    %v2970 = vmul.f32 %v2969, 0.5
    %v2971 = vmul.f32 %v2970, %v2881
    %2973 = vrot.lane.b32.xlu0 %v2968, 64
    %v2974 = vpop.permute.xlu0 %2973
    %v2976 = vmul.f32 %v2970, %v2974
    %2978 = vrot.lane.b32.xlu0 %v2976, 32
    %v2979 = vpop.permute.xlu0 %2978
    %v2981 = vadd.f32 %v2971, %v2979
    %v2982 = vtanh.pop %v2981
    %2984 = vrot.lane.b32.xlu0 %v2982, 64
    %v2985 = vpop.permute.xlu0 %2984
    %v2987 = vmul.f32 %v2970, %v2985
    %2989 = vrot.lane.b32.xlu0 %v2987, 32
    %v2990 = vpop.permute.xlu0 %2989
    %2992 = vst.msk [vmem:[%s1065] sm:$0xff] %vm281, %v2990
    %v2993 = vld [vmem:[%s1067] sm:$0xff]
    %v2994 = vsel %vm281, %v2990, 0
    %2996 = vmatprep.subr.mxu0 0.0
    %2997 = vmatpush1.msra.mxu0 %v2233
    %2998 = vmatprep.subr.mxu0 0.0
    %2999 = vmatpush1.msra.mxu0 %v2234
    %3000 = vmatprep.subr.mxu0 0.0
    %3001 = vmatpush1.msra.mxu0 %v2235
    %3002 = vmatprep.subr.mxu0 0.0
    %3003 = vmatpush1.msra.mxu0 %v2236
    %3004 = vmatprep.subr.mxu0 0.0
    %3005 = vmatpush1.msra.mxu0 0.0
    %3006 = vmatprep.subr.mxu0 0.0
    %3007 = vmatpush1.msra.mxu0 0.0
    %3008 = vmatprep.subr.mxu0 0.0
    %3009 = vmatpush1.msra.mxu0 0.0
    %3010 = vmatprep.subr.mxu0 0.0
    %3011 = vmatpush1.msra.mxu0 0.0
    %3012 = vmatprep.subr.mxu0 0.0
    %3013 = vmatpush1.msra.mxu0 0.0
    %3014 = vmatprep.subr.mxu0 0.0
    %3015 = vmatpush1.msra.mxu0 0.0
    %3016 = vmatprep.subr.mxu0 0.0
    %3017 = vmatpush1.msra.mxu0 0.0
    %3018 = vmatprep.subr.mxu0 0.0
    %3019 = vmatpush1.msra.mxu0 0.0
    %3020 = vmatprep.subr.mxu0 0.0
    %3021 = vmatpush1.msra.mxu0 0.0
    %3022 = vmatprep.subr.mxu0 0.0
    %3023 = vmatpush1.msra.mxu0 0.0
    %3024 = vmatprep.subr.mxu0 0.0
    %3025 = vmatpush1.msra.mxu0 0.0
    %3026 = vmatprep.subr.mxu0 0.0
    %3027 = vmatpush1.msra.mxu0 0.0
    %3028 = vmatprep.subr.mxu0 0.0
    %3029 = vmatpush1.msra.mxu0 0.0
    %3030 = vmatprep.subr.mxu0 0.0
    %3031 = vmatpush1.msra.mxu0 0.0
    %3032 = vmatprep.subr.mxu0 0.0
    %3033 = vmatpush1.msra.mxu0 0.0
    %3034 = vmatprep.subr.mxu0 0.0
    %3035 = vmatpush1.msra.mxu0 0.0
    %3036 = vmatprep.subr.mxu0 0.0
    %3037 = vmatpush1.msra.mxu0 0.0
    %3038 = vmatprep.subr.mxu0 0.0
    %3039 = vmatpush1.msra.mxu0 0.0
    %3040 = vmatprep.subr.mxu0 0.0
    %3041 = vmatpush1.msra.mxu0 0.0
    %3042 = vmatprep.subr.mxu0 0.0
    %3043 = vmatpush1.msra.mxu0 0.0
    %3044 = vmatprep.subr.mxu0 0.0
    %3045 = vmatpush1.msra.mxu0 0.0
    %3046 = vmatprep.subr.mxu0 0.0
    %3047 = vmatpush1.msra.mxu0 0.0
    %3048 = vmatprep.subr.mxu0 0.0
    %3049 = vmatpush1.msra.mxu0 0.0
    %3050 = vmatprep.subr.mxu0 0.0
    %3051 = vmatpush1.msra.mxu0 0.0
    %3052 = vmatprep.subr.mxu0 0.0
    %3053 = vmatpush1.msra.mxu0 0.0
    %3054 = vmatprep.subr.mxu0 0.0
    %3055 = vmatpush1.msra.mxu0 0.0
    %3056 = vmatprep.subr.mxu0 0.0
    %3057 = vmatpush1.msra.mxu0 0.0
    %3058 = vmatprep.subr.mxu0 0.0
    %3059 = vmatpush1.msra.mxu0 0.0
    %3060 = vmatprep.mubr.f32.mxu0 0.0
    %3061 = vmatmul.mubr.f32.gmra.mrb[0].mxu0 %v2994
    %v3062 = vpop.f32.mrb[0].mxu0
    %v3063 = vadd.f32 0.0, %v3062
    %v3064 = vpop.f32.mrb[0].mxu0
    %3065 = vdwg.mxu0
    %v3066 = vadd.f32 %v2993, %v3063
    %v3067 = vmul.f32 %v3066, %v295
    %v3068 = vtanh.pop %v3067
    %v3069 = vadd.f32 %v3068, 1.0
    %v3070 = vmul.f32 %v3069, 0.5
    %v3071 = vmul.f32 %v3070, %v2981
    %3073 = vrot.lane.b32.xlu0 %v3068, 64
    %v3074 = vpop.permute.xlu0 %3073
    %v3076 = vmul.f32 %v3070, %v3074
    %3078 = vrot.lane.b32.xlu0 %v3076, 32
    %v3079 = vpop.permute.xlu0 %3078
    %v3081 = vadd.f32 %v3071, %v3079
    %v3082 = vtanh.pop %v3081
    %3084 = vrot.lane.b32.xlu0 %v3082, 64
    %v3085 = vpop.permute.xlu0 %3084
    %v3087 = vmul.f32 %v3070, %v3085
    %3089 = vrot.lane.b32.xlu0 %v3087, 32
    %v3090 = vpop.permute.xlu0 %3089
    %3092 = vst.msk [vmem:[%s1167] sm:$0xff] %vm281, %v3090
    %v3093 = vld [vmem:[%s1169] sm:$0xff]
    %v3094 = vsel %vm281, %v3090, 0
    %3096 = vmatprep.subr.mxu0 0.0
    %3097 = vmatpush1.msra.mxu0 %v2233
    %3098 = vmatprep.subr.mxu0 0.0
    %3099 = vmatpush1.msra.mxu0 %v2234
    %3100 = vmatprep.subr.mxu0 0.0
    %3101 = vmatpush1.msra.mxu0 %v2235
    %3102 = vmatprep.subr.mxu0 0.0
    %3103 = vmatpush1.msra.mxu0 %v2236
    %3104 = vmatprep.subr.mxu0 0.0
    %3105 = vmatpush1.msra.mxu0 0.0
    %3106 = vmatprep.subr.mxu0 0.0
    %3107 = vmatpush1.msra.mxu0 0.0
    %3108 = vmatprep.subr.mxu0 0.0
    %3109 = vmatpush1.msra.mxu0 0.0
    %3110 = vmatprep.subr.mxu0 0.0
    %3111 = vmatpush1.msra.mxu0 0.0
    %3112 = vmatprep.subr.mxu0 0.0
    %3113 = vmatpush1.msra.mxu0 0.0
    %3114 = vmatprep.subr.mxu0 0.0
    %3115 = vmatpush1.msra.mxu0 0.0
    %3116 = vmatprep.subr.mxu0 0.0
    %3117 = vmatpush1.msra.mxu0 0.0
    %3118 = vmatprep.subr.mxu0 0.0
    %3119 = vmatpush1.msra.mxu0 0.0
    %3120 = vmatprep.subr.mxu0 0.0
    %3121 = vmatpush1.msra.mxu0 0.0
    %3122 = vmatprep.subr.mxu0 0.0
    %3123 = vmatpush1.msra.mxu0 0.0
    %3124 = vmatprep.subr.mxu0 0.0
    %3125 = vmatpush1.msra.mxu0 0.0
    %3126 = vmatprep.subr.mxu0 0.0
    %3127 = vmatpush1.msra.mxu0 0.0
    %3128 = vmatprep.subr.mxu0 0.0
    %3129 = vmatpush1.msra.mxu0 0.0
    %3130 = vmatprep.subr.mxu0 0.0
    %3131 = vmatpush1.msra.mxu0 0.0
    %3132 = vmatprep.subr.mxu0 0.0
    %3133 = vmatpush1.msra.mxu0 0.0
    %3134 = vmatprep.subr.mxu0 0.0
    %3135 = vmatpush1.msra.mxu0 0.0
    %3136 = vmatprep.subr.mxu0 0.0
    %3137 = vmatpush1.msra.mxu0 0.0
    %3138 = vmatprep.subr.mxu0 0.0
    %3139 = vmatpush1.msra.mxu0 0.0
    %3140 = vmatprep.subr.mxu0 0.0
    %3141 = vmatpush1.msra.mxu0 0.0
    %3142 = vmatprep.subr.mxu0 0.0
    %3143 = vmatpush1.msra.mxu0 0.0
    %3144 = vmatprep.subr.mxu0 0.0
    %3145 = vmatpush1.msra.mxu0 0.0
    %3146 = vmatprep.subr.mxu0 0.0
    %3147 = vmatpush1.msra.mxu0 0.0
    %3148 = vmatprep.subr.mxu0 0.0
    %3149 = vmatpush1.msra.mxu0 0.0
    %3150 = vmatprep.subr.mxu0 0.0
    %3151 = vmatpush1.msra.mxu0 0.0
    %3152 = vmatprep.subr.mxu0 0.0
    %3153 = vmatpush1.msra.mxu0 0.0
    %3154 = vmatprep.subr.mxu0 0.0
    %3155 = vmatpush1.msra.mxu0 0.0
    %3156 = vmatprep.subr.mxu0 0.0
    %3157 = vmatpush1.msra.mxu0 0.0
    %3158 = vmatprep.subr.mxu0 0.0
    %3159 = vmatpush1.msra.mxu0 0.0
    %3160 = vmatprep.mubr.f32.mxu0 0.0
    %3161 = vmatmul.mubr.f32.gmra.mrb[0].mxu0 %v3094
    %v3162 = vpop.f32.mrb[0].mxu0
    %v3163 = vadd.f32 0.0, %v3162
    %v3164 = vpop.f32.mrb[0].mxu0
    %3165 = vdwg.mxu0
    %v3166 = vadd.f32 %v3093, %v3163
    %v3167 = vmul.f32 %v3166, %v295
    %v3168 = vtanh.pop %v3167
    %v3169 = vadd.f32 %v3168, 1.0
    %v3170 = vmul.f32 %v3169, 0.5
    %v3171 = vmul.f32 %v3170, %v3081
    %3173 = vrot.lane.b32.xlu0 %v3168, 64
    %v3174 = vpop.permute.xlu0 %3173
    %v3176 = vmul.f32 %v3170, %v3174
    %3178 = vrot.lane.b32.xlu0 %v3176, 32
    %v3179 = vpop.permute.xlu0 %3178
    %v3181 = vadd.f32 %v3171, %v3179
    %v3182 = vtanh.pop %v3181
    %3184 = vrot.lane.b32.xlu0 %v3182, 64
    %v3185 = vpop.permute.xlu0 %3184
    %v3187 = vmul.f32 %v3170, %v3185
    %3189 = vrot.lane.b32.xlu0 %v3187, 32
    %v3190 = vpop.permute.xlu0 %3189
    %3192 = vst.msk [vmem:[%s1269] sm:$0xff] %vm281, %v3190
    %v3193 = vld [vmem:[#allocation2] sm:$0xff]
    %v3194 = vld [vmem:[#allocation2 + $0x8] sm:$0xff]
    %v3195 = vld [vmem:[#allocation2 + $0x10] sm:$0xff]
    %v3196 = vld [vmem:[#allocation2 + $0x18] sm:$0xff]
    %v3197 = vld [vmem:[#allocation2 + $0x20] sm:$0xff]
    %v3198 = vld [vmem:[#allocation2 + $0x28] sm:$0xff]
    %v3199 = vld [vmem:[#allocation2 + $0x30] sm:$0xff]
    %v3200 = vld [vmem:[#allocation2 + $0x38] sm:$0xff]
    %v3201 = vld [vmem:[%s6] sm:$0xff]
    %v3202 = vld [vmem:[%s6 + $0x8] sm:$0xff]
    %v3203 = vld [vmem:[%s6 + $0x10] sm:$0xff]
    %v3204 = vld [vmem:[%s6 + $0x18] sm:$0xff]
    %v3205 = vld [vmem:[%s7] sm:$0x1]
    %v3207 = vlaneseq
    %v3208 = vshrl.u32 %v3207, 7
    %v3209 = vsub.s32 0, %v3208
    %v3210 = vrot.slane %v3205, %v3209
    %v3213 = vsel %vm281, %v3193, 0
    %v3216 = vsel %vm281, %v3194, 0
    %v3219 = vsel %vm281, %v3195, 0
    %v3222 = vsel %vm281, %v3196, 0
    %v3225 = vsel %vm281, %v3197, 0
    %v3228 = vsel %vm281, %v3198, 0
    %v3231 = vsel %vm281, %v3199, 0
    %v3234 = vsel %vm281, %v3200, 0
    %3236 = vmatprep.subr.mxu0 0.0
    %3237 = vmatpush1.msra.mxu0 %v3201
    %3238 = vmatprep.subr.mxu0 0.0
    %3239 = vmatpush1.msra.mxu0 %v3202
    %3240 = vmatprep.subr.mxu0 0.0
    %3241 = vmatpush1.msra.mxu0 %v3203
    %3242 = vmatprep.subr.mxu0 0.0
    %3243 = vmatpush1.msra.mxu0 %v3204
    %3244 = vmatprep.subr.mxu0 0.0
    %3245 = vmatpush1.msra.mxu0 0.0
    %3246 = vmatprep.subr.mxu0 0.0
    %3247 = vmatpush1.msra.mxu0 0.0
    %3248 = vmatprep.subr.mxu0 0.0
    %3249 = vmatpush1.msra.mxu0 0.0
    %3250 = vmatprep.subr.mxu0 0.0
    %3251 = vmatpush1.msra.mxu0 0.0
    %3252 = vmatprep.subr.mxu0 0.0
    %3253 = vmatpush1.msra.mxu0 0.0
    %3254 = vmatprep.subr.mxu0 0.0
    %3255 = vmatpush1.msra.mxu0 0.0
    %3256 = vmatprep.subr.mxu0 0.0
    %3257 = vmatpush1.msra.mxu0 0.0
    %3258 = vmatprep.subr.mxu0 0.0
    %3259 = vmatpush1.msra.mxu0 0.0
    %3260 = vmatprep.subr.mxu0 0.0
    %3261 = vmatpush1.msra.mxu0 0.0
    %3262 = vmatprep.subr.mxu0 0.0
    %3263 = vmatpush1.msra.mxu0 0.0
    %3264 = vmatprep.subr.mxu0 0.0
    %3265 = vmatpush1.msra.mxu0 0.0
    %3266 = vmatprep.subr.mxu0 0.0
    %3267 = vmatpush1.msra.mxu0 0.0
    %3268 = vmatprep.subr.mxu0 0.0
    %3269 = vmatpush1.msra.mxu0 0.0
    %3270 = vmatprep.subr.mxu0 0.0
    %3271 = vmatpush1.msra.mxu0 0.0
    %3272 = vmatprep.subr.mxu0 0.0
    %3273 = vmatpush1.msra.mxu0 0.0
    %3274 = vmatprep.subr.mxu0 0.0
    %3275 = vmatpush1.msra.mxu0 0.0
    %3276 = vmatprep.subr.mxu0 0.0
    %3277 = vmatpush1.msra.mxu0 0.0
    %3278 = vmatprep.subr.mxu0 0.0
    %3279 = vmatpush1.msra.mxu0 0.0
    %3280 = vmatprep.subr.mxu0 0.0
    %3281 = vmatpush1.msra.mxu0 0.0
    %3282 = vmatprep.subr.mxu0 0.0
    %3283 = vmatpush1.msra.mxu0 0.0
    %3284 = vmatprep.subr.mxu0 0.0
    %3285 = vmatpush1.msra.mxu0 0.0
    %3286 = vmatprep.subr.mxu0 0.0
    %3287 = vmatpush1.msra.mxu0 0.0
    %3288 = vmatprep.subr.mxu0 0.0
    %3289 = vmatpush1.msra.mxu0 0.0
    %3290 = vmatprep.subr.mxu0 0.0
    %3291 = vmatpush1.msra.mxu0 0.0
    %3292 = vmatprep.subr.mxu0 0.0
    %3293 = vmatpush1.msra.mxu0 0.0
    %3294 = vmatprep.subr.mxu0 0.0
    %3295 = vmatpush1.msra.mxu0 0.0
    %3296 = vmatprep.subr.mxu0 0.0
    %3297 = vmatpush1.msra.mxu0 0.0
    %3298 = vmatprep.subr.mxu0 0.0
    %3299 = vmatpush1.msra.mxu0 0.0
    %3300 = vmatprep.mubr.f32.mxu0 0.0
    %3301 = vmatmul.mubr.f32.gmra.mrb[0].mxu0 %v3213
    %v3302 = vpop.f32.mrb[0].mxu0
    %v3303 = vadd.f32 %v3210, %v3302
    %v3304 = vpop.f32.mrb[0].mxu0
    %3305 = vmatprep.mubr.f32.mxu0 0.0
    %3306 = vmatmul.mubr.f32.gmra.mrb[0].mxu0 %v3216
    %v3307 = vpop.f32.mrb[0].mxu0
    %v3308 = vadd.f32 %v3210, %v3307
    %v3309 = vpop.f32.mrb[0].mxu0
    %3310 = vmatprep.mubr.f32.mxu0 0.0
    %3311 = vmatmul.mubr.f32.gmra.mrb[0].mxu0 %v3219
    %v3312 = vpop.f32.mrb[0].mxu0
    %v3313 = vadd.f32 %v3210, %v3312
    %v3314 = vpop.f32.mrb[0].mxu0
    %3315 = vmatprep.mubr.f32.mxu0 0.0
    %3316 = vmatmul.mubr.f32.gmra.mrb[0].mxu0 %v3222
    %v3317 = vpop.f32.mrb[0].mxu0
    %v3318 = vadd.f32 %v3210, %v3317
    %v3319 = vpop.f32.mrb[0].mxu0
    %3320 = vmatprep.mubr.f32.mxu0 0.0
    %3321 = vmatmul.mubr.f32.gmra.mrb[0].mxu0 %v3225
    %v3322 = vpop.f32.mrb[0].mxu0
    %v3323 = vadd.f32 %v3210, %v3322
    %v3324 = vpop.f32.mrb[0].mxu0
    %3325 = vmatprep.mubr.f32.mxu0 0.0
    %3326 = vmatmul.mubr.f32.gmra.mrb[0].mxu0 %v3228
    %v3327 = vpop.f32.mrb[0].mxu0
    %v3328 = vadd.f32 %v3210, %v3327
    %v3329 = vpop.f32.mrb[0].mxu0
    %3330 = vmatprep.mubr.f32.mxu0 0.0
    %3331 = vmatmul.mubr.f32.gmra.mrb[0].mxu0 %v3231
    %v3332 = vpop.f32.mrb[0].mxu0
    %v3333 = vadd.f32 %v3210, %v3332
    %v3334 = vpop.f32.mrb[0].mxu0
    %3335 = vmatprep.mubr.f32.mxu0 0.0
    %3336 = vmatmul.mubr.f32.gmra.mrb[0].mxu0 %v3234
    %v3337 = vpop.f32.mrb[0].mxu0
    %v3338 = vadd.f32 %v3210, %v3337
    %v3339 = vpop.f32.mrb[0].mxu0
    %3340 = vdwg.mxu0
    %v3341 = vsel %vm116, %v3303, nan
    %v3342 = vsel %vm117, %v3308, nan
    %v3343 = vsel %vm118, %v3313, nan
    %v3344 = vsel %vm119, %v3318, nan
    %v3345 = vsel %vm120, %v3323, nan
    %v3346 = vsel %vm121, %v3328, nan
    %v3347 = vsel %vm122, %v3333, nan
    %v3348 = vsel %vm123, %v3338, nan
    %vm3349 = vcmask 130048
    %3350 = vst.msk [vmem:[%s8] sm:$0xff] %vm3349, %v3341
    %3351 = vst.msk [vmem:[%s8 + $0x8] sm:$0xff] %vm3349, %v3342
    %3352 = vst.msk [vmem:[%s8 + $0x10] sm:$0xff] %vm3349, %v3343
    %3353 = vst.msk [vmem:[%s8 + $0x18] sm:$0xff] %vm3349, %v3344
    %3354 = vst.msk [vmem:[%s8 + $0x20] sm:$0xff] %vm3349, %v3345
    %3355 = vst.msk [vmem:[%s8 + $0x28] sm:$0xff] %vm3349, %v3346
    %3356 = vst.msk [vmem:[%s8 + $0x30] sm:$0xff] %vm3349, %v3347
    %3357 = vst.msk [vmem:[%s8 + $0x38] sm:$0xff] %vm3349, %v3348
    // Predicated region
    $region38: #{tpu_custom_call.1} parent=1 // pred_check
      _
    $region39: #{tpu_custom_call.1} parent=1 // pred_check_branch
      %3359 = sbr.rel (0) target = $region41
    $region40: #{tpu_custom_call.1} parent=1 // pred_region
      _
    $region41: #{tpu_custom_call.1} parent=1 // pred_fallthru
      _
    // Predicated region
    $region42: #{tpu_custom_call.1} parent=1 // pred_check
      _
    $region43: #{tpu_custom_call.1} parent=1 // pred_check_branch
      %3361 = sbr.rel (0) target = $region45
    $region44: #{tpu_custom_call.1} parent=1 // pred_region
      _
    $region45: #{tpu_custom_call.1} parent=1 // pred_fallthru
      _
    %3362 = vsyncpa [#allocation5], 1

</llo_original>
